<compile_context>
chip_gen: v7x
topology: tpu7x:2x2x1
jax: 0.10.0
libtpu: 0.0.40
codegen_flags: <defaults>
</compile_context>

<pallas_src>
import functools

import jax
import jax.numpy as jnp
from jax.experimental import pallas as pl
from jax.experimental.pallas import tpu as pltpu


def _round_up(v, m):
    return ((v + m - 1) // m) * m


# --------------------------------------------------------------------------- #
# Fused Pallas kernel: ALL RGCN layers in one pallas_call.                     #
# --------------------------------------------------------------------------- #
def _rgcn_fused_kernel(a_ref, x_ref, *rest, num_layers, num_rel_aug, n_pad, d_hid_p):
    """rest = (w_0, b_0, ..., w_{L-1}, b_{L-1}, o_ref, pw_scratch, pt_scratch)."""
    o_ref = rest[2 * num_layers]
    pw_ref = rest[2 * num_layers + 1]          # [Np, (R+1)*Dh_p] f32
    pt_ref = rest[2 * num_layers + 2]          # [Krel_p, Dh_p]   f32

    rel_rows = num_rel_aug * n_pad
    k_rel_pad = pt_ref.shape[0]
    if k_rel_pad > rel_rows:
        # Scratch is uninitialized: zero the K-padding rows once so stale NaNs
        # cannot poison the stage-2 contraction (0 * NaN = NaN).
        pt_ref[rel_rows:, :] = jnp.zeros((k_rel_pad - rel_rows, d_hid_p), jnp.float32)

    h = x_ref[...]                                             # [Np, D0_p] f32
    for l in range(num_layers):                                # static unroll over layers
        w_ref, b_ref = rest[2 * l], rest[2 * l + 1]

        # Stage 1: ONE wide projection onto all relations (incl. root):
        #   [Np, Din_p] @ [Din_p, (R+1)*Dh_p]   (lane-dense N, K = Din_p >= 128).
        pw_ref[...] = jnp.dot(h, w_ref[...], preferred_element_type=jnp.float32)

        # Relayout: relation block r moves from stage-1 columns to stage-2 rows.
        # Static, (8,128)-aligned slice copies via VMEM scratch (zero-cost views).
        for r in range(num_rel_aug):
            pt_ref[r * n_pad:(r + 1) * n_pad, :] = (
                pw_ref[:, r * d_hid_p:(r + 1) * d_hid_p])

        # Stage 2: aggregate + sum over (relation, src node) in ONE contraction,
        #   [Np, Krel_p] @ [Krel_p, Dh_p]   with Krel_p = round_up((R+1)*Np, 128).
        out = jnp.dot(a_ref[...], pt_ref[...], preferred_element_type=jnp.float32)
        out = out + b_ref[...]                                 # f32 bias
        if l < num_layers - 1:
            out = jnp.maximum(out, 0.0)                        # f32 ReLU
        h = out                                                # stays on-chip between layers

    o_ref[...] = h.astype(o_ref.dtype)


def rgcn_fused(x_p, a_wide, layer_params):
    """x_p: [Np, D0_p] f32, a_wide: [Np, Krel_p] f32,
    layer_params: list of (w_wide [Din_p, (R+1)*Dh_p] f32, bias [1, Dh_p] f32)."""
    n_pad, _ = x_p.shape
    k_rel_pad = a_wide.shape[1]
    num_layers = len(layer_params)
    d_hid_p = layer_params[0][1].shape[1]
    num_rel_aug = layer_params[0][0].shape[1] // d_hid_p

    flat = []
    for w, b in layer_params:
        flat.extend((w, b))

    kernel = functools.partial(
        _rgcn_fused_kernel, num_layers=num_layers, num_rel_aug=num_rel_aug,
        n_pad=n_pad, d_hid_p=d_hid_p)

    # Scoped-VMEM budget: request what the whole-array-in-VMEM design needs with
    # 2x headroom, floored at 32 MiB and capped at v7x's 64 MiB physical VMEM so
    # the same code runs on v5e / v6e / v7x.
    def nbytes(a):
        return a.size * a.dtype.itemsize
    needed = (nbytes(a_wide) + nbytes(x_p) + sum(nbytes(t) for t in flat)
              + n_pad * d_hid_p * 4                        # output
              + n_pad * num_rel_aug * d_hid_p * 4          # pw scratch
              + k_rel_pad * d_hid_p * 4)                   # pt scratch
    vmem_limit = int(min(64 * 1024 * 1024, max(32 * 1024 * 1024, 2 * needed)))

    return pl.pallas_call(
        kernel,
        out_shape=jax.ShapeDtypeStruct((n_pad, d_hid_p), jnp.float32),
        in_specs=[pl.BlockSpec(memory_space=pltpu.MemorySpace.VMEM)] * (2 + len(flat)),
        out_specs=pl.BlockSpec(memory_space=pltpu.MemorySpace.VMEM),
        scratch_shapes=[
            pltpu.VMEM((n_pad, num_rel_aug * d_hid_p), jnp.float32),   # stage-1 result
            pltpu.VMEM((k_rel_pad, d_hid_p), jnp.float32),             # relation-tall relayout
        ],
        compiler_params=pltpu.CompilerParams(vmem_limit_bytes=vmem_limit),
    )(a_wide, x_p, *flat)


# --------------------------------------------------------------------------- #
# Plain-JAX layout prep.                                                       #
# --------------------------------------------------------------------------- #
def build_adjacency_wide(edge_index, edge_type, num_nodes, num_relations, n_pad, k_rel_pad):
    """A_wide[i, r*Np + j] = 1/deg_r(i) for type-r edges j->i (mean aggregation),
    root term appended as relation R (identity), zero-padded to [Np, Krel_p]."""
    src, dst = edge_index[0], edge_index[1]
    a = jnp.zeros((num_relations, num_nodes, num_nodes), jnp.float32)
    a = a.at[edge_type, dst, src].add(1.0)
    deg = a.sum(axis=-1, keepdims=True)
    a = jnp.where(deg > 0, a / jnp.maximum(deg, 1.0), 0.0)
    a_aug = jnp.concatenate([a, jnp.eye(num_nodes, dtype=jnp.float32)[None]], axis=0)
    r1 = num_relations + 1
    a_pad = jnp.zeros((r1, n_pad, n_pad), jnp.float32)
    a_pad = a_pad.at[:, :num_nodes, :num_nodes].set(a_aug)
    a_wide = a_pad.transpose(1, 0, 2).reshape(n_pad, r1 * n_pad)     # relation-minor columns
    return jnp.zeros((n_pad, k_rel_pad), jnp.float32).at[:, :r1 * n_pad].set(a_wide)


def init_params(key, input_dim, hidden_channels, layers, num_relations):
    params = []
    dims = [input_dim] + [hidden_channels] * (layers - 1)
    for li in range(layers):
        d_in, d_out = dims[li], hidden_channels
        key, k1, k2, k3 = jax.random.split(key, 4)
        scale = 1.0 / jnp.sqrt(jnp.float32(d_in))
        w_rel = jax.random.normal(k1, (num_relations, d_in, d_out), jnp.float32) * scale
        w_root = jax.random.normal(k2, (d_in, d_out), jnp.float32) * scale
        bias = jax.random.normal(k3, (d_out,), jnp.float32) * 0.01
        params.append((w_rel, w_root, bias))
    return params


def prepare_params(params):
    """Pad / fold-root / relation-concat the weights ONCE (hoisted out of the
    per-forward path): W_wide[k, r*Dh + d] = W_aug[r, k, d], bias padded to Dh_p."""
    prepped = []
    for (w_rel, w_root, bias) in params:
        num_rel, d_in, d_out = w_rel.shape
        d_in_p = _round_up(d_in, 128)
        d_out_p = _round_up(d_out, 128)
        w_aug = jnp.concatenate([w_rel, w_root[None]], axis=0)       # root = relation R
        w_pad = jnp.zeros((num_rel + 1, d_in_p, d_out_p), jnp.float32)
        w_pad = w_pad.at[:, :d_in, :d_out].set(w_aug)
        w_wide = w_pad.transpose(1, 0, 2).reshape(d_in_p, (num_rel + 1) * d_out_p)
        bias_pad = jnp.zeros((1, d_out_p), jnp.float32).at[0, :d_out].set(bias)
        prepped.append((w_wide, bias_pad))
    return prepped


# --------------------------------------------------------------------------- #
# Full forward (non-unidirectional branch of the torch module).                #
# --------------------------------------------------------------------------- #
@functools.partial(jax.jit, static_argnames=("num_relations", "hidden_channels"))
def relational_gcn_forward(prepped_params, x, edge_index, edge_type, batch, inds, *,
                           num_relations, hidden_channels):
    n, d_in = x.shape
    d0_p = prepped_params[0][0].shape[0]
    n_pad = _round_up(n, 32)
    k_rel_pad = _round_up((num_relations + 1) * n_pad, 128)

    a_wide = build_adjacency_wide(edge_index, edge_type.reshape(-1), n,
                                  num_relations, n_pad, k_rel_pad)
    x_p = jnp.zeros((n_pad, d0_p), jnp.float32).at[:n, :d_in].set(x)

    out = rgcn_fused(x_p, a_wide, prepped_params)            # [Np, Dh_p] f32
    x_out = out[:n, :hidden_channels]

    # ---- glue: per-graph local (head, tail) indices -> global node indices ----
    # Matches the torch batch-count offset loop. Assumes `batch` is sorted with
    # contiguous per-graph node blocks (standard PyG batching), exactly like the
    # cumulative-count logic in the torch code.
    inds_stacked = jnp.stack(inds, axis=-1).astype(jnp.int32)     # (num_graphs, 2)
    num_graphs = inds_stacked.shape[0]
    counts = jnp.bincount(batch, length=num_graphs).astype(jnp.int32)
    offsets = jnp.concatenate([jnp.zeros((1,), jnp.int32), jnp.cumsum(counts)[:-1]])
    mask = inds_stacked + offsets[:, None]
    head = x_out[mask[:, 0]]
    tail = x_out[mask[:, 1]]
    # TODO(synk): unidirectional branch (special_node_idx gather + 3-way mean pool)
    # not implemented; only the default (else) branch of the torch forward is covered.
    return jnp.concatenate([head, tail], axis=-1)                 # (num_graphs, 2*hidden)


# --------------------------------------------------------------------------- #
# Pure-JAX f32 reference (same math, no Pallas) for a correctness check.       #
# --------------------------------------------------------------------------- #
def reference_forward(params, x, edge_index, edge_type, batch, inds, num_relations):
    n = x.shape[0]
    src, dst = edge_index[0], edge_index[1]
    a = jnp.zeros((num_relations, n, n), jnp.float32)
    a = a.at[edge_type.reshape(-1), dst, src].add(1.0)
    deg = a.sum(axis=-1, keepdims=True)
    a = jnp.where(deg > 0, a / jnp.maximum(deg, 1.0), 0.0)
    h = x
    num_layers = len(params)
    for li, (w_rel, w_root, bias) in enumerate(params):
        out = h @ w_root + bias
        for r in range(num_relations):
            out = out + a[r] @ (h @ w_rel[r])
        h = jnp.maximum(out, 0.0) if li < num_layers - 1 else out
    inds_stacked = jnp.stack(inds, axis=-1).astype(jnp.int32)
    num_graphs = inds_stacked.shape[0]
    counts = jnp.bincount(batch, length=num_graphs).astype(jnp.int32)
    offsets = jnp.concatenate([jnp.zeros((1,), jnp.int32), jnp.cumsum(counts)[:-1]])
    mask = inds_stacked + offsets[:, None]
    return jnp.concatenate([h[mask[:, 0]], h[mask[:, 1]]], axis=-1)


if __name__ == "__main__":
    num_relations = 10        # 12 if args.unidirectional or args.bidirectional else 10
    input_dim = 64
    hidden_channels = 32
    layers = 3

    nodes_per_graph = 12
    num_graphs = 2
    n = nodes_per_graph * num_graphs
    num_edges = 60

    key = jax.random.PRNGKey(0)
    k_param, k_x, k_src, k_dst, k_et = jax.random.split(key, 5)

    params = init_params(k_param, input_dim, hidden_channels, layers, num_relations)
    prepped = prepare_params(params)        # hoisted out of the per-forward path

    x = jax.random.normal(k_x, (n, input_dim), jnp.float32)
    src = jax.random.randint(k_src, (num_edges,), 0, n)
    dst = jax.random.randint(k_dst, (num_edges,), 0, n)
    edge_index = jnp.stack([src, dst], axis=0)                    # (2, E)
    edge_type = jax.random.randint(k_et, (num_edges,), 0, num_relations)
    batch = jnp.repeat(jnp.arange(num_graphs), nodes_per_graph).astype(jnp.int32)
    # inds = (head_local_indices, tail_local_indices), one per graph
    inds = (jnp.array([1, 3], dtype=jnp.int32), jnp.array([5, 7], dtype=jnp.int32))

    out = relational_gcn_forward(prepped, x, edge_index, edge_type, batch, inds,
                                 num_relations=num_relations,
                                 hidden_channels=hidden_channels)
    out = jax.block_until_ready(out)

    ref = reference_forward(params, x, edge_index, edge_type, batch, inds, num_relations)
    assert out.shape == (num_graphs, 2 * hidden_channels)
    assert bool(jnp.all(jnp.isfinite(out)))
    assert bool(jnp.allclose(out, ref, rtol=2e-3, atol=2e-3)), \
        f"max abs diff = {float(jnp.max(jnp.abs(out - ref)))}"
    print("KERNEL_OK")
</pallas_src>

<mosaic_0001>
module attributes {stable_mosaic.version = 11 : i64} {
  func.func @_rgcn_fused_kernel(%arg0: memref<32x384xf32, #tpu.memory_space<vmem>>, %arg1: memref<32x128xf32, #tpu.memory_space<vmem>>, %arg2: memref<128x1408xf32, #tpu.memory_space<vmem>>, %arg3: memref<1x128xf32, #tpu.memory_space<vmem>>, %arg4: memref<128x1408xf32, #tpu.memory_space<vmem>>, %arg5: memref<1x128xf32, #tpu.memory_space<vmem>>, %arg6: memref<128x1408xf32, #tpu.memory_space<vmem>>, %arg7: memref<1x128xf32, #tpu.memory_space<vmem>>, %arg8: memref<32x128xf32, #tpu.memory_space<vmem>>, %arg9: memref<32x1408xf32, #tpu.memory_space<vmem>>, %arg10: memref<384x128xf32, #tpu.memory_space<vmem>>) attributes {dimension_semantics = [], scalar_prefetch = 0 : i64, scratch_operands = 2 : i64, tpu.core_type = #tpu.core_type<tc>} {
    %cst = arith.constant 0.000000e+00 : f32
    %0 = vector.broadcast %cst : f32 to vector<32x128xf32>
    %c352 = arith.constant 352 : index
    %c0 = arith.constant 0 : index
    %1 = vector.load %arg10[%c352, %c0] : memref<384x128xf32, #tpu.memory_space<vmem>>, vector<32x128xf32>
    tpu.vector_store %arg10[%c352, %c0], %0 {strides = array<i32>} : memref<384x128xf32, #tpu.memory_space<vmem>>, vector<32x128xf32>,
    %c0_0 = arith.constant 0 : index
    %c0_1 = arith.constant 0 : index
    %2 = vector.load %arg1[%c0_0, %c0_1] : memref<32x128xf32, #tpu.memory_space<vmem>>, vector<32x128xf32>
    %c0_2 = arith.constant 0 : index
    %c0_3 = arith.constant 0 : index
    %3 = vector.load %arg2[%c0_2, %c0_3] : memref<128x1408xf32, #tpu.memory_space<vmem>>, vector<128x1408xf32>
    %cst_4 = arith.constant dense<0.000000e+00> : vector<32x1408xf32>
    %4 = tpu.matmul %2, %3, %cst_4 {dimension_numbers = #tpu.dot_dimension_numbers<[1], [0], [0], [1], [0, 0, 1, 1], [], []>} : vector<32x128xf32>, vector<128x1408xf32>, vector<32x1408xf32> -> vector<32x1408xf32>
    %c0_5 = arith.constant 0 : index
    %c0_6 = arith.constant 0 : index
    %5 = vector.load %arg9[%c0_5, %c0_6] : memref<32x1408xf32, #tpu.memory_space<vmem>>, vector<32x1408xf32>
    tpu.vector_store %arg9[%c0_5, %c0_6], %4 {strides = array<i32>} : memref<32x1408xf32, #tpu.memory_space<vmem>>, vector<32x1408xf32>,
    %c0_7 = arith.constant 0 : index
    %c0_8 = arith.constant 0 : index
    %6 = vector.load %arg9[%c0_7, %c0_8] : memref<32x1408xf32, #tpu.memory_space<vmem>>, vector<32x128xf32>
    %c0_9 = arith.constant 0 : index
    %c0_10 = arith.constant 0 : index
    %7 = vector.load %arg10[%c0_9, %c0_10] : memref<384x128xf32, #tpu.memory_space<vmem>>, vector<32x128xf32>
    tpu.vector_store %arg10[%c0_9, %c0_10], %6 {strides = array<i32>} : memref<384x128xf32, #tpu.memory_space<vmem>>, vector<32x128xf32>,
    %c0_11 = arith.constant 0 : index
    %c128 = arith.constant 128 : index
    %8 = vector.load %arg9[%c0_11, %c128] : memref<32x1408xf32, #tpu.memory_space<vmem>>, vector<32x128xf32>
    %c32 = arith.constant 32 : index
    %c0_12 = arith.constant 0 : index
    %9 = vector.load %arg10[%c32, %c0_12] : memref<384x128xf32, #tpu.memory_space<vmem>>, vector<32x128xf32>
    tpu.vector_store %arg10[%c32, %c0_12], %8 {strides = array<i32>} : memref<384x128xf32, #tpu.memory_space<vmem>>, vector<32x128xf32>,
    %c0_13 = arith.constant 0 : index
    %c256 = arith.constant 256 : index
    %10 = vector.load %arg9[%c0_13, %c256] : memref<32x1408xf32, #tpu.memory_space<vmem>>, vector<32x128xf32>
    %c64 = arith.constant 64 : index
    %c0_14 = arith.constant 0 : index
    %11 = vector.load %arg10[%c64, %c0_14] : memref<384x128xf32, #tpu.memory_space<vmem>>, vector<32x128xf32>
    tpu.vector_store %arg10[%c64, %c0_14], %10 {strides = array<i32>} : memref<384x128xf32, #tpu.memory_space<vmem>>, vector<32x128xf32>,
    %c0_15 = arith.constant 0 : index
    %c384 = arith.constant 384 : index
    %12 = vector.load %arg9[%c0_15, %c384] : memref<32x1408xf32, #tpu.memory_space<vmem>>, vector<32x128xf32>
    %c96 = arith.constant 96 : index
    %c0_16 = arith.constant 0 : index
    %13 = vector.load %arg10[%c96, %c0_16] : memref<384x128xf32, #tpu.memory_space<vmem>>, vector<32x128xf32>
    tpu.vector_store %arg10[%c96, %c0_16], %12 {strides = array<i32>} : memref<384x128xf32, #tpu.memory_space<vmem>>, vector<32x128xf32>,
    %c0_17 = arith.constant 0 : index
    %c512 = arith.constant 512 : index
    %14 = vector.load %arg9[%c0_17, %c512] : memref<32x1408xf32, #tpu.memory_space<vmem>>, vector<32x128xf32>
    %c128_18 = arith.constant 128 : index
    %c0_19 = arith.constant 0 : index
    %15 = vector.load %arg10[%c128_18, %c0_19] : memref<384x128xf32, #tpu.memory_space<vmem>>, vector<32x128xf32>
    tpu.vector_store %arg10[%c128_18, %c0_19], %14 {strides = array<i32>} : memref<384x128xf32, #tpu.memory_space<vmem>>, vector<32x128xf32>,
    %c0_20 = arith.constant 0 : index
    %c640 = arith.constant 640 : index
    %16 = vector.load %arg9[%c0_20, %c640] : memref<32x1408xf32, #tpu.memory_space<vmem>>, vector<32x128xf32>
    %c160 = arith.constant 160 : index
    %c0_21 = arith.constant 0 : index
    %17 = vector.load %arg10[%c160, %c0_21] : memref<384x128xf32, #tpu.memory_space<vmem>>, vector<32x128xf32>
    tpu.vector_store %arg10[%c160, %c0_21], %16 {strides = array<i32>} : memref<384x128xf32, #tpu.memory_space<vmem>>, vector<32x128xf32>,
    %c0_22 = arith.constant 0 : index
    %c768 = arith.constant 768 : index
    %18 = vector.load %arg9[%c0_22, %c768] : memref<32x1408xf32, #tpu.memory_space<vmem>>, vector<32x128xf32>
    %c192 = arith.constant 192 : index
    %c0_23 = arith.constant 0 : index
    %19 = vector.load %arg10[%c192, %c0_23] : memref<384x128xf32, #tpu.memory_space<vmem>>, vector<32x128xf32>
    tpu.vector_store %arg10[%c192, %c0_23], %18 {strides = array<i32>} : memref<384x128xf32, #tpu.memory_space<vmem>>, vector<32x128xf32>,
    %c0_24 = arith.constant 0 : index
    %c896 = arith.constant 896 : index
    %20 = vector.load %arg9[%c0_24, %c896] : memref<32x1408xf32, #tpu.memory_space<vmem>>, vector<32x128xf32>
    %c224 = arith.constant 224 : index
    %c0_25 = arith.constant 0 : index
    %21 = vector.load %arg10[%c224, %c0_25] : memref<384x128xf32, #tpu.memory_space<vmem>>, vector<32x128xf32>
    tpu.vector_store %arg10[%c224, %c0_25], %20 {strides = array<i32>} : memref<384x128xf32, #tpu.memory_space<vmem>>, vector<32x128xf32>,
    %c0_26 = arith.constant 0 : index
    %c1024 = arith.constant 1024 : index
    %22 = vector.load %arg9[%c0_26, %c1024] : memref<32x1408xf32, #tpu.memory_space<vmem>>, vector<32x128xf32>
    %c256_27 = arith.constant 256 : index
    %c0_28 = arith.constant 0 : index
    %23 = vector.load %arg10[%c256_27, %c0_28] : memref<384x128xf32, #tpu.memory_space<vmem>>, vector<32x128xf32>
    tpu.vector_store %arg10[%c256_27, %c0_28], %22 {strides = array<i32>} : memref<384x128xf32, #tpu.memory_space<vmem>>, vector<32x128xf32>,
    %c0_29 = arith.constant 0 : index
    %c1152 = arith.constant 1152 : index
    %24 = vector.load %arg9[%c0_29, %c1152] : memref<32x1408xf32, #tpu.memory_space<vmem>>, vector<32x128xf32>
    %c288 = arith.constant 288 : index
    %c0_30 = arith.constant 0 : index
    %25 = vector.load %arg10[%c288, %c0_30] : memref<384x128xf32, #tpu.memory_space<vmem>>, vector<32x128xf32>
    tpu.vector_store %arg10[%c288, %c0_30], %24 {strides = array<i32>} : memref<384x128xf32, #tpu.memory_space<vmem>>, vector<32x128xf32>,
    %c0_31 = arith.constant 0 : index
    %c1280 = arith.constant 1280 : index
    %26 = vector.load %arg9[%c0_31, %c1280] : memref<32x1408xf32, #tpu.memory_space<vmem>>, vector<32x128xf32>
    %c320 = arith.constant 320 : index
    %c0_32 = arith.constant 0 : index
    %27 = vector.load %arg10[%c320, %c0_32] : memref<384x128xf32, #tpu.memory_space<vmem>>, vector<32x128xf32>
    tpu.vector_store %arg10[%c320, %c0_32], %26 {strides = array<i32>} : memref<384x128xf32, #tpu.memory_space<vmem>>, vector<32x128xf32>,
    %c0_33 = arith.constant 0 : index
    %c0_34 = arith.constant 0 : index
    %28 = vector.load %arg0[%c0_33, %c0_34] : memref<32x384xf32, #tpu.memory_space<vmem>>, vector<32x384xf32>
    %c0_35 = arith.constant 0 : index
    %c0_36 = arith.constant 0 : index
    %29 = vector.load %arg10[%c0_35, %c0_36] : memref<384x128xf32, #tpu.memory_space<vmem>>, vector<384x128xf32>
    %cst_37 = arith.constant dense<0.000000e+00> : vector<32x128xf32>
    %30 = tpu.matmul %28, %29, %cst_37 {dimension_numbers = #tpu.dot_dimension_numbers<[1], [0], [0], [1], [0, 0, 1, 1], [], []>} : vector<32x384xf32>, vector<384x128xf32>, vector<32x128xf32> -> vector<32x128xf32>
    %c0_38 = arith.constant 0 : index
    %c0_39 = arith.constant 0 : index
    %31 = vector.load %arg3[%c0_38, %c0_39] : memref<1x128xf32, #tpu.memory_space<vmem>>, vector<1x128xf32>
    %32 = vector.broadcast %31 : vector<1x128xf32> to vector<32x128xf32>
    %33 = arith.addf %30, %32 : vector<32x128xf32>
    %cst_40 = arith.constant 0.000000e+00 : f32
    %34 = vector.broadcast %cst_40 : f32 to vector<32x128xf32>
    %35 = arith.maximumf %33, %34 : vector<32x128xf32>
    %c0_41 = arith.constant 0 : index
    %c0_42 = arith.constant 0 : index
    %36 = vector.load %arg4[%c0_41, %c0_42] : memref<128x1408xf32, #tpu.memory_space<vmem>>, vector<128x1408xf32>
    %cst_43 = arith.constant dense<0.000000e+00> : vector<32x1408xf32>
    %37 = tpu.matmul %35, %36, %cst_43 {dimension_numbers = #tpu.dot_dimension_numbers<[1], [0], [0], [1], [0, 0, 1, 1], [], []>} : vector<32x128xf32>, vector<128x1408xf32>, vector<32x1408xf32> -> vector<32x1408xf32>
    %c0_44 = arith.constant 0 : index
    %c0_45 = arith.constant 0 : index
    %38 = vector.load %arg9[%c0_44, %c0_45] : memref<32x1408xf32, #tpu.memory_space<vmem>>, vector<32x1408xf32>
    tpu.vector_store %arg9[%c0_44, %c0_45], %37 {strides = array<i32>} : memref<32x1408xf32, #tpu.memory_space<vmem>>, vector<32x1408xf32>,
    %c0_46 = arith.constant 0 : index
    %c0_47 = arith.constant 0 : index
    %39 = vector.load %arg9[%c0_46, %c0_47] : memref<32x1408xf32, #tpu.memory_space<vmem>>, vector<32x128xf32>
    %c0_48 = arith.constant 0 : index
    %c0_49 = arith.constant 0 : index
    %40 = vector.load %arg10[%c0_48, %c0_49] : memref<384x128xf32, #tpu.memory_space<vmem>>, vector<32x128xf32>
    tpu.vector_store %arg10[%c0_48, %c0_49], %39 {strides = array<i32>} : memref<384x128xf32, #tpu.memory_space<vmem>>, vector<32x128xf32>,
    %c0_50 = arith.constant 0 : index
    %c128_51 = arith.constant 128 : index
    %41 = vector.load %arg9[%c0_50, %c128_51] : memref<32x1408xf32, #tpu.memory_space<vmem>>, vector<32x128xf32>
    %c32_52 = arith.constant 32 : index
    %c0_53 = arith.constant 0 : index
    %42 = vector.load %arg10[%c32_52, %c0_53] : memref<384x128xf32, #tpu.memory_space<vmem>>, vector<32x128xf32>
    tpu.vector_store %arg10[%c32_52, %c0_53], %41 {strides = array<i32>} : memref<384x128xf32, #tpu.memory_space<vmem>>, vector<32x128xf32>,
    %c0_54 = arith.constant 0 : index
    %c256_55 = arith.constant 256 : index
    %43 = vector.load %arg9[%c0_54, %c256_55] : memref<32x1408xf32, #tpu.memory_space<vmem>>, vector<32x128xf32>
    %c64_56 = arith.constant 64 : index
    %c0_57 = arith.constant 0 : index
    %44 = vector.load %arg10[%c64_56, %c0_57] : memref<384x128xf32, #tpu.memory_space<vmem>>, vector<32x128xf32>
    tpu.vector_store %arg10[%c64_56, %c0_57], %43 {strides = array<i32>} : memref<384x128xf32, #tpu.memory_space<vmem>>, vector<32x128xf32>,
    %c0_58 = arith.constant 0 : index
    %c384_59 = arith.constant 384 : index
    %45 = vector.load %arg9[%c0_58, %c384_59] : memref<32x1408xf32, #tpu.memory_space<vmem>>, vector<32x128xf32>
    %c96_60 = arith.constant 96 : index
    %c0_61 = arith.constant 0 : index
    %46 = vector.load %arg10[%c96_60, %c0_61] : memref<384x128xf32, #tpu.memory_space<vmem>>, vector<32x128xf32>
    tpu.vector_store %arg10[%c96_60, %c0_61], %45 {strides = array<i32>} : memref<384x128xf32, #tpu.memory_space<vmem>>, vector<32x128xf32>,
    %c0_62 = arith.constant 0 : index
    %c512_63 = arith.constant 512 : index
    %47 = vector.load %arg9[%c0_62, %c512_63] : memref<32x1408xf32, #tpu.memory_space<vmem>>, vector<32x128xf32>
    %c128_64 = arith.constant 128 : index
    %c0_65 = arith.constant 0 : index
    %48 = vector.load %arg10[%c128_64, %c0_65] : memref<384x128xf32, #tpu.memory_space<vmem>>, vector<32x128xf32>
    tpu.vector_store %arg10[%c128_64, %c0_65], %47 {strides = array<i32>} : memref<384x128xf32, #tpu.memory_space<vmem>>, vector<32x128xf32>,
    %c0_66 = arith.constant 0 : index
    %c640_67 = arith.constant 640 : index
    %49 = vector.load %arg9[%c0_66, %c640_67] : memref<32x1408xf32, #tpu.memory_space<vmem>>, vector<32x128xf32>
    %c160_68 = arith.constant 160 : index
    %c0_69 = arith.constant 0 : index
    %50 = vector.load %arg10[%c160_68, %c0_69] : memref<384x128xf32, #tpu.memory_space<vmem>>, vector<32x128xf32>
    tpu.vector_store %arg10[%c160_68, %c0_69], %49 {strides = array<i32>} : memref<384x128xf32, #tpu.memory_space<vmem>>, vector<32x128xf32>,
    %c0_70 = arith.constant 0 : index
    %c768_71 = arith.constant 768 : index
    %51 = vector.load %arg9[%c0_70, %c768_71] : memref<32x1408xf32, #tpu.memory_space<vmem>>, vector<32x128xf32>
    %c192_72 = arith.constant 192 : index
    %c0_73 = arith.constant 0 : index
    %52 = vector.load %arg10[%c192_72, %c0_73] : memref<384x128xf32, #tpu.memory_space<vmem>>, vector<32x128xf32>
    tpu.vector_store %arg10[%c192_72, %c0_73], %51 {strides = array<i32>} : memref<384x128xf32, #tpu.memory_space<vmem>>, vector<32x128xf32>,
    %c0_74 = arith.constant 0 : index
    %c896_75 = arith.constant 896 : index
    %53 = vector.load %arg9[%c0_74, %c896_75] : memref<32x1408xf32, #tpu.memory_space<vmem>>, vector<32x128xf32>
    %c224_76 = arith.constant 224 : index
    %c0_77 = arith.constant 0 : index
    %54 = vector.load %arg10[%c224_76, %c0_77] : memref<384x128xf32, #tpu.memory_space<vmem>>, vector<32x128xf32>
    tpu.vector_store %arg10[%c224_76, %c0_77], %53 {strides = array<i32>} : memref<384x128xf32, #tpu.memory_space<vmem>>, vector<32x128xf32>,
    %c0_78 = arith.constant 0 : index
    %c1024_79 = arith.constant 1024 : index
    %55 = vector.load %arg9[%c0_78, %c1024_79] : memref<32x1408xf32, #tpu.memory_space<vmem>>, vector<32x128xf32>
    %c256_80 = arith.constant 256 : index
    %c0_81 = arith.constant 0 : index
    %56 = vector.load %arg10[%c256_80, %c0_81] : memref<384x128xf32, #tpu.memory_space<vmem>>, vector<32x128xf32>
    tpu.vector_store %arg10[%c256_80, %c0_81], %55 {strides = array<i32>} : memref<384x128xf32, #tpu.memory_space<vmem>>, vector<32x128xf32>,
    %c0_82 = arith.constant 0 : index
    %c1152_83 = arith.constant 1152 : index
    %57 = vector.load %arg9[%c0_82, %c1152_83] : memref<32x1408xf32, #tpu.memory_space<vmem>>, vector<32x128xf32>
    %c288_84 = arith.constant 288 : index
    %c0_85 = arith.constant 0 : index
    %58 = vector.load %arg10[%c288_84, %c0_85] : memref<384x128xf32, #tpu.memory_space<vmem>>, vector<32x128xf32>
    tpu.vector_store %arg10[%c288_84, %c0_85], %57 {strides = array<i32>} : memref<384x128xf32, #tpu.memory_space<vmem>>, vector<32x128xf32>,
    %c0_86 = arith.constant 0 : index
    %c1280_87 = arith.constant 1280 : index
    %59 = vector.load %arg9[%c0_86, %c1280_87] : memref<32x1408xf32, #tpu.memory_space<vmem>>, vector<32x128xf32>
    %c320_88 = arith.constant 320 : index
    %c0_89 = arith.constant 0 : index
    %60 = vector.load %arg10[%c320_88, %c0_89] : memref<384x128xf32, #tpu.memory_space<vmem>>, vector<32x128xf32>
    tpu.vector_store %arg10[%c320_88, %c0_89], %59 {strides = array<i32>} : memref<384x128xf32, #tpu.memory_space<vmem>>, vector<32x128xf32>,
    %c0_90 = arith.constant 0 : index
    %c0_91 = arith.constant 0 : index
    %61 = vector.load %arg0[%c0_90, %c0_91] : memref<32x384xf32, #tpu.memory_space<vmem>>, vector<32x384xf32>
    %c0_92 = arith.constant 0 : index
    %c0_93 = arith.constant 0 : index
    %62 = vector.load %arg10[%c0_92, %c0_93] : memref<384x128xf32, #tpu.memory_space<vmem>>, vector<384x128xf32>
    %cst_94 = arith.constant dense<0.000000e+00> : vector<32x128xf32>
    %63 = tpu.matmul %61, %62, %cst_94 {dimension_numbers = #tpu.dot_dimension_numbers<[1], [0], [0], [1], [0, 0, 1, 1], [], []>} : vector<32x384xf32>, vector<384x128xf32>, vector<32x128xf32> -> vector<32x128xf32>
    %c0_95 = arith.constant 0 : index
    %c0_96 = arith.constant 0 : index
    %64 = vector.load %arg5[%c0_95, %c0_96] : memref<1x128xf32, #tpu.memory_space<vmem>>, vector<1x128xf32>
    %65 = vector.broadcast %64 : vector<1x128xf32> to vector<32x128xf32>
    %66 = arith.addf %63, %65 : vector<32x128xf32>
    %cst_97 = arith.constant 0.000000e+00 : f32
    %67 = vector.broadcast %cst_97 : f32 to vector<32x128xf32>
    %68 = arith.maximumf %66, %67 : vector<32x128xf32>
    %c0_98 = arith.constant 0 : index
    %c0_99 = arith.constant 0 : index
    %69 = vector.load %arg6[%c0_98, %c0_99] : memref<128x1408xf32, #tpu.memory_space<vmem>>, vector<128x1408xf32>
    %cst_100 = arith.constant dense<0.000000e+00> : vector<32x1408xf32>
    %70 = tpu.matmul %68, %69, %cst_100 {dimension_numbers = #tpu.dot_dimension_numbers<[1], [0], [0], [1], [0, 0, 1, 1], [], []>} : vector<32x128xf32>, vector<128x1408xf32>, vector<32x1408xf32> -> vector<32x1408xf32>
    %c0_101 = arith.constant 0 : index
    %c0_102 = arith.constant 0 : index
    %71 = vector.load %arg9[%c0_101, %c0_102] : memref<32x1408xf32, #tpu.memory_space<vmem>>, vector<32x1408xf32>
    tpu.vector_store %arg9[%c0_101, %c0_102], %70 {strides = array<i32>} : memref<32x1408xf32, #tpu.memory_space<vmem>>, vector<32x1408xf32>,
    %c0_103 = arith.constant 0 : index
    %c0_104 = arith.constant 0 : index
    %72 = vector.load %arg9[%c0_103, %c0_104] : memref<32x1408xf32, #tpu.memory_space<vmem>>, vector<32x128xf32>
    %c0_105 = arith.constant 0 : index
    %c0_106 = arith.constant 0 : index
    %73 = vector.load %arg10[%c0_105, %c0_106] : memref<384x128xf32, #tpu.memory_space<vmem>>, vector<32x128xf32>
    tpu.vector_store %arg10[%c0_105, %c0_106], %72 {strides = array<i32>} : memref<384x128xf32, #tpu.memory_space<vmem>>, vector<32x128xf32>,
    %c0_107 = arith.constant 0 : index
    %c128_108 = arith.constant 128 : index
    %74 = vector.load %arg9[%c0_107, %c128_108] : memref<32x1408xf32, #tpu.memory_space<vmem>>, vector<32x128xf32>
    %c32_109 = arith.constant 32 : index
    %c0_110 = arith.constant 0 : index
    %75 = vector.load %arg10[%c32_109, %c0_110] : memref<384x128xf32, #tpu.memory_space<vmem>>, vector<32x128xf32>
    tpu.vector_store %arg10[%c32_109, %c0_110], %74 {strides = array<i32>} : memref<384x128xf32, #tpu.memory_space<vmem>>, vector<32x128xf32>,
    %c0_111 = arith.constant 0 : index
    %c256_112 = arith.constant 256 : index
    %76 = vector.load %arg9[%c0_111, %c256_112] : memref<32x1408xf32, #tpu.memory_space<vmem>>, vector<32x128xf32>
    %c64_113 = arith.constant 64 : index
    %c0_114 = arith.constant 0 : index
    %77 = vector.load %arg10[%c64_113, %c0_114] : memref<384x128xf32, #tpu.memory_space<vmem>>, vector<32x128xf32>
    tpu.vector_store %arg10[%c64_113, %c0_114], %76 {strides = array<i32>} : memref<384x128xf32, #tpu.memory_space<vmem>>, vector<32x128xf32>,
    %c0_115 = arith.constant 0 : index
    %c384_116 = arith.constant 384 : index
    %78 = vector.load %arg9[%c0_115, %c384_116] : memref<32x1408xf32, #tpu.memory_space<vmem>>, vector<32x128xf32>
    %c96_117 = arith.constant 96 : index
    %c0_118 = arith.constant 0 : index
    %79 = vector.load %arg10[%c96_117, %c0_118] : memref<384x128xf32, #tpu.memory_space<vmem>>, vector<32x128xf32>
    tpu.vector_store %arg10[%c96_117, %c0_118], %78 {strides = array<i32>} : memref<384x128xf32, #tpu.memory_space<vmem>>, vector<32x128xf32>,
    %c0_119 = arith.constant 0 : index
    %c512_120 = arith.constant 512 : index
    %80 = vector.load %arg9[%c0_119, %c512_120] : memref<32x1408xf32, #tpu.memory_space<vmem>>, vector<32x128xf32>
    %c128_121 = arith.constant 128 : index
    %c0_122 = arith.constant 0 : index
    %81 = vector.load %arg10[%c128_121, %c0_122] : memref<384x128xf32, #tpu.memory_space<vmem>>, vector<32x128xf32>
    tpu.vector_store %arg10[%c128_121, %c0_122], %80 {strides = array<i32>} : memref<384x128xf32, #tpu.memory_space<vmem>>, vector<32x128xf32>,
    %c0_123 = arith.constant 0 : index
    %c640_124 = arith.constant 640 : index
    %82 = vector.load %arg9[%c0_123, %c640_124] : memref<32x1408xf32, #tpu.memory_space<vmem>>, vector<32x128xf32>
    %c160_125 = arith.constant 160 : index
    %c0_126 = arith.constant 0 : index
    %83 = vector.load %arg10[%c160_125, %c0_126] : memref<384x128xf32, #tpu.memory_space<vmem>>, vector<32x128xf32>
    tpu.vector_store %arg10[%c160_125, %c0_126], %82 {strides = array<i32>} : memref<384x128xf32, #tpu.memory_space<vmem>>, vector<32x128xf32>,
    %c0_127 = arith.constant 0 : index
    %c768_128 = arith.constant 768 : index
    %84 = vector.load %arg9[%c0_127, %c768_128] : memref<32x1408xf32, #tpu.memory_space<vmem>>, vector<32x128xf32>
    %c192_129 = arith.constant 192 : index
    %c0_130 = arith.constant 0 : index
    %85 = vector.load %arg10[%c192_129, %c0_130] : memref<384x128xf32, #tpu.memory_space<vmem>>, vector<32x128xf32>
    tpu.vector_store %arg10[%c192_129, %c0_130], %84 {strides = array<i32>} : memref<384x128xf32, #tpu.memory_space<vmem>>, vector<32x128xf32>,
    %c0_131 = arith.constant 0 : index
    %c896_132 = arith.constant 896 : index
    %86 = vector.load %arg9[%c0_131, %c896_132] : memref<32x1408xf32, #tpu.memory_space<vmem>>, vector<32x128xf32>
    %c224_133 = arith.constant 224 : index
    %c0_134 = arith.constant 0 : index
    %87 = vector.load %arg10[%c224_133, %c0_134] : memref<384x128xf32, #tpu.memory_space<vmem>>, vector<32x128xf32>
    tpu.vector_store %arg10[%c224_133, %c0_134], %86 {strides = array<i32>} : memref<384x128xf32, #tpu.memory_space<vmem>>, vector<32x128xf32>,
    %c0_135 = arith.constant 0 : index
    %c1024_136 = arith.constant 1024 : index
    %88 = vector.load %arg9[%c0_135, %c1024_136] : memref<32x1408xf32, #tpu.memory_space<vmem>>, vector<32x128xf32>
    %c256_137 = arith.constant 256 : index
    %c0_138 = arith.constant 0 : index
    %89 = vector.load %arg10[%c256_137, %c0_138] : memref<384x128xf32, #tpu.memory_space<vmem>>, vector<32x128xf32>
    tpu.vector_store %arg10[%c256_137, %c0_138], %88 {strides = array<i32>} : memref<384x128xf32, #tpu.memory_space<vmem>>, vector<32x128xf32>,
    %c0_139 = arith.constant 0 : index
    %c1152_140 = arith.constant 1152 : index
    %90 = vector.load %arg9[%c0_139, %c1152_140] : memref<32x1408xf32, #tpu.memory_space<vmem>>, vector<32x128xf32>
    %c288_141 = arith.constant 288 : index
    %c0_142 = arith.constant 0 : index
    %91 = vector.load %arg10[%c288_141, %c0_142] : memref<384x128xf32, #tpu.memory_space<vmem>>, vector<32x128xf32>
    tpu.vector_store %arg10[%c288_141, %c0_142], %90 {strides = array<i32>} : memref<384x128xf32, #tpu.memory_space<vmem>>, vector<32x128xf32>,
    %c0_143 = arith.constant 0 : index
    %c1280_144 = arith.constant 1280 : index
    %92 = vector.load %arg9[%c0_143, %c1280_144] : memref<32x1408xf32, #tpu.memory_space<vmem>>, vector<32x128xf32>
    %c320_145 = arith.constant 320 : index
    %c0_146 = arith.constant 0 : index
    %93 = vector.load %arg10[%c320_145, %c0_146] : memref<384x128xf32, #tpu.memory_space<vmem>>, vector<32x128xf32>
    tpu.vector_store %arg10[%c320_145, %c0_146], %92 {strides = array<i32>} : memref<384x128xf32, #tpu.memory_space<vmem>>, vector<32x128xf32>,
    %c0_147 = arith.constant 0 : index
    %c0_148 = arith.constant 0 : index
    %94 = vector.load %arg0[%c0_147, %c0_148] : memref<32x384xf32, #tpu.memory_space<vmem>>, vector<32x384xf32>
    %c0_149 = arith.constant 0 : index
    %c0_150 = arith.constant 0 : index
    %95 = vector.load %arg10[%c0_149, %c0_150] : memref<384x128xf32, #tpu.memory_space<vmem>>, vector<384x128xf32>
    %cst_151 = arith.constant dense<0.000000e+00> : vector<32x128xf32>
    %96 = tpu.matmul %94, %95, %cst_151 {dimension_numbers = #tpu.dot_dimension_numbers<[1], [0], [0], [1], [0, 0, 1, 1], [], []>} : vector<32x384xf32>, vector<384x128xf32>, vector<32x128xf32> -> vector<32x128xf32>
    %c0_152 = arith.constant 0 : index
    %c0_153 = arith.constant 0 : index
    %97 = vector.load %arg7[%c0_152, %c0_153] : memref<1x128xf32, #tpu.memory_space<vmem>>, vector<1x128xf32>
    %98 = vector.broadcast %97 : vector<1x128xf32> to vector<32x128xf32>
    %99 = arith.addf %96, %98 : vector<32x128xf32>
    %c0_154 = arith.constant 0 : index
    %c0_155 = arith.constant 0 : index
    %100 = vector.load %arg8[%c0_154, %c0_155] : memref<32x128xf32, #tpu.memory_space<vmem>>, vector<32x128xf32>
    tpu.vector_store %arg8[%c0_154, %c0_155], %99 {strides = array<i32>} : memref<32x128xf32, #tpu.memory_space<vmem>>, vector<32x128xf32>,
    return
  }
}

</mosaic_0001>

<llo_original>
// kernel: relational_gcn_forward.1
$region0: #{relational_gcn_forward.1}
  #allocation0 [shape = 'u32[]', space=smem, size = 0x4, offset = 0x4, fixed_abs, tag = 'smem constant byte address 0x4 - core index']
  #allocation1 [shape = 'u32[144,128]{1,0:T(1,128)}', space=vmem, size = 0x12000, scoped, tag = 'internal scratch']
  #allocation2 [shape = 'f32[32,1408]{1,0:T(8,128)}', space=vmem, size = 0x2c000, scoped, tag = 'scratch operand']
  #allocation3 [shape = 'f32[384,128]{1,0:T(8,128)}', space=vmem, size = 0x30000, scoped, tag = 'scratch operand']
  %s0 = inlined_call_operand.vmem [shape: f32[32,384], index: 0, kind: input, shape index: {}]
  %s1 = inlined_call_operand.vmem [shape: f32[32,128], index: 1, kind: input, shape index: {}]
  %s2 = inlined_call_operand.vmem [shape: f32[128,1408], index: 2, kind: input, shape index: {}]
  %s3 = inlined_call_operand.vmem [shape: f32[1,128], index: 3, kind: input, shape index: {}]
  %s4 = inlined_call_operand.vmem [shape: f32[128,1408], index: 4, kind: input, shape index: {}]
  %s5 = inlined_call_operand.vmem [shape: f32[1,128], index: 5, kind: input, shape index: {}]
  %s6 = inlined_call_operand.vmem [shape: f32[128,1408], index: 6, kind: input, shape index: {}]
  %s7 = inlined_call_operand.vmem [shape: f32[1,128], index: 7, kind: input, shape index: {}]
  %s8 = inlined_call_operand.vmem [shape: f32[32,128], index: 8, kind: output, shape index: {}]
  %s9 = sld [smem:[#allocation0]]
  $region42: #{relational_gcn_forward.1} parent=0
    _
  %s11 = ssub.s32 1, %s9
  %s12 = scalar_select 0, %s11, %s9
  // Predicated region
  $region2: #{relational_gcn_forward.1} parent=0 // pred_check
    _
  $region3: #{relational_gcn_forward.1} parent=0 // pred_check_branch
    %14 = sbr.rel (0) target = $region5
  $region4: #{relational_gcn_forward.1} parent=0 // pred_region
    _
  $region5: #{relational_gcn_forward.1} parent=0 // pred_fallthru
    _
  // Predicated region
  $region6: #{relational_gcn_forward.1} parent=0 // pred_check
    _
  $region7: #{relational_gcn_forward.1} parent=0 // pred_check_branch
    %16 = sbr.rel (0) target = $region9
  $region8: #{relational_gcn_forward.1} parent=0 // pred_region
    _
  $region9: #{relational_gcn_forward.1} parent=0 // pred_fallthru
    _
  // Predicated region
  $region10: #{relational_gcn_forward.1} parent=0 // pred_check
    _
  $region11: #{relational_gcn_forward.1} parent=0 // pred_check_branch
    %18 = sbr.rel (0) target = $region13
  $region12: #{relational_gcn_forward.1} parent=0 // pred_region
    _
  $region13: #{relational_gcn_forward.1} parent=0 // pred_fallthru
    _
  // Predicated region
  $region14: #{relational_gcn_forward.1} parent=0 // pred_check
    _
  $region15: #{relational_gcn_forward.1} parent=0 // pred_check_branch
    %20 = sbr.rel (0) target = $region17
  $region16: #{relational_gcn_forward.1} parent=0 // pred_region
    _
  $region17: #{relational_gcn_forward.1} parent=0 // pred_fallthru
    _
  // Predicated region
  $region18: #{relational_gcn_forward.1} parent=0 // pred_check
    _
  $region19: #{relational_gcn_forward.1} parent=0 // pred_check_branch
    %22 = sbr.rel (0) target = $region21
  $region20: #{relational_gcn_forward.1} parent=0 // pred_region
    _
  $region21: #{relational_gcn_forward.1} parent=0 // pred_fallthru
    _
  // Predicated region
  $region22: #{relational_gcn_forward.1} parent=0 // pred_check
    _
  $region23: #{relational_gcn_forward.1} parent=0 // pred_check_branch
    %24 = sbr.rel (0) target = $region25
  $region24: #{relational_gcn_forward.1} parent=0 // pred_region
    _
  $region25: #{relational_gcn_forward.1} parent=0 // pred_fallthru
    _
  // Predicated region
  $region26: #{relational_gcn_forward.1} parent=0 // pred_check
    _
  $region27: #{relational_gcn_forward.1} parent=0 // pred_check_branch
    %26 = sbr.rel (0) target = $region29
  $region28: #{relational_gcn_forward.1} parent=0 // pred_region
    _
  $region29: #{relational_gcn_forward.1} parent=0 // pred_fallthru
    _
  // Predicated region
  $region30: #{relational_gcn_forward.1} parent=0 // pred_check
    _
  $region31: #{relational_gcn_forward.1} parent=0 // pred_check_branch
    %28 = sbr.rel (0) target = $region33
  $region32: #{relational_gcn_forward.1} parent=0 // pred_region
    _
  $region33: #{relational_gcn_forward.1} parent=0 // pred_fallthru
    _
  %29 = vst [vmem:[#allocation3 + $0x160] sm:$0xff] 0.0
  %30 = vst [vmem:[#allocation3 + $0x168] sm:$0xff] 0.0
  %31 = vst [vmem:[#allocation3 + $0x170] sm:$0xff] 0.0
  %32 = vst [vmem:[#allocation3 + $0x178] sm:$0xff] 0.0
  %v33 = vld [vmem:[%s1] sm:$0xff]
  %v34 = vld [vmem:[%s1 + $0x8] sm:$0xff]
  %v35 = vld [vmem:[%s1 + $0x10] sm:$0xff]
  %v36 = vld [vmem:[%s1 + $0x18] sm:$0xff]
  %v37 = vld [vmem:[%s2] sm:$0xff]
  %v38 = vld [vmem:[%s2 + $0x8] sm:$0xff]
  %v39 = vld [vmem:[%s2 + $0x10] sm:$0xff]
  %v40 = vld [vmem:[%s2 + $0x18] sm:$0xff]
  %v41 = vld [vmem:[%s2 + $0x20] sm:$0xff]
  %v42 = vld [vmem:[%s2 + $0x28] sm:$0xff]
  %v43 = vld [vmem:[%s2 + $0x30] sm:$0xff]
  %v44 = vld [vmem:[%s2 + $0x38] sm:$0xff]
  %v45 = vld [vmem:[%s2 + $0x40] sm:$0xff]
  %v46 = vld [vmem:[%s2 + $0x48] sm:$0xff]
  %v47 = vld [vmem:[%s2 + $0x50] sm:$0xff]
  %v48 = vld [vmem:[%s2 + $0x58] sm:$0xff]
  %v49 = vld [vmem:[%s2 + $0x60] sm:$0xff]
  %v50 = vld [vmem:[%s2 + $0x68] sm:$0xff]
  %v51 = vld [vmem:[%s2 + $0x70] sm:$0xff]
  %v52 = vld [vmem:[%s2 + $0x78] sm:$0xff]
  %v53 = vld [vmem:[%s2 + $0x80] sm:$0xff]
  %v54 = vld [vmem:[%s2 + $0x88] sm:$0xff]
  %v55 = vld [vmem:[%s2 + $0x90] sm:$0xff]
  %v56 = vld [vmem:[%s2 + $0x98] sm:$0xff]
  %v57 = vld [vmem:[%s2 + $0xa0] sm:$0xff]
  %v58 = vld [vmem:[%s2 + $0xa8] sm:$0xff]
  %v59 = vld [vmem:[%s2 + $0xb0] sm:$0xff]
  %v60 = vld [vmem:[%s2 + $0xb8] sm:$0xff]
  %v61 = vld [vmem:[%s2 + $0xc0] sm:$0xff]
  %v62 = vld [vmem:[%s2 + $0xc8] sm:$0xff]
  %v63 = vld [vmem:[%s2 + $0xd0] sm:$0xff]
  %v64 = vld [vmem:[%s2 + $0xd8] sm:$0xff]
  %v65 = vld [vmem:[%s2 + $0xe0] sm:$0xff]
  %v66 = vld [vmem:[%s2 + $0xe8] sm:$0xff]
  %v67 = vld [vmem:[%s2 + $0xf0] sm:$0xff]
  %v68 = vld [vmem:[%s2 + $0xf8] sm:$0xff]
  %v69 = vld [vmem:[%s2 + $0x100] sm:$0xff]
  %v70 = vld [vmem:[%s2 + $0x108] sm:$0xff]
  %v71 = vld [vmem:[%s2 + $0x110] sm:$0xff]
  %v72 = vld [vmem:[%s2 + $0x118] sm:$0xff]
  %v73 = vld [vmem:[%s2 + $0x120] sm:$0xff]
  %v74 = vld [vmem:[%s2 + $0x128] sm:$0xff]
  %v75 = vld [vmem:[%s2 + $0x130] sm:$0xff]
  %v76 = vld [vmem:[%s2 + $0x138] sm:$0xff]
  %v77 = vld [vmem:[%s2 + $0x140] sm:$0xff]
  %v78 = vld [vmem:[%s2 + $0x148] sm:$0xff]
  %v79 = vld [vmem:[%s2 + $0x150] sm:$0xff]
  %v80 = vld [vmem:[%s2 + $0x158] sm:$0xff]
  %v81 = vld [vmem:[%s2 + $0x160] sm:$0xff]
  %v82 = vld [vmem:[%s2 + $0x168] sm:$0xff]
  %v83 = vld [vmem:[%s2 + $0x170] sm:$0xff]
  %v84 = vld [vmem:[%s2 + $0x178] sm:$0xff]
  %v85 = vld [vmem:[%s2 + $0x180] sm:$0xff]
  %v86 = vld [vmem:[%s2 + $0x188] sm:$0xff]
  %v87 = vld [vmem:[%s2 + $0x190] sm:$0xff]
  %v88 = vld [vmem:[%s2 + $0x198] sm:$0xff]
  %v89 = vld [vmem:[%s2 + $0x1a0] sm:$0xff]
  %v90 = vld [vmem:[%s2 + $0x1a8] sm:$0xff]
  %v91 = vld [vmem:[%s2 + $0x1b0] sm:$0xff]
  %v92 = vld [vmem:[%s2 + $0x1b8] sm:$0xff]
  %v93 = vld [vmem:[%s2 + $0x1c0] sm:$0xff]
  %v94 = vld [vmem:[%s2 + $0x1c8] sm:$0xff]
  %v95 = vld [vmem:[%s2 + $0x1d0] sm:$0xff]
  %v96 = vld [vmem:[%s2 + $0x1d8] sm:$0xff]
  %v97 = vld [vmem:[%s2 + $0x1e0] sm:$0xff]
  %v98 = vld [vmem:[%s2 + $0x1e8] sm:$0xff]
  %v99 = vld [vmem:[%s2 + $0x1f0] sm:$0xff]
  %v100 = vld [vmem:[%s2 + $0x1f8] sm:$0xff]
  %v101 = vld [vmem:[%s2 + $0x200] sm:$0xff]
  %v102 = vld [vmem:[%s2 + $0x208] sm:$0xff]
  %v103 = vld [vmem:[%s2 + $0x210] sm:$0xff]
  %v104 = vld [vmem:[%s2 + $0x218] sm:$0xff]
  %v105 = vld [vmem:[%s2 + $0x220] sm:$0xff]
  %v106 = vld [vmem:[%s2 + $0x228] sm:$0xff]
  %v107 = vld [vmem:[%s2 + $0x230] sm:$0xff]
  %v108 = vld [vmem:[%s2 + $0x238] sm:$0xff]
  %v109 = vld [vmem:[%s2 + $0x240] sm:$0xff]
  %v110 = vld [vmem:[%s2 + $0x248] sm:$0xff]
  %v111 = vld [vmem:[%s2 + $0x250] sm:$0xff]
  %v112 = vld [vmem:[%s2 + $0x258] sm:$0xff]
  %v113 = vld [vmem:[%s2 + $0x260] sm:$0xff]
  %v114 = vld [vmem:[%s2 + $0x268] sm:$0xff]
  %v115 = vld [vmem:[%s2 + $0x270] sm:$0xff]
  %v116 = vld [vmem:[%s2 + $0x278] sm:$0xff]
  %v117 = vld [vmem:[%s2 + $0x280] sm:$0xff]
  %v118 = vld [vmem:[%s2 + $0x288] sm:$0xff]
  %v119 = vld [vmem:[%s2 + $0x290] sm:$0xff]
  %v120 = vld [vmem:[%s2 + $0x298] sm:$0xff]
  %v121 = vld [vmem:[%s2 + $0x2a0] sm:$0xff]
  %v122 = vld [vmem:[%s2 + $0x2a8] sm:$0xff]
  %v123 = vld [vmem:[%s2 + $0x2b0] sm:$0xff]
  %v124 = vld [vmem:[%s2 + $0x2b8] sm:$0xff]
  %v125 = vld [vmem:[%s2 + $0x2c0] sm:$0xff]
  %v126 = vld [vmem:[%s2 + $0x2c8] sm:$0xff]
  %v127 = vld [vmem:[%s2 + $0x2d0] sm:$0xff]
  %v128 = vld [vmem:[%s2 + $0x2d8] sm:$0xff]
  %v129 = vld [vmem:[%s2 + $0x2e0] sm:$0xff]
  %v130 = vld [vmem:[%s2 + $0x2e8] sm:$0xff]
  %v131 = vld [vmem:[%s2 + $0x2f0] sm:$0xff]
  %v132 = vld [vmem:[%s2 + $0x2f8] sm:$0xff]
  %v133 = vld [vmem:[%s2 + $0x300] sm:$0xff]
  %v134 = vld [vmem:[%s2 + $0x308] sm:$0xff]
  %v135 = vld [vmem:[%s2 + $0x310] sm:$0xff]
  %v136 = vld [vmem:[%s2 + $0x318] sm:$0xff]
  %v137 = vld [vmem:[%s2 + $0x320] sm:$0xff]
  %v138 = vld [vmem:[%s2 + $0x328] sm:$0xff]
  %v139 = vld [vmem:[%s2 + $0x330] sm:$0xff]
  %v140 = vld [vmem:[%s2 + $0x338] sm:$0xff]
  %v141 = vld [vmem:[%s2 + $0x340] sm:$0xff]
  %v142 = vld [vmem:[%s2 + $0x348] sm:$0xff]
  %v143 = vld [vmem:[%s2 + $0x350] sm:$0xff]
  %v144 = vld [vmem:[%s2 + $0x358] sm:$0xff]
  %v145 = vld [vmem:[%s2 + $0x360] sm:$0xff]
  %v146 = vld [vmem:[%s2 + $0x368] sm:$0xff]
  %v147 = vld [vmem:[%s2 + $0x370] sm:$0xff]
  %v148 = vld [vmem:[%s2 + $0x378] sm:$0xff]
  %v149 = vld [vmem:[%s2 + $0x380] sm:$0xff]
  %v150 = vld [vmem:[%s2 + $0x388] sm:$0xff]
  %v151 = vld [vmem:[%s2 + $0x390] sm:$0xff]
  %v152 = vld [vmem:[%s2 + $0x398] sm:$0xff]
  %v153 = vld [vmem:[%s2 + $0x3a0] sm:$0xff]
  %v154 = vld [vmem:[%s2 + $0x3a8] sm:$0xff]
  %v155 = vld [vmem:[%s2 + $0x3b0] sm:$0xff]
  %v156 = vld [vmem:[%s2 + $0x3b8] sm:$0xff]
  %v157 = vld [vmem:[%s2 + $0x3c0] sm:$0xff]
  %v158 = vld [vmem:[%s2 + $0x3c8] sm:$0xff]
  %v159 = vld [vmem:[%s2 + $0x3d0] sm:$0xff]
  %v160 = vld [vmem:[%s2 + $0x3d8] sm:$0xff]
  %v161 = vld [vmem:[%s2 + $0x3e0] sm:$0xff]
  %v162 = vld [vmem:[%s2 + $0x3e8] sm:$0xff]
  %v163 = vld [vmem:[%s2 + $0x3f0] sm:$0xff]
  %v164 = vld [vmem:[%s2 + $0x3f8] sm:$0xff]
  %v165 = vld [vmem:[%s2 + $0x400] sm:$0xff]
  %v166 = vld [vmem:[%s2 + $0x408] sm:$0xff]
  %v167 = vld [vmem:[%s2 + $0x410] sm:$0xff]
  %v168 = vld [vmem:[%s2 + $0x418] sm:$0xff]
  %v169 = vld [vmem:[%s2 + $0x420] sm:$0xff]
  %v170 = vld [vmem:[%s2 + $0x428] sm:$0xff]
  %v171 = vld [vmem:[%s2 + $0x430] sm:$0xff]
  %v172 = vld [vmem:[%s2 + $0x438] sm:$0xff]
  %v173 = vld [vmem:[%s2 + $0x440] sm:$0xff]
  %v174 = vld [vmem:[%s2 + $0x448] sm:$0xff]
  %v175 = vld [vmem:[%s2 + $0x450] sm:$0xff]
  %v176 = vld [vmem:[%s2 + $0x458] sm:$0xff]
  %v177 = vld [vmem:[%s2 + $0x460] sm:$0xff]
  %v178 = vld [vmem:[%s2 + $0x468] sm:$0xff]
  %v179 = vld [vmem:[%s2 + $0x470] sm:$0xff]
  %v180 = vld [vmem:[%s2 + $0x478] sm:$0xff]
  %v181 = vld [vmem:[%s2 + $0x480] sm:$0xff]
  %v182 = vld [vmem:[%s2 + $0x488] sm:$0xff]
  %v183 = vld [vmem:[%s2 + $0x490] sm:$0xff]
  %v184 = vld [vmem:[%s2 + $0x498] sm:$0xff]
  %v185 = vld [vmem:[%s2 + $0x4a0] sm:$0xff]
  %v186 = vld [vmem:[%s2 + $0x4a8] sm:$0xff]
  %v187 = vld [vmem:[%s2 + $0x4b0] sm:$0xff]
  %v188 = vld [vmem:[%s2 + $0x4b8] sm:$0xff]
  %v189 = vld [vmem:[%s2 + $0x4c0] sm:$0xff]
  %v190 = vld [vmem:[%s2 + $0x4c8] sm:$0xff]
  %v191 = vld [vmem:[%s2 + $0x4d0] sm:$0xff]
  %v192 = vld [vmem:[%s2 + $0x4d8] sm:$0xff]
  %v193 = vld [vmem:[%s2 + $0x4e0] sm:$0xff]
  %v194 = vld [vmem:[%s2 + $0x4e8] sm:$0xff]
  %v195 = vld [vmem:[%s2 + $0x4f0] sm:$0xff]
  %v196 = vld [vmem:[%s2 + $0x4f8] sm:$0xff]
  %v197 = vld [vmem:[%s2 + $0x500] sm:$0xff]
  %v198 = vld [vmem:[%s2 + $0x508] sm:$0xff]
  %v199 = vld [vmem:[%s2 + $0x510] sm:$0xff]
  %v200 = vld [vmem:[%s2 + $0x518] sm:$0xff]
  %v201 = vld [vmem:[%s2 + $0x520] sm:$0xff]
  %v202 = vld [vmem:[%s2 + $0x528] sm:$0xff]
  %v203 = vld [vmem:[%s2 + $0x530] sm:$0xff]
  %v204 = vld [vmem:[%s2 + $0x538] sm:$0xff]
  %v205 = vld [vmem:[%s2 + $0x540] sm:$0xff]
  %v206 = vld [vmem:[%s2 + $0x548] sm:$0xff]
  %v207 = vld [vmem:[%s2 + $0x550] sm:$0xff]
  %v208 = vld [vmem:[%s2 + $0x558] sm:$0xff]
  %v209 = vld [vmem:[%s2 + $0x560] sm:$0xff]
  %v210 = vld [vmem:[%s2 + $0x568] sm:$0xff]
  %v211 = vld [vmem:[%s2 + $0x570] sm:$0xff]
  %v212 = vld [vmem:[%s2 + $0x578] sm:$0xff]
  %213 = vmatprep.subr.mxu0 %v38
  %214 = vmatpush1.msra.mxu0 %v37
  %215 = vmatprep.subr.mxu0 %v49
  %216 = vmatpush1.msra.mxu0 %v48
  %217 = vmatprep.subr.mxu0 %v60
  %218 = vmatpush1.msra.mxu0 %v59
  %219 = vmatprep.subr.mxu0 %v71
  %220 = vmatpush1.msra.mxu0 %v70
  %221 = vmatprep.subr.mxu0 %v82
  %222 = vmatpush1.msra.mxu0 %v81
  %223 = vmatprep.subr.mxu0 %v93
  %224 = vmatpush1.msra.mxu0 %v92
  %225 = vmatprep.subr.mxu0 %v104
  %226 = vmatpush1.msra.mxu0 %v103
  %227 = vmatprep.subr.mxu0 %v115
  %228 = vmatpush1.msra.mxu0 %v114
  %229 = vmatprep.subr.mxu0 %v126
  %230 = vmatpush1.msra.mxu0 %v125
  %231 = vmatprep.subr.mxu0 %v137
  %232 = vmatpush1.msra.mxu0 %v136
  %233 = vmatprep.subr.mxu0 %v148
  %234 = vmatpush1.msra.mxu0 %v147
  %235 = vmatprep.subr.mxu0 %v159
  %236 = vmatpush1.msra.mxu0 %v158
  %237 = vmatprep.subr.mxu0 %v170
  %238 = vmatpush1.msra.mxu0 %v169
  %239 = vmatprep.subr.mxu0 %v181
  %240 = vmatpush1.msra.mxu0 %v180
  %241 = vmatprep.subr.mxu0 %v192
  %242 = vmatpush1.msra.mxu0 %v191
  %243 = vmatprep.subr.mxu0 %v203
  %244 = vmatpush1.msra.mxu0 %v202
  %245 = vmatprep.subr.mxu0 0.0
  %246 = vmatpush1.msra.mxu0 0.0
  %247 = vmatprep.subr.mxu0 0.0
  %248 = vmatpush1.msra.mxu0 0.0
  %249 = vmatprep.subr.mxu0 0.0
  %250 = vmatpush1.msra.mxu0 0.0
  %251 = vmatprep.subr.mxu0 0.0
  %252 = vmatpush1.msra.mxu0 0.0
  %253 = vmatprep.subr.mxu0 0.0
  %254 = vmatpush1.msra.mxu0 0.0
  %255 = vmatprep.subr.mxu0 0.0
  %256 = vmatpush1.msra.mxu0 0.0
  %257 = vmatprep.subr.mxu0 0.0
  %258 = vmatpush1.msra.mxu0 0.0
  %259 = vmatprep.subr.mxu0 0.0
  %260 = vmatpush1.msra.mxu0 0.0
  %261 = vmatprep.subr.mxu0 0.0
  %262 = vmatpush1.msra.mxu0 0.0
  %263 = vmatprep.subr.mxu0 0.0
  %264 = vmatpush1.msra.mxu0 0.0
  %265 = vmatprep.subr.mxu0 0.0
  %266 = vmatpush1.msra.mxu0 0.0
  %267 = vmatprep.subr.mxu0 0.0
  %268 = vmatpush1.msra.mxu0 0.0
  %269 = vmatprep.subr.mxu0 0.0
  %270 = vmatpush1.msra.mxu0 0.0
  %271 = vmatprep.subr.mxu0 0.0
  %272 = vmatpush1.msra.mxu0 0.0
  %273 = vmatprep.subr.mxu0 0.0
  %274 = vmatpush1.msra.mxu0 0.0
  %275 = vmatprep.subr.mxu0 0.0
  %276 = vmatpush1.msra.mxu0 0.0
  %277 = vmatprep.mubr.f32.mxu0 0.0
  %278 = vmatmul.mubr.f32.gmra.mrb[0].mxu0 %v33
  %v279 = vpop.f32.mrb[0].mxu0
  %v280 = vadd.f32 0.0, %v279
  %v281 = vpop.f32.mrb[0].mxu0
  %v282 = vadd.f32 0.0, %v281
  %283 = vmatprep.mubr.f32.mxu0 0.0
  %284 = vmatmul.mubr.f32.gmra.mrb[0].mxu0 %v34
  %v285 = vpop.f32.mrb[0].mxu0
  %v286 = vadd.f32 0.0, %v285
  %v287 = vpop.f32.mrb[0].mxu0
  %v288 = vadd.f32 0.0, %v287
  %289 = vmatprep.mubr.f32.mxu0 0.0
  %290 = vmatmul.mubr.f32.gmra.mrb[0].mxu0 %v35
  %v291 = vpop.f32.mrb[0].mxu0
  %v292 = vadd.f32 0.0, %v291
  %v293 = vpop.f32.mrb[0].mxu0
  %v294 = vadd.f32 0.0, %v293
  %295 = vmatprep.mubr.f32.mxu0 0.0
  %296 = vmatmul.mubr.f32.gmra.mrb[0].mxu0 %v36
  %v297 = vpop.f32.mrb[0].mxu0
  %v298 = vadd.f32 0.0, %v297
  %v299 = vpop.f32.mrb[0].mxu0
  %v300 = vadd.f32 0.0, %v299
  %301 = vdwg.mxu0
  %302 = vmatprep.subr.mxu0 %v40
  %303 = vmatpush1.msra.mxu0 %v39
  %304 = vmatprep.subr.mxu0 %v51
  %305 = vmatpush1.msra.mxu0 %v50
  %306 = vmatprep.subr.mxu0 %v62
  %307 = vmatpush1.msra.mxu0 %v61
  %308 = vmatprep.subr.mxu0 %v73
  %309 = vmatpush1.msra.mxu0 %v72
  %310 = vmatprep.subr.mxu0 %v84
  %311 = vmatpush1.msra.mxu0 %v83
  %312 = vmatprep.subr.mxu0 %v95
  %313 = vmatpush1.msra.mxu0 %v94
  %314 = vmatprep.subr.mxu0 %v106
  %315 = vmatpush1.msra.mxu0 %v105
  %316 = vmatprep.subr.mxu0 %v117
  %317 = vmatpush1.msra.mxu0 %v116
  %318 = vmatprep.subr.mxu0 %v128
  %319 = vmatpush1.msra.mxu0 %v127
  %320 = vmatprep.subr.mxu0 %v139
  %321 = vmatpush1.msra.mxu0 %v138
  %322 = vmatprep.subr.mxu0 %v150
  %323 = vmatpush1.msra.mxu0 %v149
  %324 = vmatprep.subr.mxu0 %v161
  %325 = vmatpush1.msra.mxu0 %v160
  %326 = vmatprep.subr.mxu0 %v172
  %327 = vmatpush1.msra.mxu0 %v171
  %328 = vmatprep.subr.mxu0 %v183
  %329 = vmatpush1.msra.mxu0 %v182
  %330 = vmatprep.subr.mxu0 %v194
  %331 = vmatpush1.msra.mxu0 %v193
  %332 = vmatprep.subr.mxu0 %v205
  %333 = vmatpush1.msra.mxu0 %v204
  %334 = vmatprep.subr.mxu0 0.0
  %335 = vmatpush1.msra.mxu0 0.0
  %336 = vmatprep.subr.mxu0 0.0
  %337 = vmatpush1.msra.mxu0 0.0
  %338 = vmatprep.subr.mxu0 0.0
  %339 = vmatpush1.msra.mxu0 0.0
  %340 = vmatprep.subr.mxu0 0.0
  %341 = vmatpush1.msra.mxu0 0.0
  %342 = vmatprep.subr.mxu0 0.0
  %343 = vmatpush1.msra.mxu0 0.0
  %344 = vmatprep.subr.mxu0 0.0
  %345 = vmatpush1.msra.mxu0 0.0
  %346 = vmatprep.subr.mxu0 0.0
  %347 = vmatpush1.msra.mxu0 0.0
  %348 = vmatprep.subr.mxu0 0.0
  %349 = vmatpush1.msra.mxu0 0.0
  %350 = vmatprep.subr.mxu0 0.0
  %351 = vmatpush1.msra.mxu0 0.0
  %352 = vmatprep.subr.mxu0 0.0
  %353 = vmatpush1.msra.mxu0 0.0
  %354 = vmatprep.subr.mxu0 0.0
  %355 = vmatpush1.msra.mxu0 0.0
  %356 = vmatprep.subr.mxu0 0.0
  %357 = vmatpush1.msra.mxu0 0.0
  %358 = vmatprep.subr.mxu0 0.0
  %359 = vmatpush1.msra.mxu0 0.0
  %360 = vmatprep.subr.mxu0 0.0
  %361 = vmatpush1.msra.mxu0 0.0
  %362 = vmatprep.subr.mxu0 0.0
  %363 = vmatpush1.msra.mxu0 0.0
  %364 = vmatprep.subr.mxu0 0.0
  %365 = vmatpush1.msra.mxu0 0.0
  %366 = vmatprep.mubr.f32.mxu0 0.0
  %367 = vmatmul.mubr.f32.gmra.mrb[0].mxu0 %v33
  %v368 = vpop.f32.mrb[0].mxu0
  %v369 = vadd.f32 0.0, %v368
  %v370 = vpop.f32.mrb[0].mxu0
  %v371 = vadd.f32 0.0, %v370
  %372 = vmatprep.mubr.f32.mxu0 0.0
  %373 = vmatmul.mubr.f32.gmra.mrb[0].mxu0 %v34
  %v374 = vpop.f32.mrb[0].mxu0
  %v375 = vadd.f32 0.0, %v374
  %v376 = vpop.f32.mrb[0].mxu0
  %v377 = vadd.f32 0.0, %v376
  %378 = vmatprep.mubr.f32.mxu0 0.0
  %379 = vmatmul.mubr.f32.gmra.mrb[0].mxu0 %v35
  %v380 = vpop.f32.mrb[0].mxu0
  %v381 = vadd.f32 0.0, %v380
  %v382 = vpop.f32.mrb[0].mxu0
  %v383 = vadd.f32 0.0, %v382
  %384 = vmatprep.mubr.f32.mxu0 0.0
  %385 = vmatmul.mubr.f32.gmra.mrb[0].mxu0 %v36
  %v386 = vpop.f32.mrb[0].mxu0
  %v387 = vadd.f32 0.0, %v386
  %v388 = vpop.f32.mrb[0].mxu0
  %v389 = vadd.f32 0.0, %v388
  %390 = vdwg.mxu0
  %391 = vmatprep.subr.mxu0 %v42
  %392 = vmatpush1.msra.mxu0 %v41
  %393 = vmatprep.subr.mxu0 %v53
  %394 = vmatpush1.msra.mxu0 %v52
  %395 = vmatprep.subr.mxu0 %v64
  %396 = vmatpush1.msra.mxu0 %v63
  %397 = vmatprep.subr.mxu0 %v75
  %398 = vmatpush1.msra.mxu0 %v74
  %399 = vmatprep.subr.mxu0 %v86
  %400 = vmatpush1.msra.mxu0 %v85
  %401 = vmatprep.subr.mxu0 %v97
  %402 = vmatpush1.msra.mxu0 %v96
  %403 = vmatprep.subr.mxu0 %v108
  %404 = vmatpush1.msra.mxu0 %v107
  %405 = vmatprep.subr.mxu0 %v119
  %406 = vmatpush1.msra.mxu0 %v118
  %407 = vmatprep.subr.mxu0 %v130
  %408 = vmatpush1.msra.mxu0 %v129
  %409 = vmatprep.subr.mxu0 %v141
  %410 = vmatpush1.msra.mxu0 %v140
  %411 = vmatprep.subr.mxu0 %v152
  %412 = vmatpush1.msra.mxu0 %v151
  %413 = vmatprep.subr.mxu0 %v163
  %414 = vmatpush1.msra.mxu0 %v162
  %415 = vmatprep.subr.mxu0 %v174
  %416 = vmatpush1.msra.mxu0 %v173
  %417 = vmatprep.subr.mxu0 %v185
  %418 = vmatpush1.msra.mxu0 %v184
  %419 = vmatprep.subr.mxu0 %v196
  %420 = vmatpush1.msra.mxu0 %v195
  %421 = vmatprep.subr.mxu0 %v207
  %422 = vmatpush1.msra.mxu0 %v206
  %423 = vmatprep.subr.mxu0 0.0
  %424 = vmatpush1.msra.mxu0 0.0
  %425 = vmatprep.subr.mxu0 0.0
  %426 = vmatpush1.msra.mxu0 0.0
  %427 = vmatprep.subr.mxu0 0.0
  %428 = vmatpush1.msra.mxu0 0.0
  %429 = vmatprep.subr.mxu0 0.0
  %430 = vmatpush1.msra.mxu0 0.0
  %431 = vmatprep.subr.mxu0 0.0
  %432 = vmatpush1.msra.mxu0 0.0
  %433 = vmatprep.subr.mxu0 0.0
  %434 = vmatpush1.msra.mxu0 0.0
  %435 = vmatprep.subr.mxu0 0.0
  %436 = vmatpush1.msra.mxu0 0.0
  %437 = vmatprep.subr.mxu0 0.0
  %438 = vmatpush1.msra.mxu0 0.0
  %439 = vmatprep.subr.mxu0 0.0
  %440 = vmatpush1.msra.mxu0 0.0
  %441 = vmatprep.subr.mxu0 0.0
  %442 = vmatpush1.msra.mxu0 0.0
  %443 = vmatprep.subr.mxu0 0.0
  %444 = vmatpush1.msra.mxu0 0.0
  %445 = vmatprep.subr.mxu0 0.0
  %446 = vmatpush1.msra.mxu0 0.0
  %447 = vmatprep.subr.mxu0 0.0
  %448 = vmatpush1.msra.mxu0 0.0
  %449 = vmatprep.subr.mxu0 0.0
  %450 = vmatpush1.msra.mxu0 0.0
  %451 = vmatprep.subr.mxu0 0.0
  %452 = vmatpush1.msra.mxu0 0.0
  %453 = vmatprep.subr.mxu0 0.0
  %454 = vmatpush1.msra.mxu0 0.0
  %455 = vmatprep.mubr.f32.mxu0 0.0
  %456 = vmatmul.mubr.f32.gmra.mrb[0].mxu0 %v33
  %v457 = vpop.f32.mrb[0].mxu0
  %v458 = vadd.f32 0.0, %v457
  %v459 = vpop.f32.mrb[0].mxu0
  %v460 = vadd.f32 0.0, %v459
  %461 = vmatprep.mubr.f32.mxu0 0.0
  %462 = vmatmul.mubr.f32.gmra.mrb[0].mxu0 %v34
  %v463 = vpop.f32.mrb[0].mxu0
  %v464 = vadd.f32 0.0, %v463
  %v465 = vpop.f32.mrb[0].mxu0
  %v466 = vadd.f32 0.0, %v465
  %467 = vmatprep.mubr.f32.mxu0 0.0
  %468 = vmatmul.mubr.f32.gmra.mrb[0].mxu0 %v35
  %v469 = vpop.f32.mrb[0].mxu0
  %v470 = vadd.f32 0.0, %v469
  %v471 = vpop.f32.mrb[0].mxu0
  %v472 = vadd.f32 0.0, %v471
  %473 = vmatprep.mubr.f32.mxu0 0.0
  %474 = vmatmul.mubr.f32.gmra.mrb[0].mxu0 %v36
  %v475 = vpop.f32.mrb[0].mxu0
  %v476 = vadd.f32 0.0, %v475
  %v477 = vpop.f32.mrb[0].mxu0
  %v478 = vadd.f32 0.0, %v477
  %479 = vdwg.mxu0
  %480 = vmatprep.subr.mxu0 %v44
  %481 = vmatpush1.msra.mxu0 %v43
  %482 = vmatprep.subr.mxu0 %v55
  %483 = vmatpush1.msra.mxu0 %v54
  %484 = vmatprep.subr.mxu0 %v66
  %485 = vmatpush1.msra.mxu0 %v65
  %486 = vmatprep.subr.mxu0 %v77
  %487 = vmatpush1.msra.mxu0 %v76
  %488 = vmatprep.subr.mxu0 %v88
  %489 = vmatpush1.msra.mxu0 %v87
  %490 = vmatprep.subr.mxu0 %v99
  %491 = vmatpush1.msra.mxu0 %v98
  %492 = vmatprep.subr.mxu0 %v110
  %493 = vmatpush1.msra.mxu0 %v109
  %494 = vmatprep.subr.mxu0 %v121
  %495 = vmatpush1.msra.mxu0 %v120
  %496 = vmatprep.subr.mxu0 %v132
  %497 = vmatpush1.msra.mxu0 %v131
  %498 = vmatprep.subr.mxu0 %v143
  %499 = vmatpush1.msra.mxu0 %v142
  %500 = vmatprep.subr.mxu0 %v154
  %501 = vmatpush1.msra.mxu0 %v153
  %502 = vmatprep.subr.mxu0 %v165
  %503 = vmatpush1.msra.mxu0 %v164
  %504 = vmatprep.subr.mxu0 %v176
  %505 = vmatpush1.msra.mxu0 %v175
  %506 = vmatprep.subr.mxu0 %v187
  %507 = vmatpush1.msra.mxu0 %v186
  %508 = vmatprep.subr.mxu0 %v198
  %509 = vmatpush1.msra.mxu0 %v197
  %510 = vmatprep.subr.mxu0 %v209
  %511 = vmatpush1.msra.mxu0 %v208
  %512 = vmatprep.subr.mxu0 0.0
  %513 = vmatpush1.msra.mxu0 0.0
  %514 = vmatprep.subr.mxu0 0.0
  %515 = vmatpush1.msra.mxu0 0.0
  %516 = vmatprep.subr.mxu0 0.0
  %517 = vmatpush1.msra.mxu0 0.0
  %518 = vmatprep.subr.mxu0 0.0
  %519 = vmatpush1.msra.mxu0 0.0
  %520 = vmatprep.subr.mxu0 0.0
  %521 = vmatpush1.msra.mxu0 0.0
  %522 = vmatprep.subr.mxu0 0.0
  %523 = vmatpush1.msra.mxu0 0.0
  %524 = vmatprep.subr.mxu0 0.0
  %525 = vmatpush1.msra.mxu0 0.0
  %526 = vmatprep.subr.mxu0 0.0
  %527 = vmatpush1.msra.mxu0 0.0
  %528 = vmatprep.subr.mxu0 0.0
  %529 = vmatpush1.msra.mxu0 0.0
  %530 = vmatprep.subr.mxu0 0.0
  %531 = vmatpush1.msra.mxu0 0.0
  %532 = vmatprep.subr.mxu0 0.0
  %533 = vmatpush1.msra.mxu0 0.0
  %534 = vmatprep.subr.mxu0 0.0
  %535 = vmatpush1.msra.mxu0 0.0
  %536 = vmatprep.subr.mxu0 0.0
  %537 = vmatpush1.msra.mxu0 0.0
  %538 = vmatprep.subr.mxu0 0.0
  %539 = vmatpush1.msra.mxu0 0.0
  %540 = vmatprep.subr.mxu0 0.0
  %541 = vmatpush1.msra.mxu0 0.0
  %542 = vmatprep.subr.mxu0 0.0
  %543 = vmatpush1.msra.mxu0 0.0
  %544 = vmatprep.mubr.f32.mxu0 0.0
  %545 = vmatmul.mubr.f32.gmra.mrb[0].mxu0 %v33
  %v546 = vpop.f32.mrb[0].mxu0
  %v547 = vadd.f32 0.0, %v546
  %v548 = vpop.f32.mrb[0].mxu0
  %v549 = vadd.f32 0.0, %v548
  %550 = vmatprep.mubr.f32.mxu0 0.0
  %551 = vmatmul.mubr.f32.gmra.mrb[0].mxu0 %v34
  %v552 = vpop.f32.mrb[0].mxu0
  %v553 = vadd.f32 0.0, %v552
  %v554 = vpop.f32.mrb[0].mxu0
  %v555 = vadd.f32 0.0, %v554
  %556 = vmatprep.mubr.f32.mxu0 0.0
  %557 = vmatmul.mubr.f32.gmra.mrb[0].mxu0 %v35
  %v558 = vpop.f32.mrb[0].mxu0
  %v559 = vadd.f32 0.0, %v558
  %v560 = vpop.f32.mrb[0].mxu0
  %v561 = vadd.f32 0.0, %v560
  %562 = vmatprep.mubr.f32.mxu0 0.0
  %563 = vmatmul.mubr.f32.gmra.mrb[0].mxu0 %v36
  %v564 = vpop.f32.mrb[0].mxu0
  %v565 = vadd.f32 0.0, %v564
  %v566 = vpop.f32.mrb[0].mxu0
  %v567 = vadd.f32 0.0, %v566
  %568 = vdwg.mxu0
  %569 = vmatprep.subr.mxu0 %v46
  %570 = vmatpush1.msra.mxu0 %v45
  %571 = vmatprep.subr.mxu0 %v57
  %572 = vmatpush1.msra.mxu0 %v56
  %573 = vmatprep.subr.mxu0 %v68
  %574 = vmatpush1.msra.mxu0 %v67
  %575 = vmatprep.subr.mxu0 %v79
  %576 = vmatpush1.msra.mxu0 %v78
  %577 = vmatprep.subr.mxu0 %v90
  %578 = vmatpush1.msra.mxu0 %v89
  %579 = vmatprep.subr.mxu0 %v101
  %580 = vmatpush1.msra.mxu0 %v100
  %581 = vmatprep.subr.mxu0 %v112
  %582 = vmatpush1.msra.mxu0 %v111
  %583 = vmatprep.subr.mxu0 %v123
  %584 = vmatpush1.msra.mxu0 %v122
  %585 = vmatprep.subr.mxu0 %v134
  %586 = vmatpush1.msra.mxu0 %v133
  %587 = vmatprep.subr.mxu0 %v145
  %588 = vmatpush1.msra.mxu0 %v144
  %589 = vmatprep.subr.mxu0 %v156
  %590 = vmatpush1.msra.mxu0 %v155
  %591 = vmatprep.subr.mxu0 %v167
  %592 = vmatpush1.msra.mxu0 %v166
  %593 = vmatprep.subr.mxu0 %v178
  %594 = vmatpush1.msra.mxu0 %v177
  %595 = vmatprep.subr.mxu0 %v189
  %596 = vmatpush1.msra.mxu0 %v188
  %597 = vmatprep.subr.mxu0 %v200
  %598 = vmatpush1.msra.mxu0 %v199
  %599 = vmatprep.subr.mxu0 %v211
  %600 = vmatpush1.msra.mxu0 %v210
  %601 = vmatprep.subr.mxu0 0.0
  %602 = vmatpush1.msra.mxu0 0.0
  %603 = vmatprep.subr.mxu0 0.0
  %604 = vmatpush1.msra.mxu0 0.0
  %605 = vmatprep.subr.mxu0 0.0
  %606 = vmatpush1.msra.mxu0 0.0
  %607 = vmatprep.subr.mxu0 0.0
  %608 = vmatpush1.msra.mxu0 0.0
  %609 = vmatprep.subr.mxu0 0.0
  %610 = vmatpush1.msra.mxu0 0.0
  %611 = vmatprep.subr.mxu0 0.0
  %612 = vmatpush1.msra.mxu0 0.0
  %613 = vmatprep.subr.mxu0 0.0
  %614 = vmatpush1.msra.mxu0 0.0
  %615 = vmatprep.subr.mxu0 0.0
  %616 = vmatpush1.msra.mxu0 0.0
  %617 = vmatprep.subr.mxu0 0.0
  %618 = vmatpush1.msra.mxu0 0.0
  %619 = vmatprep.subr.mxu0 0.0
  %620 = vmatpush1.msra.mxu0 0.0
  %621 = vmatprep.subr.mxu0 0.0
  %622 = vmatpush1.msra.mxu0 0.0
  %623 = vmatprep.subr.mxu0 0.0
  %624 = vmatpush1.msra.mxu0 0.0
  %625 = vmatprep.subr.mxu0 0.0
  %626 = vmatpush1.msra.mxu0 0.0
  %627 = vmatprep.subr.mxu0 0.0
  %628 = vmatpush1.msra.mxu0 0.0
  %629 = vmatprep.subr.mxu0 0.0
  %630 = vmatpush1.msra.mxu0 0.0
  %631 = vmatprep.subr.mxu0 0.0
  %632 = vmatpush1.msra.mxu0 0.0
  %633 = vmatprep.mubr.f32.mxu0 0.0
  %634 = vmatmul.mubr.f32.gmra.mrb[0].mxu0 %v33
  %v635 = vpop.f32.mrb[0].mxu0
  %v636 = vadd.f32 0.0, %v635
  %v637 = vpop.f32.mrb[0].mxu0
  %v638 = vadd.f32 0.0, %v637
  %639 = vmatprep.mubr.f32.mxu0 0.0
  %640 = vmatmul.mubr.f32.gmra.mrb[0].mxu0 %v34
  %v641 = vpop.f32.mrb[0].mxu0
  %v642 = vadd.f32 0.0, %v641
  %v643 = vpop.f32.mrb[0].mxu0
  %v644 = vadd.f32 0.0, %v643
  %645 = vmatprep.mubr.f32.mxu0 0.0
  %646 = vmatmul.mubr.f32.gmra.mrb[0].mxu0 %v35
  %v647 = vpop.f32.mrb[0].mxu0
  %v648 = vadd.f32 0.0, %v647
  %v649 = vpop.f32.mrb[0].mxu0
  %v650 = vadd.f32 0.0, %v649
  %651 = vmatprep.mubr.f32.mxu0 0.0
  %652 = vmatmul.mubr.f32.gmra.mrb[0].mxu0 %v36
  %v653 = vpop.f32.mrb[0].mxu0
  %v654 = vadd.f32 0.0, %v653
  %v655 = vpop.f32.mrb[0].mxu0
  %v656 = vadd.f32 0.0, %v655
  %657 = vdwg.mxu0
  %658 = vmatprep.subr.mxu0 0.0
  %659 = vmatpush1.msra.mxu0 %v47
  %660 = vmatprep.subr.mxu0 0.0
  %661 = vmatpush1.msra.mxu0 %v58
  %662 = vmatprep.subr.mxu0 0.0
  %663 = vmatpush1.msra.mxu0 %v69
  %664 = vmatprep.subr.mxu0 0.0
  %665 = vmatpush1.msra.mxu0 %v80
  %666 = vmatprep.subr.mxu0 0.0
  %667 = vmatpush1.msra.mxu0 %v91
  %668 = vmatprep.subr.mxu0 0.0
  %669 = vmatpush1.msra.mxu0 %v102
  %670 = vmatprep.subr.mxu0 0.0
  %671 = vmatpush1.msra.mxu0 %v113
  %672 = vmatprep.subr.mxu0 0.0
  %673 = vmatpush1.msra.mxu0 %v124
  %674 = vmatprep.subr.mxu0 0.0
  %675 = vmatpush1.msra.mxu0 %v135
  %676 = vmatprep.subr.mxu0 0.0
  %677 = vmatpush1.msra.mxu0 %v146
  %678 = vmatprep.subr.mxu0 0.0
  %679 = vmatpush1.msra.mxu0 %v157
  %680 = vmatprep.subr.mxu0 0.0
  %681 = vmatpush1.msra.mxu0 %v168
  %682 = vmatprep.subr.mxu0 0.0
  %683 = vmatpush1.msra.mxu0 %v179
  %684 = vmatprep.subr.mxu0 0.0
  %685 = vmatpush1.msra.mxu0 %v190
  %686 = vmatprep.subr.mxu0 0.0
  %687 = vmatpush1.msra.mxu0 %v201
  %688 = vmatprep.subr.mxu0 0.0
  %689 = vmatpush1.msra.mxu0 %v212
  %690 = vmatprep.subr.mxu0 0.0
  %691 = vmatpush1.msra.mxu0 0.0
  %692 = vmatprep.subr.mxu0 0.0
  %693 = vmatpush1.msra.mxu0 0.0
  %694 = vmatprep.subr.mxu0 0.0
  %695 = vmatpush1.msra.mxu0 0.0
  %696 = vmatprep.subr.mxu0 0.0
  %697 = vmatpush1.msra.mxu0 0.0
  %698 = vmatprep.subr.mxu0 0.0
  %699 = vmatpush1.msra.mxu0 0.0
  %700 = vmatprep.subr.mxu0 0.0
  %701 = vmatpush1.msra.mxu0 0.0
  %702 = vmatprep.subr.mxu0 0.0
  %703 = vmatpush1.msra.mxu0 0.0
  %704 = vmatprep.subr.mxu0 0.0
  %705 = vmatpush1.msra.mxu0 0.0
  %706 = vmatprep.subr.mxu0 0.0
  %707 = vmatpush1.msra.mxu0 0.0
  %708 = vmatprep.subr.mxu0 0.0
  %709 = vmatpush1.msra.mxu0 0.0
  %710 = vmatprep.subr.mxu0 0.0
  %711 = vmatpush1.msra.mxu0 0.0
  %712 = vmatprep.subr.mxu0 0.0
  %713 = vmatpush1.msra.mxu0 0.0
  %714 = vmatprep.subr.mxu0 0.0
  %715 = vmatpush1.msra.mxu0 0.0
  %716 = vmatprep.subr.mxu0 0.0
  %717 = vmatpush1.msra.mxu0 0.0
  %718 = vmatprep.subr.mxu0 0.0
  %719 = vmatpush1.msra.mxu0 0.0
  %720 = vmatprep.subr.mxu0 0.0
  %721 = vmatpush1.msra.mxu0 0.0
  %722 = vmatprep.mubr.f32.mxu0 0.0
  %723 = vmatmul.mubr.f32.gmra.mrb[0].mxu0 %v33
  %v724 = vpop.f32.mrb[0].mxu0
  %v725 = vadd.f32 0.0, %v724
  %v726 = vpop.f32.mrb[0].mxu0
  %727 = vmatprep.mubr.f32.mxu0 0.0
  %728 = vmatmul.mubr.f32.gmra.mrb[0].mxu0 %v34
  %v729 = vpop.f32.mrb[0].mxu0
  %v730 = vadd.f32 0.0, %v729
  %v731 = vpop.f32.mrb[0].mxu0
  %732 = vmatprep.mubr.f32.mxu0 0.0
  %733 = vmatmul.mubr.f32.gmra.mrb[0].mxu0 %v35
  %v734 = vpop.f32.mrb[0].mxu0
  %v735 = vadd.f32 0.0, %v734
  %v736 = vpop.f32.mrb[0].mxu0
  %737 = vmatprep.mubr.f32.mxu0 0.0
  %738 = vmatmul.mubr.f32.gmra.mrb[0].mxu0 %v36
  %v739 = vpop.f32.mrb[0].mxu0
  %v740 = vadd.f32 0.0, %v739
  %v741 = vpop.f32.mrb[0].mxu0
  %742 = vdwg.mxu0
  %743 = vst [vmem:[#allocation2] sm:$0xff] %v280
  %744 = vst [vmem:[#allocation2 + $0x8] sm:$0xff] %v282
  %745 = vst [vmem:[#allocation2 + $0x10] sm:$0xff] %v369
  %746 = vst [vmem:[#allocation2 + $0x18] sm:$0xff] %v371
  %747 = vst [vmem:[#allocation2 + $0x20] sm:$0xff] %v458
  %748 = vst [vmem:[#allocation2 + $0x28] sm:$0xff] %v460
  %749 = vst [vmem:[#allocation2 + $0x30] sm:$0xff] %v547
  %750 = vst [vmem:[#allocation2 + $0x38] sm:$0xff] %v549
  %751 = vst [vmem:[#allocation2 + $0x40] sm:$0xff] %v636
  %752 = vst [vmem:[#allocation2 + $0x48] sm:$0xff] %v638
  %753 = vst [vmem:[#allocation2 + $0x50] sm:$0xff] %v725
  %754 = vst [vmem:[#allocation2 + $0x58] sm:$0xff] %v286
  %755 = vst [vmem:[#allocation2 + $0x60] sm:$0xff] %v288
  %756 = vst [vmem:[#allocation2 + $0x68] sm:$0xff] %v375
  %757 = vst [vmem:[#allocation2 + $0x70] sm:$0xff] %v377
  %758 = vst [vmem:[#allocation2 + $0x78] sm:$0xff] %v464
  %759 = vst [vmem:[#allocation2 + $0x80] sm:$0xff] %v466
  %760 = vst [vmem:[#allocation2 + $0x88] sm:$0xff] %v553
  %761 = vst [vmem:[#allocation2 + $0x90] sm:$0xff] %v555
  %762 = vst [vmem:[#allocation2 + $0x98] sm:$0xff] %v642
  %763 = vst [vmem:[#allocation2 + $0xa0] sm:$0xff] %v644
  %764 = vst [vmem:[#allocation2 + $0xa8] sm:$0xff] %v730
  %765 = vst [vmem:[#allocation2 + $0xb0] sm:$0xff] %v292
  %766 = vst [vmem:[#allocation2 + $0xb8] sm:$0xff] %v294
  %767 = vst [vmem:[#allocation2 + $0xc0] sm:$0xff] %v381
  %768 = vst [vmem:[#allocation2 + $0xc8] sm:$0xff] %v383
  %769 = vst [vmem:[#allocation2 + $0xd0] sm:$0xff] %v470
  %770 = vst [vmem:[#allocation2 + $0xd8] sm:$0xff] %v472
  %771 = vst [vmem:[#allocation2 + $0xe0] sm:$0xff] %v559
  %772 = vst [vmem:[#allocation2 + $0xe8] sm:$0xff] %v561
  %773 = vst [vmem:[#allocation2 + $0xf0] sm:$0xff] %v648
  %774 = vst [vmem:[#allocation2 + $0xf8] sm:$0xff] %v650
  %775 = vst [vmem:[#allocation2 + $0x100] sm:$0xff] %v735
  %776 = vst [vmem:[#allocation2 + $0x108] sm:$0xff] %v298
  %777 = vst [vmem:[#allocation2 + $0x110] sm:$0xff] %v300
  %778 = vst [vmem:[#allocation2 + $0x118] sm:$0xff] %v387
  %779 = vst [vmem:[#allocation2 + $0x120] sm:$0xff] %v389
  %780 = vst [vmem:[#allocation2 + $0x128] sm:$0xff] %v476
  %781 = vst [vmem:[#allocation2 + $0x130] sm:$0xff] %v478
  %782 = vst [vmem:[#allocation2 + $0x138] sm:$0xff] %v565
  %783 = vst [vmem:[#allocation2 + $0x140] sm:$0xff] %v567
  %784 = vst [vmem:[#allocation2 + $0x148] sm:$0xff] %v654
  %785 = vst [vmem:[#allocation2 + $0x150] sm:$0xff] %v656
  %786 = vst [vmem:[#allocation2 + $0x158] sm:$0xff] %v740
  %v787 = vld [vmem:[#allocation2] sm:$0xff]
  %v788 = vld [vmem:[#allocation2 + $0x58] sm:$0xff]
  %v789 = vld [vmem:[#allocation2 + $0xb0] sm:$0xff]
  %v790 = vld [vmem:[#allocation2 + $0x108] sm:$0xff]
  %791 = vst [vmem:[#allocation3] sm:$0xff] %v787
  %792 = vst [vmem:[#allocation3 + $0x8] sm:$0xff] %v788
  %793 = vst [vmem:[#allocation3 + $0x10] sm:$0xff] %v789
  %794 = vst [vmem:[#allocation3 + $0x18] sm:$0xff] %v790
  %v795 = vld [vmem:[#allocation2 + $0x8] sm:$0xff]
  %v796 = vld [vmem:[#allocation2 + $0x60] sm:$0xff]
  %v797 = vld [vmem:[#allocation2 + $0xb8] sm:$0xff]
  %v798 = vld [vmem:[#allocation2 + $0x110] sm:$0xff]
  %799 = vst [vmem:[#allocation3 + $0x20] sm:$0xff] %v795
  %800 = vst [vmem:[#allocation3 + $0x28] sm:$0xff] %v796
  %801 = vst [vmem:[#allocation3 + $0x30] sm:$0xff] %v797
  %802 = vst [vmem:[#allocation3 + $0x38] sm:$0xff] %v798
  %v803 = vld [vmem:[#allocation2 + $0x10] sm:$0xff]
  %v804 = vld [vmem:[#allocation2 + $0x68] sm:$0xff]
  %v805 = vld [vmem:[#allocation2 + $0xc0] sm:$0xff]
  %v806 = vld [vmem:[#allocation2 + $0x118] sm:$0xff]
  %807 = vst [vmem:[#allocation3 + $0x40] sm:$0xff] %v803
  %808 = vst [vmem:[#allocation3 + $0x48] sm:$0xff] %v804
  %809 = vst [vmem:[#allocation3 + $0x50] sm:$0xff] %v805
  %810 = vst [vmem:[#allocation3 + $0x58] sm:$0xff] %v806
  %v811 = vld [vmem:[#allocation2 + $0x18] sm:$0xff]
  %v812 = vld [vmem:[#allocation2 + $0x70] sm:$0xff]
  %v813 = vld [vmem:[#allocation2 + $0xc8] sm:$0xff]
  %v814 = vld [vmem:[#allocation2 + $0x120] sm:$0xff]
  %815 = vst [vmem:[#allocation3 + $0x60] sm:$0xff] %v811
  %816 = vst [vmem:[#allocation3 + $0x68] sm:$0xff] %v812
  %817 = vst [vmem:[#allocation3 + $0x70] sm:$0xff] %v813
  %818 = vst [vmem:[#allocation3 + $0x78] sm:$0xff] %v814
  %v819 = vld [vmem:[#allocation2 + $0x20] sm:$0xff]
  %v820 = vld [vmem:[#allocation2 + $0x78] sm:$0xff]
  %v821 = vld [vmem:[#allocation2 + $0xd0] sm:$0xff]
  %v822 = vld [vmem:[#allocation2 + $0x128] sm:$0xff]
  %823 = vst [vmem:[#allocation3 + $0x80] sm:$0xff] %v819
  %824 = vst [vmem:[#allocation3 + $0x88] sm:$0xff] %v820
  %825 = vst [vmem:[#allocation3 + $0x90] sm:$0xff] %v821
  %826 = vst [vmem:[#allocation3 + $0x98] sm:$0xff] %v822
  %v827 = vld [vmem:[#allocation2 + $0x28] sm:$0xff]
  %v828 = vld [vmem:[#allocation2 + $0x80] sm:$0xff]
  %v829 = vld [vmem:[#allocation2 + $0xd8] sm:$0xff]
  %v830 = vld [vmem:[#allocation2 + $0x130] sm:$0xff]
  %831 = vst [vmem:[#allocation3 + $0xa0] sm:$0xff] %v827
  %832 = vst [vmem:[#allocation3 + $0xa8] sm:$0xff] %v828
  %833 = vst [vmem:[#allocation3 + $0xb0] sm:$0xff] %v829
  %834 = vst [vmem:[#allocation3 + $0xb8] sm:$0xff] %v830
  %v835 = vld [vmem:[#allocation2 + $0x30] sm:$0xff]
  %v836 = vld [vmem:[#allocation2 + $0x88] sm:$0xff]
  %v837 = vld [vmem:[#allocation2 + $0xe0] sm:$0xff]
  %v838 = vld [vmem:[#allocation2 + $0x138] sm:$0xff]
  %839 = vst [vmem:[#allocation3 + $0xc0] sm:$0xff] %v835
  %840 = vst [vmem:[#allocation3 + $0xc8] sm:$0xff] %v836
  %841 = vst [vmem:[#allocation3 + $0xd0] sm:$0xff] %v837
  %842 = vst [vmem:[#allocation3 + $0xd8] sm:$0xff] %v838
  %v843 = vld [vmem:[#allocation2 + $0x38] sm:$0xff]
  %v844 = vld [vmem:[#allocation2 + $0x90] sm:$0xff]
  %v845 = vld [vmem:[#allocation2 + $0xe8] sm:$0xff]
  %v846 = vld [vmem:[#allocation2 + $0x140] sm:$0xff]
  %847 = vst [vmem:[#allocation3 + $0xe0] sm:$0xff] %v843
  %848 = vst [vmem:[#allocation3 + $0xe8] sm:$0xff] %v844
  %849 = vst [vmem:[#allocation3 + $0xf0] sm:$0xff] %v845
  %850 = vst [vmem:[#allocation3 + $0xf8] sm:$0xff] %v846
  %v851 = vld [vmem:[#allocation2 + $0x40] sm:$0xff]
  %v852 = vld [vmem:[#allocation2 + $0x98] sm:$0xff]
  %v853 = vld [vmem:[#allocation2 + $0xf0] sm:$0xff]
  %v854 = vld [vmem:[#allocation2 + $0x148] sm:$0xff]
  %855 = vst [vmem:[#allocation3 + $0x100] sm:$0xff] %v851
  %856 = vst [vmem:[#allocation3 + $0x108] sm:$0xff] %v852
  %857 = vst [vmem:[#allocation3 + $0x110] sm:$0xff] %v853
  %858 = vst [vmem:[#allocation3 + $0x118] sm:$0xff] %v854
  %v859 = vld [vmem:[#allocation2 + $0x48] sm:$0xff]
  %v860 = vld [vmem:[#allocation2 + $0xa0] sm:$0xff]
  %v861 = vld [vmem:[#allocation2 + $0xf8] sm:$0xff]
  %v862 = vld [vmem:[#allocation2 + $0x150] sm:$0xff]
  %863 = vst [vmem:[#allocation3 + $0x120] sm:$0xff] %v859
  %864 = vst [vmem:[#allocation3 + $0x128] sm:$0xff] %v860
  %865 = vst [vmem:[#allocation3 + $0x130] sm:$0xff] %v861
  %866 = vst [vmem:[#allocation3 + $0x138] sm:$0xff] %v862
  %v867 = vld [vmem:[#allocation2 + $0x50] sm:$0xff]
  %v868 = vld [vmem:[#allocation2 + $0xa8] sm:$0xff]
  %v869 = vld [vmem:[#allocation2 + $0x100] sm:$0xff]
  %v870 = vld [vmem:[#allocation2 + $0x158] sm:$0xff]
  %871 = vst [vmem:[#allocation3 + $0x140] sm:$0xff] %v867
  %872 = vst [vmem:[#allocation3 + $0x148] sm:$0xff] %v868
  %873 = vst [vmem:[#allocation3 + $0x150] sm:$0xff] %v869
  %874 = vst [vmem:[#allocation3 + $0x158] sm:$0xff] %v870
  %v875 = vld [vmem:[%s0] sm:$0xff]
  %v876 = vld [vmem:[%s0 + $0x8] sm:$0xff]
  %v877 = vld [vmem:[%s0 + $0x10] sm:$0xff]
  %v878 = vld [vmem:[%s0 + $0x18] sm:$0xff]
  %v879 = vld [vmem:[%s0 + $0x20] sm:$0xff]
  %v880 = vld [vmem:[%s0 + $0x28] sm:$0xff]
  %v881 = vld [vmem:[%s0 + $0x30] sm:$0xff]
  %v882 = vld [vmem:[%s0 + $0x38] sm:$0xff]
  %v883 = vld [vmem:[%s0 + $0x40] sm:$0xff]
  %v884 = vld [vmem:[%s0 + $0x48] sm:$0xff]
  %v885 = vld [vmem:[%s0 + $0x50] sm:$0xff]
  %v886 = vld [vmem:[%s0 + $0x58] sm:$0xff]
  %v887 = vld [vmem:[#allocation3] sm:$0xff]
  %v888 = vld [vmem:[#allocation3 + $0x8] sm:$0xff]
  %v889 = vld [vmem:[#allocation3 + $0x10] sm:$0xff]
  %v890 = vld [vmem:[#allocation3 + $0x18] sm:$0xff]
  %v891 = vld [vmem:[#allocation3 + $0x20] sm:$0xff]
  %v892 = vld [vmem:[#allocation3 + $0x28] sm:$0xff]
  %v893 = vld [vmem:[#allocation3 + $0x30] sm:$0xff]
  %v894 = vld [vmem:[#allocation3 + $0x38] sm:$0xff]
  %v895 = vld [vmem:[#allocation3 + $0x40] sm:$0xff]
  %v896 = vld [vmem:[#allocation3 + $0x48] sm:$0xff]
  %v897 = vld [vmem:[#allocation3 + $0x50] sm:$0xff]
  %v898 = vld [vmem:[#allocation3 + $0x58] sm:$0xff]
  %v899 = vld [vmem:[#allocation3 + $0x60] sm:$0xff]
  %v900 = vld [vmem:[#allocation3 + $0x68] sm:$0xff]
  %v901 = vld [vmem:[#allocation3 + $0x70] sm:$0xff]
  %v902 = vld [vmem:[#allocation3 + $0x78] sm:$0xff]
  %v903 = vld [vmem:[#allocation3 + $0x80] sm:$0xff]
  %v904 = vld [vmem:[#allocation3 + $0x88] sm:$0xff]
  %v905 = vld [vmem:[#allocation3 + $0x90] sm:$0xff]
  %v906 = vld [vmem:[#allocation3 + $0x98] sm:$0xff]
  %v907 = vld [vmem:[#allocation3 + $0xa0] sm:$0xff]
  %v908 = vld [vmem:[#allocation3 + $0xa8] sm:$0xff]
  %v909 = vld [vmem:[#allocation3 + $0xb0] sm:$0xff]
  %v910 = vld [vmem:[#allocation3 + $0xb8] sm:$0xff]
  %v911 = vld [vmem:[#allocation3 + $0xc0] sm:$0xff]
  %v912 = vld [vmem:[#allocation3 + $0xc8] sm:$0xff]
  %v913 = vld [vmem:[#allocation3 + $0xd0] sm:$0xff]
  %v914 = vld [vmem:[#allocation3 + $0xd8] sm:$0xff]
  %v915 = vld [vmem:[#allocation3 + $0xe0] sm:$0xff]
  %v916 = vld [vmem:[#allocation3 + $0xe8] sm:$0xff]
  %v917 = vld [vmem:[#allocation3 + $0xf0] sm:$0xff]
  %v918 = vld [vmem:[#allocation3 + $0xf8] sm:$0xff]
  %v919 = vld [vmem:[#allocation3 + $0x100] sm:$0xff]
  %v920 = vld [vmem:[#allocation3 + $0x108] sm:$0xff]
  %v921 = vld [vmem:[#allocation3 + $0x110] sm:$0xff]
  %v922 = vld [vmem:[#allocation3 + $0x118] sm:$0xff]
  %v923 = vld [vmem:[#allocation3 + $0x120] sm:$0xff]
  %v924 = vld [vmem:[#allocation3 + $0x128] sm:$0xff]
  %v925 = vld [vmem:[#allocation3 + $0x130] sm:$0xff]
  %v926 = vld [vmem:[#allocation3 + $0x138] sm:$0xff]
  %v927 = vld [vmem:[#allocation3 + $0x140] sm:$0xff]
  %v928 = vld [vmem:[#allocation3 + $0x148] sm:$0xff]
  %v929 = vld [vmem:[#allocation3 + $0x150] sm:$0xff]
  %v930 = vld [vmem:[#allocation3 + $0x158] sm:$0xff]
  %v931 = vld [vmem:[#allocation3 + $0x160] sm:$0xff]
  %v932 = vld [vmem:[#allocation3 + $0x168] sm:$0xff]
  %v933 = vld [vmem:[#allocation3 + $0x170] sm:$0xff]
  %v934 = vld [vmem:[#allocation3 + $0x178] sm:$0xff]
  %v935 = vld [vmem:[%s3] sm:$0x1]
  %v937 = vlaneseq
  %v938 = vshrl.u32 %v937, 7
  %v939 = vsub.s32 0, %v938
  %v940 = vrot.slane %v935, %v939
  %942 = vmatprep.subr.mxu0 0.0
  %943 = vmatpush1.msra.mxu0 %v887
  %944 = vmatprep.subr.mxu0 0.0
  %945 = vmatpush1.msra.mxu0 %v888
  %946 = vmatprep.subr.mxu0 0.0
  %947 = vmatpush1.msra.mxu0 %v889
  %948 = vmatprep.subr.mxu0 0.0
  %949 = vmatpush1.msra.mxu0 %v890
  %950 = vmatprep.subr.mxu0 0.0
  %951 = vmatpush1.msra.mxu0 %v891
  %952 = vmatprep.subr.mxu0 0.0
  %953 = vmatpush1.msra.mxu0 %v892
  %954 = vmatprep.subr.mxu0 0.0
  %955 = vmatpush1.msra.mxu0 %v893
  %956 = vmatprep.subr.mxu0 0.0
  %957 = vmatpush1.msra.mxu0 %v894
  %958 = vmatprep.subr.mxu0 0.0
  %959 = vmatpush1.msra.mxu0 %v895
  %960 = vmatprep.subr.mxu0 0.0
  %961 = vmatpush1.msra.mxu0 %v896
  %962 = vmatprep.subr.mxu0 0.0
  %963 = vmatpush1.msra.mxu0 %v897
  %964 = vmatprep.subr.mxu0 0.0
  %965 = vmatpush1.msra.mxu0 %v898
  %966 = vmatprep.subr.mxu0 0.0
  %967 = vmatpush1.msra.mxu0 %v899
  %968 = vmatprep.subr.mxu0 0.0
  %969 = vmatpush1.msra.mxu0 %v900
  %970 = vmatprep.subr.mxu0 0.0
  %971 = vmatpush1.msra.mxu0 %v901
  %972 = vmatprep.subr.mxu0 0.0
  %973 = vmatpush1.msra.mxu0 %v902
  %974 = vmatprep.subr.mxu0 0.0
  %975 = vmatpush1.msra.mxu0 %v903
  %976 = vmatprep.subr.mxu0 0.0
  %977 = vmatpush1.msra.mxu0 %v904
  %978 = vmatprep.subr.mxu0 0.0
  %979 = vmatpush1.msra.mxu0 %v905
  %980 = vmatprep.subr.mxu0 0.0
  %981 = vmatpush1.msra.mxu0 %v906
  %982 = vmatprep.subr.mxu0 0.0
  %983 = vmatpush1.msra.mxu0 %v907
  %984 = vmatprep.subr.mxu0 0.0
  %985 = vmatpush1.msra.mxu0 %v908
  %986 = vmatprep.subr.mxu0 0.0
  %987 = vmatpush1.msra.mxu0 %v909
  %988 = vmatprep.subr.mxu0 0.0
  %989 = vmatpush1.msra.mxu0 %v910
  %990 = vmatprep.subr.mxu0 0.0
  %991 = vmatpush1.msra.mxu0 %v911
  %992 = vmatprep.subr.mxu0 0.0
  %993 = vmatpush1.msra.mxu0 %v912
  %994 = vmatprep.subr.mxu0 0.0
  %995 = vmatpush1.msra.mxu0 %v913
  %996 = vmatprep.subr.mxu0 0.0
  %997 = vmatpush1.msra.mxu0 %v914
  %998 = vmatprep.subr.mxu0 0.0
  %999 = vmatpush1.msra.mxu0 %v915
  %1000 = vmatprep.subr.mxu0 0.0
  %1001 = vmatpush1.msra.mxu0 %v916
  %1002 = vmatprep.subr.mxu0 0.0
  %1003 = vmatpush1.msra.mxu0 %v917
  %1004 = vmatprep.subr.mxu0 0.0
  %1005 = vmatpush1.msra.mxu0 %v918
  %1006 = vmatprep.mubr.f32.mxu0 %v876
  %1007 = vmatmul.mubr.f32.gmra.mrb[0].mxu0 %v875
  %v1008 = vpop.f32.mrb[0].mxu0
  %v1009 = vadd.f32 %v940, %v1008
  %v1010 = vpop.f32.mrb[0].mxu0
  %1011 = vmatprep.mubr.f32.mxu0 %v879
  %1012 = vmatmul.mubr.f32.gmra.mrb[0].mxu0 %v878
  %v1013 = vpop.f32.mrb[0].mxu0
  %v1014 = vadd.f32 %v940, %v1013
  %v1015 = vpop.f32.mrb[0].mxu0
  %1016 = vmatprep.mubr.f32.mxu0 %v882
  %1017 = vmatmul.mubr.f32.gmra.mrb[0].mxu0 %v881
  %v1018 = vpop.f32.mrb[0].mxu0
  %v1019 = vadd.f32 %v940, %v1018
  %v1020 = vpop.f32.mrb[0].mxu0
  %1021 = vmatprep.mubr.f32.mxu0 %v885
  %1022 = vmatmul.mubr.f32.gmra.mrb[0].mxu0 %v884
  %v1023 = vpop.f32.mrb[0].mxu0
  %v1024 = vadd.f32 %v940, %v1023
  %v1025 = vpop.f32.mrb[0].mxu0
  %1026 = vdwg.mxu0
  %1027 = vmatprep.subr.mxu0 0.0
  %1028 = vmatpush1.msra.mxu0 %v919
  %1029 = vmatprep.subr.mxu0 0.0
  %1030 = vmatpush1.msra.mxu0 %v920
  %1031 = vmatprep.subr.mxu0 0.0
  %1032 = vmatpush1.msra.mxu0 %v921
  %1033 = vmatprep.subr.mxu0 0.0
  %1034 = vmatpush1.msra.mxu0 %v922
  %1035 = vmatprep.subr.mxu0 0.0
  %1036 = vmatpush1.msra.mxu0 %v923
  %1037 = vmatprep.subr.mxu0 0.0
  %1038 = vmatpush1.msra.mxu0 %v924
  %1039 = vmatprep.subr.mxu0 0.0
  %1040 = vmatpush1.msra.mxu0 %v925
  %1041 = vmatprep.subr.mxu0 0.0
  %1042 = vmatpush1.msra.mxu0 %v926
  %1043 = vmatprep.subr.mxu0 0.0
  %1044 = vmatpush1.msra.mxu0 %v927
  %1045 = vmatprep.subr.mxu0 0.0
  %1046 = vmatpush1.msra.mxu0 %v928
  %1047 = vmatprep.subr.mxu0 0.0
  %1048 = vmatpush1.msra.mxu0 %v929
  %1049 = vmatprep.subr.mxu0 0.0
  %1050 = vmatpush1.msra.mxu0 %v930
  %1051 = vmatprep.subr.mxu0 0.0
  %1052 = vmatpush1.msra.mxu0 %v931
  %1053 = vmatprep.subr.mxu0 0.0
  %1054 = vmatpush1.msra.mxu0 %v932
  %1055 = vmatprep.subr.mxu0 0.0
  %1056 = vmatpush1.msra.mxu0 %v933
  %1057 = vmatprep.subr.mxu0 0.0
  %1058 = vmatpush1.msra.mxu0 %v934
  %1059 = vmatprep.subr.mxu0 0.0
  %1060 = vmatpush1.msra.mxu0 0.0
  %1061 = vmatprep.subr.mxu0 0.0
  %1062 = vmatpush1.msra.mxu0 0.0
  %1063 = vmatprep.subr.mxu0 0.0
  %1064 = vmatpush1.msra.mxu0 0.0
  %1065 = vmatprep.subr.mxu0 0.0
  %1066 = vmatpush1.msra.mxu0 0.0
  %1067 = vmatprep.subr.mxu0 0.0
  %1068 = vmatpush1.msra.mxu0 0.0
  %1069 = vmatprep.subr.mxu0 0.0
  %1070 = vmatpush1.msra.mxu0 0.0
  %1071 = vmatprep.subr.mxu0 0.0
  %1072 = vmatpush1.msra.mxu0 0.0
  %1073 = vmatprep.subr.mxu0 0.0
  %1074 = vmatpush1.msra.mxu0 0.0
  %1075 = vmatprep.subr.mxu0 0.0
  %1076 = vmatpush1.msra.mxu0 0.0
  %1077 = vmatprep.subr.mxu0 0.0
  %1078 = vmatpush1.msra.mxu0 0.0
  %1079 = vmatprep.subr.mxu0 0.0
  %1080 = vmatpush1.msra.mxu0 0.0
  %1081 = vmatprep.subr.mxu0 0.0
  %1082 = vmatpush1.msra.mxu0 0.0
  %1083 = vmatprep.subr.mxu0 0.0
  %1084 = vmatpush1.msra.mxu0 0.0
  %1085 = vmatprep.subr.mxu0 0.0
  %1086 = vmatpush1.msra.mxu0 0.0
  %1087 = vmatprep.subr.mxu0 0.0
  %1088 = vmatpush1.msra.mxu0 0.0
  %1089 = vmatprep.subr.mxu0 0.0
  %1090 = vmatpush1.msra.mxu0 0.0
  %1091 = vmatprep.mubr.f32.mxu0 0.0
  %1092 = vmatmul.mubr.f32.gmra.mrb[0].mxu0 %v877
  %v1093 = vpop.f32.mrb[0].mxu0
  %v1094 = vadd.f32 %v1009, %v1093
  %v1095 = vpop.f32.mrb[0].mxu0
  %1096 = vmatprep.mubr.f32.mxu0 0.0
  %1097 = vmatmul.mubr.f32.gmra.mrb[0].mxu0 %v880
  %v1098 = vpop.f32.mrb[0].mxu0
  %v1099 = vadd.f32 %v1014, %v1098
  %v1100 = vpop.f32.mrb[0].mxu0
  %1101 = vmatprep.mubr.f32.mxu0 0.0
  %1102 = vmatmul.mubr.f32.gmra.mrb[0].mxu0 %v883
  %v1103 = vpop.f32.mrb[0].mxu0
  %v1104 = vadd.f32 %v1019, %v1103
  %v1105 = vpop.f32.mrb[0].mxu0
  %1106 = vmatprep.mubr.f32.mxu0 0.0
  %1107 = vmatmul.mubr.f32.gmra.mrb[0].mxu0 %v886
  %v1108 = vpop.f32.mrb[0].mxu0
  %v1109 = vadd.f32 %v1024, %v1108
  %v1110 = vpop.f32.mrb[0].mxu0
  %1111 = vdwg.mxu0
  %v1112 = vmax.f32 %v1094, 0.0
  %v1113 = vmax.f32 %v1099, 0.0
  %v1114 = vmax.f32 %v1104, 0.0
  %v1115 = vmax.f32 %v1109, 0.0
  %v1116 = vld [vmem:[%s4] sm:$0xff]
  %v1117 = vld [vmem:[%s4 + $0x8] sm:$0xff]
  %v1118 = vld [vmem:[%s4 + $0x10] sm:$0xff]
  %v1119 = vld [vmem:[%s4 + $0x18] sm:$0xff]
  %v1120 = vld [vmem:[%s4 + $0x20] sm:$0xff]
  %v1121 = vld [vmem:[%s4 + $0x28] sm:$0xff]
  %v1122 = vld [vmem:[%s4 + $0x30] sm:$0xff]
  %v1123 = vld [vmem:[%s4 + $0x38] sm:$0xff]
  %v1124 = vld [vmem:[%s4 + $0x40] sm:$0xff]
  %v1125 = vld [vmem:[%s4 + $0x48] sm:$0xff]
  %v1126 = vld [vmem:[%s4 + $0x50] sm:$0xff]
  %v1127 = vld [vmem:[%s4 + $0x58] sm:$0xff]
  %v1128 = vld [vmem:[%s4 + $0x60] sm:$0xff]
  %v1129 = vld [vmem:[%s4 + $0x68] sm:$0xff]
  %v1130 = vld [vmem:[%s4 + $0x70] sm:$0xff]
  %v1131 = vld [vmem:[%s4 + $0x78] sm:$0xff]
  %v1132 = vld [vmem:[%s4 + $0x80] sm:$0xff]
  %v1133 = vld [vmem:[%s4 + $0x88] sm:$0xff]
  %v1134 = vld [vmem:[%s4 + $0x90] sm:$0xff]
  %v1135 = vld [vmem:[%s4 + $0x98] sm:$0xff]
  %v1136 = vld [vmem:[%s4 + $0xa0] sm:$0xff]
  %v1137 = vld [vmem:[%s4 + $0xa8] sm:$0xff]
  %v1138 = vld [vmem:[%s4 + $0xb0] sm:$0xff]
  %v1139 = vld [vmem:[%s4 + $0xb8] sm:$0xff]
  %v1140 = vld [vmem:[%s4 + $0xc0] sm:$0xff]
  %v1141 = vld [vmem:[%s4 + $0xc8] sm:$0xff]
  %v1142 = vld [vmem:[%s4 + $0xd0] sm:$0xff]
  %v1143 = vld [vmem:[%s4 + $0xd8] sm:$0xff]
  %v1144 = vld [vmem:[%s4 + $0xe0] sm:$0xff]
  %v1145 = vld [vmem:[%s4 + $0xe8] sm:$0xff]
  %v1146 = vld [vmem:[%s4 + $0xf0] sm:$0xff]
  %v1147 = vld [vmem:[%s4 + $0xf8] sm:$0xff]
  %v1148 = vld [vmem:[%s4 + $0x100] sm:$0xff]
  %v1149 = vld [vmem:[%s4 + $0x108] sm:$0xff]
  %v1150 = vld [vmem:[%s4 + $0x110] sm:$0xff]
  %v1151 = vld [vmem:[%s4 + $0x118] sm:$0xff]
  %v1152 = vld [vmem:[%s4 + $0x120] sm:$0xff]
  %v1153 = vld [vmem:[%s4 + $0x128] sm:$0xff]
  %v1154 = vld [vmem:[%s4 + $0x130] sm:$0xff]
  %v1155 = vld [vmem:[%s4 + $0x138] sm:$0xff]
  %v1156 = vld [vmem:[%s4 + $0x140] sm:$0xff]
  %v1157 = vld [vmem:[%s4 + $0x148] sm:$0xff]
  %v1158 = vld [vmem:[%s4 + $0x150] sm:$0xff]
  %v1159 = vld [vmem:[%s4 + $0x158] sm:$0xff]
  %v1160 = vld [vmem:[%s4 + $0x160] sm:$0xff]
  %v1161 = vld [vmem:[%s4 + $0x168] sm:$0xff]
  %v1162 = vld [vmem:[%s4 + $0x170] sm:$0xff]
  %v1163 = vld [vmem:[%s4 + $0x178] sm:$0xff]
  %v1164 = vld [vmem:[%s4 + $0x180] sm:$0xff]
  %v1165 = vld [vmem:[%s4 + $0x188] sm:$0xff]
  %v1166 = vld [vmem:[%s4 + $0x190] sm:$0xff]
  %v1167 = vld [vmem:[%s4 + $0x198] sm:$0xff]
  %v1168 = vld [vmem:[%s4 + $0x1a0] sm:$0xff]
  %v1169 = vld [vmem:[%s4 + $0x1a8] sm:$0xff]
  %v1170 = vld [vmem:[%s4 + $0x1b0] sm:$0xff]
  %v1171 = vld [vmem:[%s4 + $0x1b8] sm:$0xff]
  %v1172 = vld [vmem:[%s4 + $0x1c0] sm:$0xff]
  %v1173 = vld [vmem:[%s4 + $0x1c8] sm:$0xff]
  %v1174 = vld [vmem:[%s4 + $0x1d0] sm:$0xff]
  %v1175 = vld [vmem:[%s4 + $0x1d8] sm:$0xff]
  %v1176 = vld [vmem:[%s4 + $0x1e0] sm:$0xff]
  %v1177 = vld [vmem:[%s4 + $0x1e8] sm:$0xff]
  %v1178 = vld [vmem:[%s4 + $0x1f0] sm:$0xff]
  %v1179 = vld [vmem:[%s4 + $0x1f8] sm:$0xff]
  %v1180 = vld [vmem:[%s4 + $0x200] sm:$0xff]
  %v1181 = vld [vmem:[%s4 + $0x208] sm:$0xff]
  %v1182 = vld [vmem:[%s4 + $0x210] sm:$0xff]
  %v1183 = vld [vmem:[%s4 + $0x218] sm:$0xff]
  %v1184 = vld [vmem:[%s4 + $0x220] sm:$0xff]
  %v1185 = vld [vmem:[%s4 + $0x228] sm:$0xff]
  %v1186 = vld [vmem:[%s4 + $0x230] sm:$0xff]
  %v1187 = vld [vmem:[%s4 + $0x238] sm:$0xff]
  %v1188 = vld [vmem:[%s4 + $0x240] sm:$0xff]
  %v1189 = vld [vmem:[%s4 + $0x248] sm:$0xff]
  %v1190 = vld [vmem:[%s4 + $0x250] sm:$0xff]
  %v1191 = vld [vmem:[%s4 + $0x258] sm:$0xff]
  %v1192 = vld [vmem:[%s4 + $0x260] sm:$0xff]
  %v1193 = vld [vmem:[%s4 + $0x268] sm:$0xff]
  %v1194 = vld [vmem:[%s4 + $0x270] sm:$0xff]
  %v1195 = vld [vmem:[%s4 + $0x278] sm:$0xff]
  %v1196 = vld [vmem:[%s4 + $0x280] sm:$0xff]
  %v1197 = vld [vmem:[%s4 + $0x288] sm:$0xff]
  %v1198 = vld [vmem:[%s4 + $0x290] sm:$0xff]
  %v1199 = vld [vmem:[%s4 + $0x298] sm:$0xff]
  %v1200 = vld [vmem:[%s4 + $0x2a0] sm:$0xff]
  %v1201 = vld [vmem:[%s4 + $0x2a8] sm:$0xff]
  %v1202 = vld [vmem:[%s4 + $0x2b0] sm:$0xff]
  %v1203 = vld [vmem:[%s4 + $0x2b8] sm:$0xff]
  %v1204 = vld [vmem:[%s4 + $0x2c0] sm:$0xff]
  %v1205 = vld [vmem:[%s4 + $0x2c8] sm:$0xff]
  %v1206 = vld [vmem:[%s4 + $0x2d0] sm:$0xff]
  %v1207 = vld [vmem:[%s4 + $0x2d8] sm:$0xff]
  %v1208 = vld [vmem:[%s4 + $0x2e0] sm:$0xff]
  %v1209 = vld [vmem:[%s4 + $0x2e8] sm:$0xff]
  %v1210 = vld [vmem:[%s4 + $0x2f0] sm:$0xff]
  %v1211 = vld [vmem:[%s4 + $0x2f8] sm:$0xff]
  %v1212 = vld [vmem:[%s4 + $0x300] sm:$0xff]
  %v1213 = vld [vmem:[%s4 + $0x308] sm:$0xff]
  %v1214 = vld [vmem:[%s4 + $0x310] sm:$0xff]
  %v1215 = vld [vmem:[%s4 + $0x318] sm:$0xff]
  %v1216 = vld [vmem:[%s4 + $0x320] sm:$0xff]
  %v1217 = vld [vmem:[%s4 + $0x328] sm:$0xff]
  %v1218 = vld [vmem:[%s4 + $0x330] sm:$0xff]
  %v1219 = vld [vmem:[%s4 + $0x338] sm:$0xff]
  %v1220 = vld [vmem:[%s4 + $0x340] sm:$0xff]
  %v1221 = vld [vmem:[%s4 + $0x348] sm:$0xff]
  %v1222 = vld [vmem:[%s4 + $0x350] sm:$0xff]
  %v1223 = vld [vmem:[%s4 + $0x358] sm:$0xff]
  %v1224 = vld [vmem:[%s4 + $0x360] sm:$0xff]
  %v1225 = vld [vmem:[%s4 + $0x368] sm:$0xff]
  %v1226 = vld [vmem:[%s4 + $0x370] sm:$0xff]
  %v1227 = vld [vmem:[%s4 + $0x378] sm:$0xff]
  %v1228 = vld [vmem:[%s4 + $0x380] sm:$0xff]
  %v1229 = vld [vmem:[%s4 + $0x388] sm:$0xff]
  %v1230 = vld [vmem:[%s4 + $0x390] sm:$0xff]
  %v1231 = vld [vmem:[%s4 + $0x398] sm:$0xff]
  %v1232 = vld [vmem:[%s4 + $0x3a0] sm:$0xff]
  %v1233 = vld [vmem:[%s4 + $0x3a8] sm:$0xff]
  %v1234 = vld [vmem:[%s4 + $0x3b0] sm:$0xff]
  %v1235 = vld [vmem:[%s4 + $0x3b8] sm:$0xff]
  %v1236 = vld [vmem:[%s4 + $0x3c0] sm:$0xff]
  %v1237 = vld [vmem:[%s4 + $0x3c8] sm:$0xff]
  %v1238 = vld [vmem:[%s4 + $0x3d0] sm:$0xff]
  %v1239 = vld [vmem:[%s4 + $0x3d8] sm:$0xff]
  %v1240 = vld [vmem:[%s4 + $0x3e0] sm:$0xff]
  %v1241 = vld [vmem:[%s4 + $0x3e8] sm:$0xff]
  %v1242 = vld [vmem:[%s4 + $0x3f0] sm:$0xff]
  %v1243 = vld [vmem:[%s4 + $0x3f8] sm:$0xff]
  %v1244 = vld [vmem:[%s4 + $0x400] sm:$0xff]
  %v1245 = vld [vmem:[%s4 + $0x408] sm:$0xff]
  %v1246 = vld [vmem:[%s4 + $0x410] sm:$0xff]
  %v1247 = vld [vmem:[%s4 + $0x418] sm:$0xff]
  %v1248 = vld [vmem:[%s4 + $0x420] sm:$0xff]
  %v1249 = vld [vmem:[%s4 + $0x428] sm:$0xff]
  %v1250 = vld [vmem:[%s4 + $0x430] sm:$0xff]
  %v1251 = vld [vmem:[%s4 + $0x438] sm:$0xff]
  %v1252 = vld [vmem:[%s4 + $0x440] sm:$0xff]
  %v1253 = vld [vmem:[%s4 + $0x448] sm:$0xff]
  %v1254 = vld [vmem:[%s4 + $0x450] sm:$0xff]
  %v1255 = vld [vmem:[%s4 + $0x458] sm:$0xff]
  %v1256 = vld [vmem:[%s4 + $0x460] sm:$0xff]
  %v1257 = vld [vmem:[%s4 + $0x468] sm:$0xff]
  %v1258 = vld [vmem:[%s4 + $0x470] sm:$0xff]
  %v1259 = vld [vmem:[%s4 + $0x478] sm:$0xff]
  %v1260 = vld [vmem:[%s4 + $0x480] sm:$0xff]
  %v1261 = vld [vmem:[%s4 + $0x488] sm:$0xff]
  %v1262 = vld [vmem:[%s4 + $0x490] sm:$0xff]
  %v1263 = vld [vmem:[%s4 + $0x498] sm:$0xff]
  %v1264 = vld [vmem:[%s4 + $0x4a0] sm:$0xff]
  %v1265 = vld [vmem:[%s4 + $0x4a8] sm:$0xff]
  %v1266 = vld [vmem:[%s4 + $0x4b0] sm:$0xff]
  %v1267 = vld [vmem:[%s4 + $0x4b8] sm:$0xff]
  %v1268 = vld [vmem:[%s4 + $0x4c0] sm:$0xff]
  %v1269 = vld [vmem:[%s4 + $0x4c8] sm:$0xff]
  %v1270 = vld [vmem:[%s4 + $0x4d0] sm:$0xff]
  %v1271 = vld [vmem:[%s4 + $0x4d8] sm:$0xff]
  %v1272 = vld [vmem:[%s4 + $0x4e0] sm:$0xff]
  %v1273 = vld [vmem:[%s4 + $0x4e8] sm:$0xff]
  %v1274 = vld [vmem:[%s4 + $0x4f0] sm:$0xff]
  %v1275 = vld [vmem:[%s4 + $0x4f8] sm:$0xff]
  %v1276 = vld [vmem:[%s4 + $0x500] sm:$0xff]
  %v1277 = vld [vmem:[%s4 + $0x508] sm:$0xff]
  %v1278 = vld [vmem:[%s4 + $0x510] sm:$0xff]
  %v1279 = vld [vmem:[%s4 + $0x518] sm:$0xff]
  %v1280 = vld [vmem:[%s4 + $0x520] sm:$0xff]
  %v1281 = vld [vmem:[%s4 + $0x528] sm:$0xff]
  %v1282 = vld [vmem:[%s4 + $0x530] sm:$0xff]
  %v1283 = vld [vmem:[%s4 + $0x538] sm:$0xff]
  %v1284 = vld [vmem:[%s4 + $0x540] sm:$0xff]
  %v1285 = vld [vmem:[%s4 + $0x548] sm:$0xff]
  %v1286 = vld [vmem:[%s4 + $0x550] sm:$0xff]
  %v1287 = vld [vmem:[%s4 + $0x558] sm:$0xff]
  %v1288 = vld [vmem:[%s4 + $0x560] sm:$0xff]
  %v1289 = vld [vmem:[%s4 + $0x568] sm:$0xff]
  %v1290 = vld [vmem:[%s4 + $0x570] sm:$0xff]
  %v1291 = vld [vmem:[%s4 + $0x578] sm:$0xff]
  %1292 = vmatprep.subr.mxu0 %v1117
  %1293 = vmatpush1.msra.mxu0 %v1116
  %1294 = vmatprep.subr.mxu0 %v1128
  %1295 = vmatpush1.msra.mxu0 %v1127
  %1296 = vmatprep.subr.mxu0 %v1139
  %1297 = vmatpush1.msra.mxu0 %v1138
  %1298 = vmatprep.subr.mxu0 %v1150
  %1299 = vmatpush1.msra.mxu0 %v1149
  %1300 = vmatprep.subr.mxu0 %v1161
  %1301 = vmatpush1.msra.mxu0 %v1160
  %1302 = vmatprep.subr.mxu0 %v1172
  %1303 = vmatpush1.msra.mxu0 %v1171
  %1304 = vmatprep.subr.mxu0 %v1183
  %1305 = vmatpush1.msra.mxu0 %v1182
  %1306 = vmatprep.subr.mxu0 %v1194
  %1307 = vmatpush1.msra.mxu0 %v1193
  %1308 = vmatprep.subr.mxu0 %v1205
  %1309 = vmatpush1.msra.mxu0 %v1204
  %1310 = vmatprep.subr.mxu0 %v1216
  %1311 = vmatpush1.msra.mxu0 %v1215
  %1312 = vmatprep.subr.mxu0 %v1227
  %1313 = vmatpush1.msra.mxu0 %v1226
  %1314 = vmatprep.subr.mxu0 %v1238
  %1315 = vmatpush1.msra.mxu0 %v1237
  %1316 = vmatprep.subr.mxu0 %v1249
  %1317 = vmatpush1.msra.mxu0 %v1248
  %1318 = vmatprep.subr.mxu0 %v1260
  %1319 = vmatpush1.msra.mxu0 %v1259
  %1320 = vmatprep.subr.mxu0 %v1271
  %1321 = vmatpush1.msra.mxu0 %v1270
  %1322 = vmatprep.subr.mxu0 %v1282
  %1323 = vmatpush1.msra.mxu0 %v1281
  %1324 = vmatprep.subr.mxu0 0.0
  %1325 = vmatpush1.msra.mxu0 0.0
  %1326 = vmatprep.subr.mxu0 0.0
  %1327 = vmatpush1.msra.mxu0 0.0
  %1328 = vmatprep.subr.mxu0 0.0
  %1329 = vmatpush1.msra.mxu0 0.0
  %1330 = vmatprep.subr.mxu0 0.0
  %1331 = vmatpush1.msra.mxu0 0.0
  %1332 = vmatprep.subr.mxu0 0.0
  %1333 = vmatpush1.msra.mxu0 0.0
  %1334 = vmatprep.subr.mxu0 0.0
  %1335 = vmatpush1.msra.mxu0 0.0
  %1336 = vmatprep.subr.mxu0 0.0
  %1337 = vmatpush1.msra.mxu0 0.0
  %1338 = vmatprep.subr.mxu0 0.0
  %1339 = vmatpush1.msra.mxu0 0.0
  %1340 = vmatprep.subr.mxu0 0.0
  %1341 = vmatpush1.msra.mxu0 0.0
  %1342 = vmatprep.subr.mxu0 0.0
  %1343 = vmatpush1.msra.mxu0 0.0
  %1344 = vmatprep.subr.mxu0 0.0
  %1345 = vmatpush1.msra.mxu0 0.0
  %1346 = vmatprep.subr.mxu0 0.0
  %1347 = vmatpush1.msra.mxu0 0.0
  %1348 = vmatprep.subr.mxu0 0.0
  %1349 = vmatpush1.msra.mxu0 0.0
  %1350 = vmatprep.subr.mxu0 0.0
  %1351 = vmatpush1.msra.mxu0 0.0
  %1352 = vmatprep.subr.mxu0 0.0
  %1353 = vmatpush1.msra.mxu0 0.0
  %1354 = vmatprep.subr.mxu0 0.0
  %1355 = vmatpush1.msra.mxu0 0.0
  %1356 = vmatprep.mubr.f32.mxu0 0.0
  %1357 = vmatmul.mubr.f32.gmra.mrb[0].mxu0 %v1112
  %v1358 = vpop.f32.mrb[0].mxu0
  %v1359 = vadd.f32 0.0, %v1358
  %v1360 = vpop.f32.mrb[0].mxu0
  %v1361 = vadd.f32 0.0, %v1360
  %1362 = vmatprep.mubr.f32.mxu0 0.0
  %1363 = vmatmul.mubr.f32.gmra.mrb[0].mxu0 %v1113
  %v1364 = vpop.f32.mrb[0].mxu0
  %v1365 = vadd.f32 0.0, %v1364
  %v1366 = vpop.f32.mrb[0].mxu0
  %v1367 = vadd.f32 0.0, %v1366
  %1368 = vmatprep.mubr.f32.mxu0 0.0
  %1369 = vmatmul.mubr.f32.gmra.mrb[0].mxu0 %v1114
  %v1370 = vpop.f32.mrb[0].mxu0
  %v1371 = vadd.f32 0.0, %v1370
  %v1372 = vpop.f32.mrb[0].mxu0
  %v1373 = vadd.f32 0.0, %v1372
  %1374 = vmatprep.mubr.f32.mxu0 0.0
  %1375 = vmatmul.mubr.f32.gmra.mrb[0].mxu0 %v1115
  %v1376 = vpop.f32.mrb[0].mxu0
  %v1377 = vadd.f32 0.0, %v1376
  %v1378 = vpop.f32.mrb[0].mxu0
  %v1379 = vadd.f32 0.0, %v1378
  %1380 = vdwg.mxu0
  %1381 = vmatprep.subr.mxu0 %v1119
  %1382 = vmatpush1.msra.mxu0 %v1118
  %1383 = vmatprep.subr.mxu0 %v1130
  %1384 = vmatpush1.msra.mxu0 %v1129
  %1385 = vmatprep.subr.mxu0 %v1141
  %1386 = vmatpush1.msra.mxu0 %v1140
  %1387 = vmatprep.subr.mxu0 %v1152
  %1388 = vmatpush1.msra.mxu0 %v1151
  %1389 = vmatprep.subr.mxu0 %v1163
  %1390 = vmatpush1.msra.mxu0 %v1162
  %1391 = vmatprep.subr.mxu0 %v1174
  %1392 = vmatpush1.msra.mxu0 %v1173
  %1393 = vmatprep.subr.mxu0 %v1185
  %1394 = vmatpush1.msra.mxu0 %v1184
  %1395 = vmatprep.subr.mxu0 %v1196
  %1396 = vmatpush1.msra.mxu0 %v1195
  %1397 = vmatprep.subr.mxu0 %v1207
  %1398 = vmatpush1.msra.mxu0 %v1206
  %1399 = vmatprep.subr.mxu0 %v1218
  %1400 = vmatpush1.msra.mxu0 %v1217
  %1401 = vmatprep.subr.mxu0 %v1229
  %1402 = vmatpush1.msra.mxu0 %v1228
  %1403 = vmatprep.subr.mxu0 %v1240
  %1404 = vmatpush1.msra.mxu0 %v1239
  %1405 = vmatprep.subr.mxu0 %v1251
  %1406 = vmatpush1.msra.mxu0 %v1250
  %1407 = vmatprep.subr.mxu0 %v1262
  %1408 = vmatpush1.msra.mxu0 %v1261
  %1409 = vmatprep.subr.mxu0 %v1273
  %1410 = vmatpush1.msra.mxu0 %v1272
  %1411 = vmatprep.subr.mxu0 %v1284
  %1412 = vmatpush1.msra.mxu0 %v1283
  %1413 = vmatprep.subr.mxu0 0.0
  %1414 = vmatpush1.msra.mxu0 0.0
  %1415 = vmatprep.subr.mxu0 0.0
  %1416 = vmatpush1.msra.mxu0 0.0
  %1417 = vmatprep.subr.mxu0 0.0
  %1418 = vmatpush1.msra.mxu0 0.0
  %1419 = vmatprep.subr.mxu0 0.0
  %1420 = vmatpush1.msra.mxu0 0.0
  %1421 = vmatprep.subr.mxu0 0.0
  %1422 = vmatpush1.msra.mxu0 0.0
  %1423 = vmatprep.subr.mxu0 0.0
  %1424 = vmatpush1.msra.mxu0 0.0
  %1425 = vmatprep.subr.mxu0 0.0
  %1426 = vmatpush1.msra.mxu0 0.0
  %1427 = vmatprep.subr.mxu0 0.0
  %1428 = vmatpush1.msra.mxu0 0.0
  %1429 = vmatprep.subr.mxu0 0.0
  %1430 = vmatpush1.msra.mxu0 0.0
  %1431 = vmatprep.subr.mxu0 0.0
  %1432 = vmatpush1.msra.mxu0 0.0
  %1433 = vmatprep.subr.mxu0 0.0
  %1434 = vmatpush1.msra.mxu0 0.0
  %1435 = vmatprep.subr.mxu0 0.0
  %1436 = vmatpush1.msra.mxu0 0.0
  %1437 = vmatprep.subr.mxu0 0.0
  %1438 = vmatpush1.msra.mxu0 0.0
  %1439 = vmatprep.subr.mxu0 0.0
  %1440 = vmatpush1.msra.mxu0 0.0
  %1441 = vmatprep.subr.mxu0 0.0
  %1442 = vmatpush1.msra.mxu0 0.0
  %1443 = vmatprep.subr.mxu0 0.0
  %1444 = vmatpush1.msra.mxu0 0.0
  %1445 = vmatprep.mubr.f32.mxu0 0.0
  %1446 = vmatmul.mubr.f32.gmra.mrb[0].mxu0 %v1112
  %v1447 = vpop.f32.mrb[0].mxu0
  %v1448 = vadd.f32 0.0, %v1447
  %v1449 = vpop.f32.mrb[0].mxu0
  %v1450 = vadd.f32 0.0, %v1449
  %1451 = vmatprep.mubr.f32.mxu0 0.0
  %1452 = vmatmul.mubr.f32.gmra.mrb[0].mxu0 %v1113
  %v1453 = vpop.f32.mrb[0].mxu0
  %v1454 = vadd.f32 0.0, %v1453
  %v1455 = vpop.f32.mrb[0].mxu0
  %v1456 = vadd.f32 0.0, %v1455
  %1457 = vmatprep.mubr.f32.mxu0 0.0
  %1458 = vmatmul.mubr.f32.gmra.mrb[0].mxu0 %v1114
  %v1459 = vpop.f32.mrb[0].mxu0
  %v1460 = vadd.f32 0.0, %v1459
  %v1461 = vpop.f32.mrb[0].mxu0
  %v1462 = vadd.f32 0.0, %v1461
  %1463 = vmatprep.mubr.f32.mxu0 0.0
  %1464 = vmatmul.mubr.f32.gmra.mrb[0].mxu0 %v1115
  %v1465 = vpop.f32.mrb[0].mxu0
  %v1466 = vadd.f32 0.0, %v1465
  %v1467 = vpop.f32.mrb[0].mxu0
  %v1468 = vadd.f32 0.0, %v1467
  %1469 = vdwg.mxu0
  %1470 = vmatprep.subr.mxu0 %v1121
  %1471 = vmatpush1.msra.mxu0 %v1120
  %1472 = vmatprep.subr.mxu0 %v1132
  %1473 = vmatpush1.msra.mxu0 %v1131
  %1474 = vmatprep.subr.mxu0 %v1143
  %1475 = vmatpush1.msra.mxu0 %v1142
  %1476 = vmatprep.subr.mxu0 %v1154
  %1477 = vmatpush1.msra.mxu0 %v1153
  %1478 = vmatprep.subr.mxu0 %v1165
  %1479 = vmatpush1.msra.mxu0 %v1164
  %1480 = vmatprep.subr.mxu0 %v1176
  %1481 = vmatpush1.msra.mxu0 %v1175
  %1482 = vmatprep.subr.mxu0 %v1187
  %1483 = vmatpush1.msra.mxu0 %v1186
  %1484 = vmatprep.subr.mxu0 %v1198
  %1485 = vmatpush1.msra.mxu0 %v1197
  %1486 = vmatprep.subr.mxu0 %v1209
  %1487 = vmatpush1.msra.mxu0 %v1208
  %1488 = vmatprep.subr.mxu0 %v1220
  %1489 = vmatpush1.msra.mxu0 %v1219
  %1490 = vmatprep.subr.mxu0 %v1231
  %1491 = vmatpush1.msra.mxu0 %v1230
  %1492 = vmatprep.subr.mxu0 %v1242
  %1493 = vmatpush1.msra.mxu0 %v1241
  %1494 = vmatprep.subr.mxu0 %v1253
  %1495 = vmatpush1.msra.mxu0 %v1252
  %1496 = vmatprep.subr.mxu0 %v1264
  %1497 = vmatpush1.msra.mxu0 %v1263
  %1498 = vmatprep.subr.mxu0 %v1275
  %1499 = vmatpush1.msra.mxu0 %v1274
  %1500 = vmatprep.subr.mxu0 %v1286
  %1501 = vmatpush1.msra.mxu0 %v1285
  %1502 = vmatprep.subr.mxu0 0.0
  %1503 = vmatpush1.msra.mxu0 0.0
  %1504 = vmatprep.subr.mxu0 0.0
  %1505 = vmatpush1.msra.mxu0 0.0
  %1506 = vmatprep.subr.mxu0 0.0
  %1507 = vmatpush1.msra.mxu0 0.0
  %1508 = vmatprep.subr.mxu0 0.0
  %1509 = vmatpush1.msra.mxu0 0.0
  %1510 = vmatprep.subr.mxu0 0.0
  %1511 = vmatpush1.msra.mxu0 0.0
  %1512 = vmatprep.subr.mxu0 0.0
  %1513 = vmatpush1.msra.mxu0 0.0
  %1514 = vmatprep.subr.mxu0 0.0
  %1515 = vmatpush1.msra.mxu0 0.0
  %1516 = vmatprep.subr.mxu0 0.0
  %1517 = vmatpush1.msra.mxu0 0.0
  %1518 = vmatprep.subr.mxu0 0.0
  %1519 = vmatpush1.msra.mxu0 0.0
  %1520 = vmatprep.subr.mxu0 0.0
  %1521 = vmatpush1.msra.mxu0 0.0
  %1522 = vmatprep.subr.mxu0 0.0
  %1523 = vmatpush1.msra.mxu0 0.0
  %1524 = vmatprep.subr.mxu0 0.0
  %1525 = vmatpush1.msra.mxu0 0.0
  %1526 = vmatprep.subr.mxu0 0.0
  %1527 = vmatpush1.msra.mxu0 0.0
  %1528 = vmatprep.subr.mxu0 0.0
  %1529 = vmatpush1.msra.mxu0 0.0
  %1530 = vmatprep.subr.mxu0 0.0
  %1531 = vmatpush1.msra.mxu0 0.0
  %1532 = vmatprep.subr.mxu0 0.0
  %1533 = vmatpush1.msra.mxu0 0.0
  %1534 = vmatprep.mubr.f32.mxu0 0.0
  %1535 = vmatmul.mubr.f32.gmra.mrb[0].mxu0 %v1112
  %v1536 = vpop.f32.mrb[0].mxu0
  %v1537 = vadd.f32 0.0, %v1536
  %v1538 = vpop.f32.mrb[0].mxu0
  %v1539 = vadd.f32 0.0, %v1538
  %1540 = vmatprep.mubr.f32.mxu0 0.0
  %1541 = vmatmul.mubr.f32.gmra.mrb[0].mxu0 %v1113
  %v1542 = vpop.f32.mrb[0].mxu0
  %v1543 = vadd.f32 0.0, %v1542
  %v1544 = vpop.f32.mrb[0].mxu0
  %v1545 = vadd.f32 0.0, %v1544
  %1546 = vmatprep.mubr.f32.mxu0 0.0
  %1547 = vmatmul.mubr.f32.gmra.mrb[0].mxu0 %v1114
  %v1548 = vpop.f32.mrb[0].mxu0
  %v1549 = vadd.f32 0.0, %v1548
  %v1550 = vpop.f32.mrb[0].mxu0
  %v1551 = vadd.f32 0.0, %v1550
  %1552 = vmatprep.mubr.f32.mxu0 0.0
  %1553 = vmatmul.mubr.f32.gmra.mrb[0].mxu0 %v1115
  %v1554 = vpop.f32.mrb[0].mxu0
  %v1555 = vadd.f32 0.0, %v1554
  %v1556 = vpop.f32.mrb[0].mxu0
  %v1557 = vadd.f32 0.0, %v1556
  %1558 = vdwg.mxu0
  %1559 = vmatprep.subr.mxu0 %v1123
  %1560 = vmatpush1.msra.mxu0 %v1122
  %1561 = vmatprep.subr.mxu0 %v1134
  %1562 = vmatpush1.msra.mxu0 %v1133
  %1563 = vmatprep.subr.mxu0 %v1145
  %1564 = vmatpush1.msra.mxu0 %v1144
  %1565 = vmatprep.subr.mxu0 %v1156
  %1566 = vmatpush1.msra.mxu0 %v1155
  %1567 = vmatprep.subr.mxu0 %v1167
  %1568 = vmatpush1.msra.mxu0 %v1166
  %1569 = vmatprep.subr.mxu0 %v1178
  %1570 = vmatpush1.msra.mxu0 %v1177
  %1571 = vmatprep.subr.mxu0 %v1189
  %1572 = vmatpush1.msra.mxu0 %v1188
  %1573 = vmatprep.subr.mxu0 %v1200
  %1574 = vmatpush1.msra.mxu0 %v1199
  %1575 = vmatprep.subr.mxu0 %v1211
  %1576 = vmatpush1.msra.mxu0 %v1210
  %1577 = vmatprep.subr.mxu0 %v1222
  %1578 = vmatpush1.msra.mxu0 %v1221
  %1579 = vmatprep.subr.mxu0 %v1233
  %1580 = vmatpush1.msra.mxu0 %v1232
  %1581 = vmatprep.subr.mxu0 %v1244
  %1582 = vmatpush1.msra.mxu0 %v1243
  %1583 = vmatprep.subr.mxu0 %v1255
  %1584 = vmatpush1.msra.mxu0 %v1254
  %1585 = vmatprep.subr.mxu0 %v1266
  %1586 = vmatpush1.msra.mxu0 %v1265
  %1587 = vmatprep.subr.mxu0 %v1277
  %1588 = vmatpush1.msra.mxu0 %v1276
  %1589 = vmatprep.subr.mxu0 %v1288
  %1590 = vmatpush1.msra.mxu0 %v1287
  %1591 = vmatprep.subr.mxu0 0.0
  %1592 = vmatpush1.msra.mxu0 0.0
  %1593 = vmatprep.subr.mxu0 0.0
  %1594 = vmatpush1.msra.mxu0 0.0
  %1595 = vmatprep.subr.mxu0 0.0
  %1596 = vmatpush1.msra.mxu0 0.0
  %1597 = vmatprep.subr.mxu0 0.0
  %1598 = vmatpush1.msra.mxu0 0.0
  %1599 = vmatprep.subr.mxu0 0.0
  %1600 = vmatpush1.msra.mxu0 0.0
  %1601 = vmatprep.subr.mxu0 0.0
  %1602 = vmatpush1.msra.mxu0 0.0
  %1603 = vmatprep.subr.mxu0 0.0
  %1604 = vmatpush1.msra.mxu0 0.0
  %1605 = vmatprep.subr.mxu0 0.0
  %1606 = vmatpush1.msra.mxu0 0.0
  %1607 = vmatprep.subr.mxu0 0.0
  %1608 = vmatpush1.msra.mxu0 0.0
  %1609 = vmatprep.subr.mxu0 0.0
  %1610 = vmatpush1.msra.mxu0 0.0
  %1611 = vmatprep.subr.mxu0 0.0
  %1612 = vmatpush1.msra.mxu0 0.0
  %1613 = vmatprep.subr.mxu0 0.0
  %1614 = vmatpush1.msra.mxu0 0.0
  %1615 = vmatprep.subr.mxu0 0.0
  %1616 = vmatpush1.msra.mxu0 0.0
  %1617 = vmatprep.subr.mxu0 0.0
  %1618 = vmatpush1.msra.mxu0 0.0
  %1619 = vmatprep.subr.mxu0 0.0
  %1620 = vmatpush1.msra.mxu0 0.0
  %1621 = vmatprep.subr.mxu0 0.0
  %1622 = vmatpush1.msra.mxu0 0.0
  %1623 = vmatprep.mubr.f32.mxu0 0.0
  %1624 = vmatmul.mubr.f32.gmra.mrb[0].mxu0 %v1112
  %v1625 = vpop.f32.mrb[0].mxu0
  %v1626 = vadd.f32 0.0, %v1625
  %v1627 = vpop.f32.mrb[0].mxu0
  %v1628 = vadd.f32 0.0, %v1627
  %1629 = vmatprep.mubr.f32.mxu0 0.0
  %1630 = vmatmul.mubr.f32.gmra.mrb[0].mxu0 %v1113
  %v1631 = vpop.f32.mrb[0].mxu0
  %v1632 = vadd.f32 0.0, %v1631
  %v1633 = vpop.f32.mrb[0].mxu0
  %v1634 = vadd.f32 0.0, %v1633
  %1635 = vmatprep.mubr.f32.mxu0 0.0
  %1636 = vmatmul.mubr.f32.gmra.mrb[0].mxu0 %v1114
  %v1637 = vpop.f32.mrb[0].mxu0
  %v1638 = vadd.f32 0.0, %v1637
  %v1639 = vpop.f32.mrb[0].mxu0
  %v1640 = vadd.f32 0.0, %v1639
  %1641 = vmatprep.mubr.f32.mxu0 0.0
  %1642 = vmatmul.mubr.f32.gmra.mrb[0].mxu0 %v1115
  %v1643 = vpop.f32.mrb[0].mxu0
  %v1644 = vadd.f32 0.0, %v1643
  %v1645 = vpop.f32.mrb[0].mxu0
  %v1646 = vadd.f32 0.0, %v1645
  %1647 = vdwg.mxu0
  %1648 = vmatprep.subr.mxu0 %v1125
  %1649 = vmatpush1.msra.mxu0 %v1124
  %1650 = vmatprep.subr.mxu0 %v1136
  %1651 = vmatpush1.msra.mxu0 %v1135
  %1652 = vmatprep.subr.mxu0 %v1147
  %1653 = vmatpush1.msra.mxu0 %v1146
  %1654 = vmatprep.subr.mxu0 %v1158
  %1655 = vmatpush1.msra.mxu0 %v1157
  %1656 = vmatprep.subr.mxu0 %v1169
  %1657 = vmatpush1.msra.mxu0 %v1168
  %1658 = vmatprep.subr.mxu0 %v1180
  %1659 = vmatpush1.msra.mxu0 %v1179
  %1660 = vmatprep.subr.mxu0 %v1191
  %1661 = vmatpush1.msra.mxu0 %v1190
  %1662 = vmatprep.subr.mxu0 %v1202
  %1663 = vmatpush1.msra.mxu0 %v1201
  %1664 = vmatprep.subr.mxu0 %v1213
  %1665 = vmatpush1.msra.mxu0 %v1212
  %1666 = vmatprep.subr.mxu0 %v1224
  %1667 = vmatpush1.msra.mxu0 %v1223
  %1668 = vmatprep.subr.mxu0 %v1235
  %1669 = vmatpush1.msra.mxu0 %v1234
  %1670 = vmatprep.subr.mxu0 %v1246
  %1671 = vmatpush1.msra.mxu0 %v1245
  %1672 = vmatprep.subr.mxu0 %v1257
  %1673 = vmatpush1.msra.mxu0 %v1256
  %1674 = vmatprep.subr.mxu0 %v1268
  %1675 = vmatpush1.msra.mxu0 %v1267
  %1676 = vmatprep.subr.mxu0 %v1279
  %1677 = vmatpush1.msra.mxu0 %v1278
  %1678 = vmatprep.subr.mxu0 %v1290
  %1679 = vmatpush1.msra.mxu0 %v1289
  %1680 = vmatprep.subr.mxu0 0.0
  %1681 = vmatpush1.msra.mxu0 0.0
  %1682 = vmatprep.subr.mxu0 0.0
  %1683 = vmatpush1.msra.mxu0 0.0
  %1684 = vmatprep.subr.mxu0 0.0
  %1685 = vmatpush1.msra.mxu0 0.0
  %1686 = vmatprep.subr.mxu0 0.0
  %1687 = vmatpush1.msra.mxu0 0.0
  %1688 = vmatprep.subr.mxu0 0.0
  %1689 = vmatpush1.msra.mxu0 0.0
  %1690 = vmatprep.subr.mxu0 0.0
  %1691 = vmatpush1.msra.mxu0 0.0
  %1692 = vmatprep.subr.mxu0 0.0
  %1693 = vmatpush1.msra.mxu0 0.0
  %1694 = vmatprep.subr.mxu0 0.0
  %1695 = vmatpush1.msra.mxu0 0.0
  %1696 = vmatprep.subr.mxu0 0.0
  %1697 = vmatpush1.msra.mxu0 0.0
  %1698 = vmatprep.subr.mxu0 0.0
  %1699 = vmatpush1.msra.mxu0 0.0
  %1700 = vmatprep.subr.mxu0 0.0
  %1701 = vmatpush1.msra.mxu0 0.0
  %1702 = vmatprep.subr.mxu0 0.0
  %1703 = vmatpush1.msra.mxu0 0.0
  %1704 = vmatprep.subr.mxu0 0.0
  %1705 = vmatpush1.msra.mxu0 0.0
  %1706 = vmatprep.subr.mxu0 0.0
  %1707 = vmatpush1.msra.mxu0 0.0
  %1708 = vmatprep.subr.mxu0 0.0
  %1709 = vmatpush1.msra.mxu0 0.0
  %1710 = vmatprep.subr.mxu0 0.0
  %1711 = vmatpush1.msra.mxu0 0.0
  %1712 = vmatprep.mubr.f32.mxu0 0.0
  %1713 = vmatmul.mubr.f32.gmra.mrb[0].mxu0 %v1112
  %v1714 = vpop.f32.mrb[0].mxu0
  %v1715 = vadd.f32 0.0, %v1714
  %v1716 = vpop.f32.mrb[0].mxu0
  %v1717 = vadd.f32 0.0, %v1716
  %1718 = vmatprep.mubr.f32.mxu0 0.0
  %1719 = vmatmul.mubr.f32.gmra.mrb[0].mxu0 %v1113
  %v1720 = vpop.f32.mrb[0].mxu0
  %v1721 = vadd.f32 0.0, %v1720
  %v1722 = vpop.f32.mrb[0].mxu0
  %v1723 = vadd.f32 0.0, %v1722
  %1724 = vmatprep.mubr.f32.mxu0 0.0
  %1725 = vmatmul.mubr.f32.gmra.mrb[0].mxu0 %v1114
  %v1726 = vpop.f32.mrb[0].mxu0
  %v1727 = vadd.f32 0.0, %v1726
  %v1728 = vpop.f32.mrb[0].mxu0
  %v1729 = vadd.f32 0.0, %v1728
  %1730 = vmatprep.mubr.f32.mxu0 0.0
  %1731 = vmatmul.mubr.f32.gmra.mrb[0].mxu0 %v1115
  %v1732 = vpop.f32.mrb[0].mxu0
  %v1733 = vadd.f32 0.0, %v1732
  %v1734 = vpop.f32.mrb[0].mxu0
  %v1735 = vadd.f32 0.0, %v1734
  %1736 = vdwg.mxu0
  %1737 = vmatprep.subr.mxu0 0.0
  %1738 = vmatpush1.msra.mxu0 %v1126
  %1739 = vmatprep.subr.mxu0 0.0
  %1740 = vmatpush1.msra.mxu0 %v1137
  %1741 = vmatprep.subr.mxu0 0.0
  %1742 = vmatpush1.msra.mxu0 %v1148
  %1743 = vmatprep.subr.mxu0 0.0
  %1744 = vmatpush1.msra.mxu0 %v1159
  %1745 = vmatprep.subr.mxu0 0.0
  %1746 = vmatpush1.msra.mxu0 %v1170
  %1747 = vmatprep.subr.mxu0 0.0
  %1748 = vmatpush1.msra.mxu0 %v1181
  %1749 = vmatprep.subr.mxu0 0.0
  %1750 = vmatpush1.msra.mxu0 %v1192
  %1751 = vmatprep.subr.mxu0 0.0
  %1752 = vmatpush1.msra.mxu0 %v1203
  %1753 = vmatprep.subr.mxu0 0.0
  %1754 = vmatpush1.msra.mxu0 %v1214
  %1755 = vmatprep.subr.mxu0 0.0
  %1756 = vmatpush1.msra.mxu0 %v1225
  %1757 = vmatprep.subr.mxu0 0.0
  %1758 = vmatpush1.msra.mxu0 %v1236
  %1759 = vmatprep.subr.mxu0 0.0
  %1760 = vmatpush1.msra.mxu0 %v1247
  %1761 = vmatprep.subr.mxu0 0.0
  %1762 = vmatpush1.msra.mxu0 %v1258
  %1763 = vmatprep.subr.mxu0 0.0
  %1764 = vmatpush1.msra.mxu0 %v1269
  %1765 = vmatprep.subr.mxu0 0.0
  %1766 = vmatpush1.msra.mxu0 %v1280
  %1767 = vmatprep.subr.mxu0 0.0
  %1768 = vmatpush1.msra.mxu0 %v1291
  %1769 = vmatprep.subr.mxu0 0.0
  %1770 = vmatpush1.msra.mxu0 0.0
  %1771 = vmatprep.subr.mxu0 0.0
  %1772 = vmatpush1.msra.mxu0 0.0
  %1773 = vmatprep.subr.mxu0 0.0
  %1774 = vmatpush1.msra.mxu0 0.0
  %1775 = vmatprep.subr.mxu0 0.0
  %1776 = vmatpush1.msra.mxu0 0.0
  %1777 = vmatprep.subr.mxu0 0.0
  %1778 = vmatpush1.msra.mxu0 0.0
  %1779 = vmatprep.subr.mxu0 0.0
  %1780 = vmatpush1.msra.mxu0 0.0
  %1781 = vmatprep.subr.mxu0 0.0
  %1782 = vmatpush1.msra.mxu0 0.0
  %1783 = vmatprep.subr.mxu0 0.0
  %1784 = vmatpush1.msra.mxu0 0.0
  %1785 = vmatprep.subr.mxu0 0.0
  %1786 = vmatpush1.msra.mxu0 0.0
  %1787 = vmatprep.subr.mxu0 0.0
  %1788 = vmatpush1.msra.mxu0 0.0
  %1789 = vmatprep.subr.mxu0 0.0
  %1790 = vmatpush1.msra.mxu0 0.0
  %1791 = vmatprep.subr.mxu0 0.0
  %1792 = vmatpush1.msra.mxu0 0.0
  %1793 = vmatprep.subr.mxu0 0.0
  %1794 = vmatpush1.msra.mxu0 0.0
  %1795 = vmatprep.subr.mxu0 0.0
  %1796 = vmatpush1.msra.mxu0 0.0
  %1797 = vmatprep.subr.mxu0 0.0
  %1798 = vmatpush1.msra.mxu0 0.0
  %1799 = vmatprep.subr.mxu0 0.0
  %1800 = vmatpush1.msra.mxu0 0.0
  %1801 = vmatprep.mubr.f32.mxu0 0.0
  %1802 = vmatmul.mubr.f32.gmra.mrb[0].mxu0 %v1112
  %v1803 = vpop.f32.mrb[0].mxu0
  %v1804 = vadd.f32 0.0, %v1803
  %v1805 = vpop.f32.mrb[0].mxu0
  %1806 = vmatprep.mubr.f32.mxu0 0.0
  %1807 = vmatmul.mubr.f32.gmra.mrb[0].mxu0 %v1113
  %v1808 = vpop.f32.mrb[0].mxu0
  %v1809 = vadd.f32 0.0, %v1808
  %v1810 = vpop.f32.mrb[0].mxu0
  %1811 = vmatprep.mubr.f32.mxu0 0.0
  %1812 = vmatmul.mubr.f32.gmra.mrb[0].mxu0 %v1114
  %v1813 = vpop.f32.mrb[0].mxu0
  %v1814 = vadd.f32 0.0, %v1813
  %v1815 = vpop.f32.mrb[0].mxu0
  %1816 = vmatprep.mubr.f32.mxu0 0.0
  %1817 = vmatmul.mubr.f32.gmra.mrb[0].mxu0 %v1115
  %v1818 = vpop.f32.mrb[0].mxu0
  %v1819 = vadd.f32 0.0, %v1818
  %v1820 = vpop.f32.mrb[0].mxu0
  %1821 = vdwg.mxu0
  %1822 = vst [vmem:[#allocation2] sm:$0xff] %v1359
  %1823 = vst [vmem:[#allocation2 + $0x8] sm:$0xff] %v1361
  %1824 = vst [vmem:[#allocation2 + $0x10] sm:$0xff] %v1448
  %1825 = vst [vmem:[#allocation2 + $0x18] sm:$0xff] %v1450
  %1826 = vst [vmem:[#allocation2 + $0x20] sm:$0xff] %v1537
  %1827 = vst [vmem:[#allocation2 + $0x28] sm:$0xff] %v1539
  %1828 = vst [vmem:[#allocation2 + $0x30] sm:$0xff] %v1626
  %1829 = vst [vmem:[#allocation2 + $0x38] sm:$0xff] %v1628
  %1830 = vst [vmem:[#allocation2 + $0x40] sm:$0xff] %v1715
  %1831 = vst [vmem:[#allocation2 + $0x48] sm:$0xff] %v1717
  %1832 = vst [vmem:[#allocation2 + $0x50] sm:$0xff] %v1804
  %1833 = vst [vmem:[#allocation2 + $0x58] sm:$0xff] %v1365
  %1834 = vst [vmem:[#allocation2 + $0x60] sm:$0xff] %v1367
  %1835 = vst [vmem:[#allocation2 + $0x68] sm:$0xff] %v1454
  %1836 = vst [vmem:[#allocation2 + $0x70] sm:$0xff] %v1456
  %1837 = vst [vmem:[#allocation2 + $0x78] sm:$0xff] %v1543
  %1838 = vst [vmem:[#allocation2 + $0x80] sm:$0xff] %v1545
  %1839 = vst [vmem:[#allocation2 + $0x88] sm:$0xff] %v1632
  %1840 = vst [vmem:[#allocation2 + $0x90] sm:$0xff] %v1634
  %1841 = vst [vmem:[#allocation2 + $0x98] sm:$0xff] %v1721
  %1842 = vst [vmem:[#allocation2 + $0xa0] sm:$0xff] %v1723
  %1843 = vst [vmem:[#allocation2 + $0xa8] sm:$0xff] %v1809
  %1844 = vst [vmem:[#allocation2 + $0xb0] sm:$0xff] %v1371
  %1845 = vst [vmem:[#allocation2 + $0xb8] sm:$0xff] %v1373
  %1846 = vst [vmem:[#allocation2 + $0xc0] sm:$0xff] %v1460
  %1847 = vst [vmem:[#allocation2 + $0xc8] sm:$0xff] %v1462
  %1848 = vst [vmem:[#allocation2 + $0xd0] sm:$0xff] %v1549
  %1849 = vst [vmem:[#allocation2 + $0xd8] sm:$0xff] %v1551
  %1850 = vst [vmem:[#allocation2 + $0xe0] sm:$0xff] %v1638
  %1851 = vst [vmem:[#allocation2 + $0xe8] sm:$0xff] %v1640
  %1852 = vst [vmem:[#allocation2 + $0xf0] sm:$0xff] %v1727
  %1853 = vst [vmem:[#allocation2 + $0xf8] sm:$0xff] %v1729
  %1854 = vst [vmem:[#allocation2 + $0x100] sm:$0xff] %v1814
  %1855 = vst [vmem:[#allocation2 + $0x108] sm:$0xff] %v1377
  %1856 = vst [vmem:[#allocation2 + $0x110] sm:$0xff] %v1379
  %1857 = vst [vmem:[#allocation2 + $0x118] sm:$0xff] %v1466
  %1858 = vst [vmem:[#allocation2 + $0x120] sm:$0xff] %v1468
  %1859 = vst [vmem:[#allocation2 + $0x128] sm:$0xff] %v1555
  %1860 = vst [vmem:[#allocation2 + $0x130] sm:$0xff] %v1557
  %1861 = vst [vmem:[#allocation2 + $0x138] sm:$0xff] %v1644
  %1862 = vst [vmem:[#allocation2 + $0x140] sm:$0xff] %v1646
  %1863 = vst [vmem:[#allocation2 + $0x148] sm:$0xff] %v1733
  %1864 = vst [vmem:[#allocation2 + $0x150] sm:$0xff] %v1735
  %1865 = vst [vmem:[#allocation2 + $0x158] sm:$0xff] %v1819
  %v1866 = vld [vmem:[#allocation2] sm:$0xff]
  %v1867 = vld [vmem:[#allocation2 + $0x58] sm:$0xff]
  %v1868 = vld [vmem:[#allocation2 + $0xb0] sm:$0xff]
  %v1869 = vld [vmem:[#allocation2 + $0x108] sm:$0xff]
  %1870 = vst [vmem:[#allocation3] sm:$0xff] %v1866
  %1871 = vst [vmem:[#allocation3 + $0x8] sm:$0xff] %v1867
  %1872 = vst [vmem:[#allocation3 + $0x10] sm:$0xff] %v1868
  %1873 = vst [vmem:[#allocation3 + $0x18] sm:$0xff] %v1869
  %v1874 = vld [vmem:[#allocation2 + $0x8] sm:$0xff]
  %v1875 = vld [vmem:[#allocation2 + $0x60] sm:$0xff]
  %v1876 = vld [vmem:[#allocation2 + $0xb8] sm:$0xff]
  %v1877 = vld [vmem:[#allocation2 + $0x110] sm:$0xff]
  %1878 = vst [vmem:[#allocation3 + $0x20] sm:$0xff] %v1874
  %1879 = vst [vmem:[#allocation3 + $0x28] sm:$0xff] %v1875
  %1880 = vst [vmem:[#allocation3 + $0x30] sm:$0xff] %v1876
  %1881 = vst [vmem:[#allocation3 + $0x38] sm:$0xff] %v1877
  %v1882 = vld [vmem:[#allocation2 + $0x10] sm:$0xff]
  %v1883 = vld [vmem:[#allocation2 + $0x68] sm:$0xff]
  %v1884 = vld [vmem:[#allocation2 + $0xc0] sm:$0xff]
  %v1885 = vld [vmem:[#allocation2 + $0x118] sm:$0xff]
  %1886 = vst [vmem:[#allocation3 + $0x40] sm:$0xff] %v1882
  %1887 = vst [vmem:[#allocation3 + $0x48] sm:$0xff] %v1883
  %1888 = vst [vmem:[#allocation3 + $0x50] sm:$0xff] %v1884
  %1889 = vst [vmem:[#allocation3 + $0x58] sm:$0xff] %v1885
  %v1890 = vld [vmem:[#allocation2 + $0x18] sm:$0xff]
  %v1891 = vld [vmem:[#allocation2 + $0x70] sm:$0xff]
  %v1892 = vld [vmem:[#allocation2 + $0xc8] sm:$0xff]
  %v1893 = vld [vmem:[#allocation2 + $0x120] sm:$0xff]
  %1894 = vst [vmem:[#allocation3 + $0x60] sm:$0xff] %v1890
  %1895 = vst [vmem:[#allocation3 + $0x68] sm:$0xff] %v1891
  %1896 = vst [vmem:[#allocation3 + $0x70] sm:$0xff] %v1892
  %1897 = vst [vmem:[#allocation3 + $0x78] sm:$0xff] %v1893
  %v1898 = vld [vmem:[#allocation2 + $0x20] sm:$0xff]
  %v1899 = vld [vmem:[#allocation2 + $0x78] sm:$0xff]
  %v1900 = vld [vmem:[#allocation2 + $0xd0] sm:$0xff]
  %v1901 = vld [vmem:[#allocation2 + $0x128] sm:$0xff]
  %1902 = vst [vmem:[#allocation3 + $0x80] sm:$0xff] %v1898
  %1903 = vst [vmem:[#allocation3 + $0x88] sm:$0xff] %v1899
  %1904 = vst [vmem:[#allocation3 + $0x90] sm:$0xff] %v1900
  %1905 = vst [vmem:[#allocation3 + $0x98] sm:$0xff] %v1901
  %v1906 = vld [vmem:[#allocation2 + $0x28] sm:$0xff]
  %v1907 = vld [vmem:[#allocation2 + $0x80] sm:$0xff]
  %v1908 = vld [vmem:[#allocation2 + $0xd8] sm:$0xff]
  %v1909 = vld [vmem:[#allocation2 + $0x130] sm:$0xff]
  %1910 = vst [vmem:[#allocation3 + $0xa0] sm:$0xff] %v1906
  %1911 = vst [vmem:[#allocation3 + $0xa8] sm:$0xff] %v1907
  %1912 = vst [vmem:[#allocation3 + $0xb0] sm:$0xff] %v1908
  %1913 = vst [vmem:[#allocation3 + $0xb8] sm:$0xff] %v1909
  %v1914 = vld [vmem:[#allocation2 + $0x30] sm:$0xff]
  %v1915 = vld [vmem:[#allocation2 + $0x88] sm:$0xff]
  %v1916 = vld [vmem:[#allocation2 + $0xe0] sm:$0xff]
  %v1917 = vld [vmem:[#allocation2 + $0x138] sm:$0xff]
  %1918 = vst [vmem:[#allocation3 + $0xc0] sm:$0xff] %v1914
  %1919 = vst [vmem:[#allocation3 + $0xc8] sm:$0xff] %v1915
  %1920 = vst [vmem:[#allocation3 + $0xd0] sm:$0xff] %v1916
  %1921 = vst [vmem:[#allocation3 + $0xd8] sm:$0xff] %v1917
  %v1922 = vld [vmem:[#allocation2 + $0x38] sm:$0xff]
  %v1923 = vld [vmem:[#allocation2 + $0x90] sm:$0xff]
  %v1924 = vld [vmem:[#allocation2 + $0xe8] sm:$0xff]
  %v1925 = vld [vmem:[#allocation2 + $0x140] sm:$0xff]
  %1926 = vst [vmem:[#allocation3 + $0xe0] sm:$0xff] %v1922
  %1927 = vst [vmem:[#allocation3 + $0xe8] sm:$0xff] %v1923
  %1928 = vst [vmem:[#allocation3 + $0xf0] sm:$0xff] %v1924
  %1929 = vst [vmem:[#allocation3 + $0xf8] sm:$0xff] %v1925
  %v1930 = vld [vmem:[#allocation2 + $0x40] sm:$0xff]
  %v1931 = vld [vmem:[#allocation2 + $0x98] sm:$0xff]
  %v1932 = vld [vmem:[#allocation2 + $0xf0] sm:$0xff]
  %v1933 = vld [vmem:[#allocation2 + $0x148] sm:$0xff]
  %1934 = vst [vmem:[#allocation3 + $0x100] sm:$0xff] %v1930
  %1935 = vst [vmem:[#allocation3 + $0x108] sm:$0xff] %v1931
  %1936 = vst [vmem:[#allocation3 + $0x110] sm:$0xff] %v1932
  %1937 = vst [vmem:[#allocation3 + $0x118] sm:$0xff] %v1933
  %v1938 = vld [vmem:[#allocation2 + $0x48] sm:$0xff]
  %v1939 = vld [vmem:[#allocation2 + $0xa0] sm:$0xff]
  %v1940 = vld [vmem:[#allocation2 + $0xf8] sm:$0xff]
  %v1941 = vld [vmem:[#allocation2 + $0x150] sm:$0xff]
  %1942 = vst [vmem:[#allocation3 + $0x120] sm:$0xff] %v1938
  %1943 = vst [vmem:[#allocation3 + $0x128] sm:$0xff] %v1939
  %1944 = vst [vmem:[#allocation3 + $0x130] sm:$0xff] %v1940
  %1945 = vst [vmem:[#allocation3 + $0x138] sm:$0xff] %v1941
  %v1946 = vld [vmem:[#allocation2 + $0x50] sm:$0xff]
  %v1947 = vld [vmem:[#allocation2 + $0xa8] sm:$0xff]
  %v1948 = vld [vmem:[#allocation2 + $0x100] sm:$0xff]
  %v1949 = vld [vmem:[#allocation2 + $0x158] sm:$0xff]
  %1950 = vst [vmem:[#allocation3 + $0x140] sm:$0xff] %v1946
  %1951 = vst [vmem:[#allocation3 + $0x148] sm:$0xff] %v1947
  %1952 = vst [vmem:[#allocation3 + $0x150] sm:$0xff] %v1948
  %1953 = vst [vmem:[#allocation3 + $0x158] sm:$0xff] %v1949
  %v1954 = vld [vmem:[%s0] sm:$0xff]
  %v1955 = vld [vmem:[%s0 + $0x8] sm:$0xff]
  %v1956 = vld [vmem:[%s0 + $0x10] sm:$0xff]
  %v1957 = vld [vmem:[%s0 + $0x18] sm:$0xff]
  %v1958 = vld [vmem:[%s0 + $0x20] sm:$0xff]
  %v1959 = vld [vmem:[%s0 + $0x28] sm:$0xff]
  %v1960 = vld [vmem:[%s0 + $0x30] sm:$0xff]
  %v1961 = vld [vmem:[%s0 + $0x38] sm:$0xff]
  %v1962 = vld [vmem:[%s0 + $0x40] sm:$0xff]
  %v1963 = vld [vmem:[%s0 + $0x48] sm:$0xff]
  %v1964 = vld [vmem:[%s0 + $0x50] sm:$0xff]
  %v1965 = vld [vmem:[%s0 + $0x58] sm:$0xff]
  %v1966 = vld [vmem:[#allocation3] sm:$0xff]
  %v1967 = vld [vmem:[#allocation3 + $0x8] sm:$0xff]
  %v1968 = vld [vmem:[#allocation3 + $0x10] sm:$0xff]
  %v1969 = vld [vmem:[#allocation3 + $0x18] sm:$0xff]
  %v1970 = vld [vmem:[#allocation3 + $0x20] sm:$0xff]
  %v1971 = vld [vmem:[#allocation3 + $0x28] sm:$0xff]
  %v1972 = vld [vmem:[#allocation3 + $0x30] sm:$0xff]
  %v1973 = vld [vmem:[#allocation3 + $0x38] sm:$0xff]
  %v1974 = vld [vmem:[#allocation3 + $0x40] sm:$0xff]
  %v1975 = vld [vmem:[#allocation3 + $0x48] sm:$0xff]
  %v1976 = vld [vmem:[#allocation3 + $0x50] sm:$0xff]
  %v1977 = vld [vmem:[#allocation3 + $0x58] sm:$0xff]
  %v1978 = vld [vmem:[#allocation3 + $0x60] sm:$0xff]
  %v1979 = vld [vmem:[#allocation3 + $0x68] sm:$0xff]
  %v1980 = vld [vmem:[#allocation3 + $0x70] sm:$0xff]
  %v1981 = vld [vmem:[#allocation3 + $0x78] sm:$0xff]
  %v1982 = vld [vmem:[#allocation3 + $0x80] sm:$0xff]
  %v1983 = vld [vmem:[#allocation3 + $0x88] sm:$0xff]
  %v1984 = vld [vmem:[#allocation3 + $0x90] sm:$0xff]
  %v1985 = vld [vmem:[#allocation3 + $0x98] sm:$0xff]
  %v1986 = vld [vmem:[#allocation3 + $0xa0] sm:$0xff]
  %v1987 = vld [vmem:[#allocation3 + $0xa8] sm:$0xff]
  %v1988 = vld [vmem:[#allocation3 + $0xb0] sm:$0xff]
  %v1989 = vld [vmem:[#allocation3 + $0xb8] sm:$0xff]
  %v1990 = vld [vmem:[#allocation3 + $0xc0] sm:$0xff]
  %v1991 = vld [vmem:[#allocation3 + $0xc8] sm:$0xff]
  %v1992 = vld [vmem:[#allocation3 + $0xd0] sm:$0xff]
  %v1993 = vld [vmem:[#allocation3 + $0xd8] sm:$0xff]
  %v1994 = vld [vmem:[#allocation3 + $0xe0] sm:$0xff]
  %v1995 = vld [vmem:[#allocation3 + $0xe8] sm:$0xff]
  %v1996 = vld [vmem:[#allocation3 + $0xf0] sm:$0xff]
  %v1997 = vld [vmem:[#allocation3 + $0xf8] sm:$0xff]
  %v1998 = vld [vmem:[#allocation3 + $0x100] sm:$0xff]
  %v1999 = vld [vmem:[#allocation3 + $0x108] sm:$0xff]
  %v2000 = vld [vmem:[#allocation3 + $0x110] sm:$0xff]
  %v2001 = vld [vmem:[#allocation3 + $0x118] sm:$0xff]
  %v2002 = vld [vmem:[#allocation3 + $0x120] sm:$0xff]
  %v2003 = vld [vmem:[#allocation3 + $0x128] sm:$0xff]
  %v2004 = vld [vmem:[#allocation3 + $0x130] sm:$0xff]
  %v2005 = vld [vmem:[#allocation3 + $0x138] sm:$0xff]
  %v2006 = vld [vmem:[#allocation3 + $0x140] sm:$0xff]
  %v2007 = vld [vmem:[#allocation3 + $0x148] sm:$0xff]
  %v2008 = vld [vmem:[#allocation3 + $0x150] sm:$0xff]
  %v2009 = vld [vmem:[#allocation3 + $0x158] sm:$0xff]
  %v2010 = vld [vmem:[#allocation3 + $0x160] sm:$0xff]
  %v2011 = vld [vmem:[#allocation3 + $0x168] sm:$0xff]
  %v2012 = vld [vmem:[#allocation3 + $0x170] sm:$0xff]
  %v2013 = vld [vmem:[#allocation3 + $0x178] sm:$0xff]
  %v2014 = vld [vmem:[%s5] sm:$0x1]
  %v2016 = vlaneseq
  %v2017 = vshrl.u32 %v2016, 7
  %v2018 = vsub.s32 0, %v2017
  %v2019 = vrot.slane %v2014, %v2018
  %2021 = vmatprep.subr.mxu0 0.0
  %2022 = vmatpush1.msra.mxu0 %v1966
  %2023 = vmatprep.subr.mxu0 0.0
  %2024 = vmatpush1.msra.mxu0 %v1967
  %2025 = vmatprep.subr.mxu0 0.0
  %2026 = vmatpush1.msra.mxu0 %v1968
  %2027 = vmatprep.subr.mxu0 0.0
  %2028 = vmatpush1.msra.mxu0 %v1969
  %2029 = vmatprep.subr.mxu0 0.0
  %2030 = vmatpush1.msra.mxu0 %v1970
  %2031 = vmatprep.subr.mxu0 0.0
  %2032 = vmatpush1.msra.mxu0 %v1971
  %2033 = vmatprep.subr.mxu0 0.0
  %2034 = vmatpush1.msra.mxu0 %v1972
  %2035 = vmatprep.subr.mxu0 0.0
  %2036 = vmatpush1.msra.mxu0 %v1973
  %2037 = vmatprep.subr.mxu0 0.0
  %2038 = vmatpush1.msra.mxu0 %v1974
  %2039 = vmatprep.subr.mxu0 0.0
  %2040 = vmatpush1.msra.mxu0 %v1975
  %2041 = vmatprep.subr.mxu0 0.0
  %2042 = vmatpush1.msra.mxu0 %v1976
  %2043 = vmatprep.subr.mxu0 0.0
  %2044 = vmatpush1.msra.mxu0 %v1977
  %2045 = vmatprep.subr.mxu0 0.0
  %2046 = vmatpush1.msra.mxu0 %v1978
  %2047 = vmatprep.subr.mxu0 0.0
  %2048 = vmatpush1.msra.mxu0 %v1979
  %2049 = vmatprep.subr.mxu0 0.0
  %2050 = vmatpush1.msra.mxu0 %v1980
  %2051 = vmatprep.subr.mxu0 0.0
  %2052 = vmatpush1.msra.mxu0 %v1981
  %2053 = vmatprep.subr.mxu0 0.0
  %2054 = vmatpush1.msra.mxu0 %v1982
  %2055 = vmatprep.subr.mxu0 0.0
  %2056 = vmatpush1.msra.mxu0 %v1983
  %2057 = vmatprep.subr.mxu0 0.0
  %2058 = vmatpush1.msra.mxu0 %v1984
  %2059 = vmatprep.subr.mxu0 0.0
  %2060 = vmatpush1.msra.mxu0 %v1985
  %2061 = vmatprep.subr.mxu0 0.0
  %2062 = vmatpush1.msra.mxu0 %v1986
  %2063 = vmatprep.subr.mxu0 0.0
  %2064 = vmatpush1.msra.mxu0 %v1987
  %2065 = vmatprep.subr.mxu0 0.0
  %2066 = vmatpush1.msra.mxu0 %v1988
  %2067 = vmatprep.subr.mxu0 0.0
  %2068 = vmatpush1.msra.mxu0 %v1989
  %2069 = vmatprep.subr.mxu0 0.0
  %2070 = vmatpush1.msra.mxu0 %v1990
  %2071 = vmatprep.subr.mxu0 0.0
  %2072 = vmatpush1.msra.mxu0 %v1991
  %2073 = vmatprep.subr.mxu0 0.0
  %2074 = vmatpush1.msra.mxu0 %v1992
  %2075 = vmatprep.subr.mxu0 0.0
  %2076 = vmatpush1.msra.mxu0 %v1993
  %2077 = vmatprep.subr.mxu0 0.0
  %2078 = vmatpush1.msra.mxu0 %v1994
  %2079 = vmatprep.subr.mxu0 0.0
  %2080 = vmatpush1.msra.mxu0 %v1995
  %2081 = vmatprep.subr.mxu0 0.0
  %2082 = vmatpush1.msra.mxu0 %v1996
  %2083 = vmatprep.subr.mxu0 0.0
  %2084 = vmatpush1.msra.mxu0 %v1997
  %2085 = vmatprep.mubr.f32.mxu0 %v1955
  %2086 = vmatmul.mubr.f32.gmra.mrb[0].mxu0 %v1954
  %v2087 = vpop.f32.mrb[0].mxu0
  %v2088 = vadd.f32 %v2019, %v2087
  %v2089 = vpop.f32.mrb[0].mxu0
  %2090 = vmatprep.mubr.f32.mxu0 %v1958
  %2091 = vmatmul.mubr.f32.gmra.mrb[0].mxu0 %v1957
  %v2092 = vpop.f32.mrb[0].mxu0
  %v2093 = vadd.f32 %v2019, %v2092
  %v2094 = vpop.f32.mrb[0].mxu0
  %2095 = vmatprep.mubr.f32.mxu0 %v1961
  %2096 = vmatmul.mubr.f32.gmra.mrb[0].mxu0 %v1960
  %v2097 = vpop.f32.mrb[0].mxu0
  %v2098 = vadd.f32 %v2019, %v2097
  %v2099 = vpop.f32.mrb[0].mxu0
  %2100 = vmatprep.mubr.f32.mxu0 %v1964
  %2101 = vmatmul.mubr.f32.gmra.mrb[0].mxu0 %v1963
  %v2102 = vpop.f32.mrb[0].mxu0
  %v2103 = vadd.f32 %v2019, %v2102
  %v2104 = vpop.f32.mrb[0].mxu0
  %2105 = vdwg.mxu0
  %2106 = vmatprep.subr.mxu0 0.0
  %2107 = vmatpush1.msra.mxu0 %v1998
  %2108 = vmatprep.subr.mxu0 0.0
  %2109 = vmatpush1.msra.mxu0 %v1999
  %2110 = vmatprep.subr.mxu0 0.0
  %2111 = vmatpush1.msra.mxu0 %v2000
  %2112 = vmatprep.subr.mxu0 0.0
  %2113 = vmatpush1.msra.mxu0 %v2001
  %2114 = vmatprep.subr.mxu0 0.0
  %2115 = vmatpush1.msra.mxu0 %v2002
  %2116 = vmatprep.subr.mxu0 0.0
  %2117 = vmatpush1.msra.mxu0 %v2003
  %2118 = vmatprep.subr.mxu0 0.0
  %2119 = vmatpush1.msra.mxu0 %v2004
  %2120 = vmatprep.subr.mxu0 0.0
  %2121 = vmatpush1.msra.mxu0 %v2005
  %2122 = vmatprep.subr.mxu0 0.0
  %2123 = vmatpush1.msra.mxu0 %v2006
  %2124 = vmatprep.subr.mxu0 0.0
  %2125 = vmatpush1.msra.mxu0 %v2007
  %2126 = vmatprep.subr.mxu0 0.0
  %2127 = vmatpush1.msra.mxu0 %v2008
  %2128 = vmatprep.subr.mxu0 0.0
  %2129 = vmatpush1.msra.mxu0 %v2009
  %2130 = vmatprep.subr.mxu0 0.0
  %2131 = vmatpush1.msra.mxu0 %v2010
  %2132 = vmatprep.subr.mxu0 0.0
  %2133 = vmatpush1.msra.mxu0 %v2011
  %2134 = vmatprep.subr.mxu0 0.0
  %2135 = vmatpush1.msra.mxu0 %v2012
  %2136 = vmatprep.subr.mxu0 0.0
  %2137 = vmatpush1.msra.mxu0 %v2013
  %2138 = vmatprep.subr.mxu0 0.0
  %2139 = vmatpush1.msra.mxu0 0.0
  %2140 = vmatprep.subr.mxu0 0.0
  %2141 = vmatpush1.msra.mxu0 0.0
  %2142 = vmatprep.subr.mxu0 0.0
  %2143 = vmatpush1.msra.mxu0 0.0
  %2144 = vmatprep.subr.mxu0 0.0
  %2145 = vmatpush1.msra.mxu0 0.0
  %2146 = vmatprep.subr.mxu0 0.0
  %2147 = vmatpush1.msra.mxu0 0.0
  %2148 = vmatprep.subr.mxu0 0.0
  %2149 = vmatpush1.msra.mxu0 0.0
  %2150 = vmatprep.subr.mxu0 0.0
  %2151 = vmatpush1.msra.mxu0 0.0
  %2152 = vmatprep.subr.mxu0 0.0
  %2153 = vmatpush1.msra.mxu0 0.0
  %2154 = vmatprep.subr.mxu0 0.0
  %2155 = vmatpush1.msra.mxu0 0.0
  %2156 = vmatprep.subr.mxu0 0.0
  %2157 = vmatpush1.msra.mxu0 0.0
  %2158 = vmatprep.subr.mxu0 0.0
  %2159 = vmatpush1.msra.mxu0 0.0
  %2160 = vmatprep.subr.mxu0 0.0
  %2161 = vmatpush1.msra.mxu0 0.0
  %2162 = vmatprep.subr.mxu0 0.0
  %2163 = vmatpush1.msra.mxu0 0.0
  %2164 = vmatprep.subr.mxu0 0.0
  %2165 = vmatpush1.msra.mxu0 0.0
  %2166 = vmatprep.subr.mxu0 0.0
  %2167 = vmatpush1.msra.mxu0 0.0
  %2168 = vmatprep.subr.mxu0 0.0
  %2169 = vmatpush1.msra.mxu0 0.0
  %2170 = vmatprep.mubr.f32.mxu0 0.0
  %2171 = vmatmul.mubr.f32.gmra.mrb[0].mxu0 %v1956
  %v2172 = vpop.f32.mrb[0].mxu0
  %v2173 = vadd.f32 %v2088, %v2172
  %v2174 = vpop.f32.mrb[0].mxu0
  %2175 = vmatprep.mubr.f32.mxu0 0.0
  %2176 = vmatmul.mubr.f32.gmra.mrb[0].mxu0 %v1959
  %v2177 = vpop.f32.mrb[0].mxu0
  %v2178 = vadd.f32 %v2093, %v2177
  %v2179 = vpop.f32.mrb[0].mxu0
  %2180 = vmatprep.mubr.f32.mxu0 0.0
  %2181 = vmatmul.mubr.f32.gmra.mrb[0].mxu0 %v1962
  %v2182 = vpop.f32.mrb[0].mxu0
  %v2183 = vadd.f32 %v2098, %v2182
  %v2184 = vpop.f32.mrb[0].mxu0
  %2185 = vmatprep.mubr.f32.mxu0 0.0
  %2186 = vmatmul.mubr.f32.gmra.mrb[0].mxu0 %v1965
  %v2187 = vpop.f32.mrb[0].mxu0
  %v2188 = vadd.f32 %v2103, %v2187
  %v2189 = vpop.f32.mrb[0].mxu0
  %2190 = vdwg.mxu0
  %v2191 = vmax.f32 %v2173, 0.0
  %v2192 = vmax.f32 %v2178, 0.0
  %v2193 = vmax.f32 %v2183, 0.0
  %v2194 = vmax.f32 %v2188, 0.0
  %v2195 = vld [vmem:[%s6] sm:$0xff]
  %v2196 = vld [vmem:[%s6 + $0x8] sm:$0xff]
  %v2197 = vld [vmem:[%s6 + $0x10] sm:$0xff]
  %v2198 = vld [vmem:[%s6 + $0x18] sm:$0xff]
  %v2199 = vld [vmem:[%s6 + $0x20] sm:$0xff]
  %v2200 = vld [vmem:[%s6 + $0x28] sm:$0xff]
  %v2201 = vld [vmem:[%s6 + $0x30] sm:$0xff]
  %v2202 = vld [vmem:[%s6 + $0x38] sm:$0xff]
  %v2203 = vld [vmem:[%s6 + $0x40] sm:$0xff]
  %v2204 = vld [vmem:[%s6 + $0x48] sm:$0xff]
  %v2205 = vld [vmem:[%s6 + $0x50] sm:$0xff]
  %v2206 = vld [vmem:[%s6 + $0x58] sm:$0xff]
  %v2207 = vld [vmem:[%s6 + $0x60] sm:$0xff]
  %v2208 = vld [vmem:[%s6 + $0x68] sm:$0xff]
  %v2209 = vld [vmem:[%s6 + $0x70] sm:$0xff]
  %v2210 = vld [vmem:[%s6 + $0x78] sm:$0xff]
  %v2211 = vld [vmem:[%s6 + $0x80] sm:$0xff]
  %v2212 = vld [vmem:[%s6 + $0x88] sm:$0xff]
  %v2213 = vld [vmem:[%s6 + $0x90] sm:$0xff]
  %v2214 = vld [vmem:[%s6 + $0x98] sm:$0xff]
  %v2215 = vld [vmem:[%s6 + $0xa0] sm:$0xff]
  %v2216 = vld [vmem:[%s6 + $0xa8] sm:$0xff]
  %v2217 = vld [vmem:[%s6 + $0xb0] sm:$0xff]
  %v2218 = vld [vmem:[%s6 + $0xb8] sm:$0xff]
  %v2219 = vld [vmem:[%s6 + $0xc0] sm:$0xff]
  %v2220 = vld [vmem:[%s6 + $0xc8] sm:$0xff]
  %v2221 = vld [vmem:[%s6 + $0xd0] sm:$0xff]
  %v2222 = vld [vmem:[%s6 + $0xd8] sm:$0xff]
  %v2223 = vld [vmem:[%s6 + $0xe0] sm:$0xff]
  %v2224 = vld [vmem:[%s6 + $0xe8] sm:$0xff]
  %v2225 = vld [vmem:[%s6 + $0xf0] sm:$0xff]
  %v2226 = vld [vmem:[%s6 + $0xf8] sm:$0xff]
  %v2227 = vld [vmem:[%s6 + $0x100] sm:$0xff]
  %v2228 = vld [vmem:[%s6 + $0x108] sm:$0xff]
  %v2229 = vld [vmem:[%s6 + $0x110] sm:$0xff]
  %v2230 = vld [vmem:[%s6 + $0x118] sm:$0xff]
  %v2231 = vld [vmem:[%s6 + $0x120] sm:$0xff]
  %v2232 = vld [vmem:[%s6 + $0x128] sm:$0xff]
  %v2233 = vld [vmem:[%s6 + $0x130] sm:$0xff]
  %v2234 = vld [vmem:[%s6 + $0x138] sm:$0xff]
  %v2235 = vld [vmem:[%s6 + $0x140] sm:$0xff]
  %v2236 = vld [vmem:[%s6 + $0x148] sm:$0xff]
  %v2237 = vld [vmem:[%s6 + $0x150] sm:$0xff]
  %v2238 = vld [vmem:[%s6 + $0x158] sm:$0xff]
  %v2239 = vld [vmem:[%s6 + $0x160] sm:$0xff]
  %v2240 = vld [vmem:[%s6 + $0x168] sm:$0xff]
  %v2241 = vld [vmem:[%s6 + $0x170] sm:$0xff]
  %v2242 = vld [vmem:[%s6 + $0x178] sm:$0xff]
  %v2243 = vld [vmem:[%s6 + $0x180] sm:$0xff]
  %v2244 = vld [vmem:[%s6 + $0x188] sm:$0xff]
  %v2245 = vld [vmem:[%s6 + $0x190] sm:$0xff]
  %v2246 = vld [vmem:[%s6 + $0x198] sm:$0xff]
  %v2247 = vld [vmem:[%s6 + $0x1a0] sm:$0xff]
  %v2248 = vld [vmem:[%s6 + $0x1a8] sm:$0xff]
  %v2249 = vld [vmem:[%s6 + $0x1b0] sm:$0xff]
  %v2250 = vld [vmem:[%s6 + $0x1b8] sm:$0xff]
  %v2251 = vld [vmem:[%s6 + $0x1c0] sm:$0xff]
  %v2252 = vld [vmem:[%s6 + $0x1c8] sm:$0xff]
  %v2253 = vld [vmem:[%s6 + $0x1d0] sm:$0xff]
  %v2254 = vld [vmem:[%s6 + $0x1d8] sm:$0xff]
  %v2255 = vld [vmem:[%s6 + $0x1e0] sm:$0xff]
  %v2256 = vld [vmem:[%s6 + $0x1e8] sm:$0xff]
  %v2257 = vld [vmem:[%s6 + $0x1f0] sm:$0xff]
  %v2258 = vld [vmem:[%s6 + $0x1f8] sm:$0xff]
  %v2259 = vld [vmem:[%s6 + $0x200] sm:$0xff]
  %v2260 = vld [vmem:[%s6 + $0x208] sm:$0xff]
  %v2261 = vld [vmem:[%s6 + $0x210] sm:$0xff]
  %v2262 = vld [vmem:[%s6 + $0x218] sm:$0xff]
  %v2263 = vld [vmem:[%s6 + $0x220] sm:$0xff]
  %v2264 = vld [vmem:[%s6 + $0x228] sm:$0xff]
  %v2265 = vld [vmem:[%s6 + $0x230] sm:$0xff]
  %v2266 = vld [vmem:[%s6 + $0x238] sm:$0xff]
  %v2267 = vld [vmem:[%s6 + $0x240] sm:$0xff]
  %v2268 = vld [vmem:[%s6 + $0x248] sm:$0xff]
  %v2269 = vld [vmem:[%s6 + $0x250] sm:$0xff]
  %v2270 = vld [vmem:[%s6 + $0x258] sm:$0xff]
  %v2271 = vld [vmem:[%s6 + $0x260] sm:$0xff]
  %v2272 = vld [vmem:[%s6 + $0x268] sm:$0xff]
  %v2273 = vld [vmem:[%s6 + $0x270] sm:$0xff]
  %v2274 = vld [vmem:[%s6 + $0x278] sm:$0xff]
  %v2275 = vld [vmem:[%s6 + $0x280] sm:$0xff]
  %v2276 = vld [vmem:[%s6 + $0x288] sm:$0xff]
  %v2277 = vld [vmem:[%s6 + $0x290] sm:$0xff]
  %v2278 = vld [vmem:[%s6 + $0x298] sm:$0xff]
  %v2279 = vld [vmem:[%s6 + $0x2a0] sm:$0xff]
  %v2280 = vld [vmem:[%s6 + $0x2a8] sm:$0xff]
  %v2281 = vld [vmem:[%s6 + $0x2b0] sm:$0xff]
  %v2282 = vld [vmem:[%s6 + $0x2b8] sm:$0xff]
  %v2283 = vld [vmem:[%s6 + $0x2c0] sm:$0xff]
  %v2284 = vld [vmem:[%s6 + $0x2c8] sm:$0xff]
  %v2285 = vld [vmem:[%s6 + $0x2d0] sm:$0xff]
  %v2286 = vld [vmem:[%s6 + $0x2d8] sm:$0xff]
  %v2287 = vld [vmem:[%s6 + $0x2e0] sm:$0xff]
  %v2288 = vld [vmem:[%s6 + $0x2e8] sm:$0xff]
  %v2289 = vld [vmem:[%s6 + $0x2f0] sm:$0xff]
  %v2290 = vld [vmem:[%s6 + $0x2f8] sm:$0xff]
  %v2291 = vld [vmem:[%s6 + $0x300] sm:$0xff]
  %v2292 = vld [vmem:[%s6 + $0x308] sm:$0xff]
  %v2293 = vld [vmem:[%s6 + $0x310] sm:$0xff]
  %v2294 = vld [vmem:[%s6 + $0x318] sm:$0xff]
  %v2295 = vld [vmem:[%s6 + $0x320] sm:$0xff]
  %v2296 = vld [vmem:[%s6 + $0x328] sm:$0xff]
  %v2297 = vld [vmem:[%s6 + $0x330] sm:$0xff]
  %v2298 = vld [vmem:[%s6 + $0x338] sm:$0xff]
  %v2299 = vld [vmem:[%s6 + $0x340] sm:$0xff]
  %v2300 = vld [vmem:[%s6 + $0x348] sm:$0xff]
  %v2301 = vld [vmem:[%s6 + $0x350] sm:$0xff]
  %v2302 = vld [vmem:[%s6 + $0x358] sm:$0xff]
  %v2303 = vld [vmem:[%s6 + $0x360] sm:$0xff]
  %v2304 = vld [vmem:[%s6 + $0x368] sm:$0xff]
  %v2305 = vld [vmem:[%s6 + $0x370] sm:$0xff]
  %v2306 = vld [vmem:[%s6 + $0x378] sm:$0xff]
  %v2307 = vld [vmem:[%s6 + $0x380] sm:$0xff]
  %v2308 = vld [vmem:[%s6 + $0x388] sm:$0xff]
  %v2309 = vld [vmem:[%s6 + $0x390] sm:$0xff]
  %v2310 = vld [vmem:[%s6 + $0x398] sm:$0xff]
  %v2311 = vld [vmem:[%s6 + $0x3a0] sm:$0xff]
  %v2312 = vld [vmem:[%s6 + $0x3a8] sm:$0xff]
  %v2313 = vld [vmem:[%s6 + $0x3b0] sm:$0xff]
  %v2314 = vld [vmem:[%s6 + $0x3b8] sm:$0xff]
  %v2315 = vld [vmem:[%s6 + $0x3c0] sm:$0xff]
  %v2316 = vld [vmem:[%s6 + $0x3c8] sm:$0xff]
  %v2317 = vld [vmem:[%s6 + $0x3d0] sm:$0xff]
  %v2318 = vld [vmem:[%s6 + $0x3d8] sm:$0xff]
  %v2319 = vld [vmem:[%s6 + $0x3e0] sm:$0xff]
  %v2320 = vld [vmem:[%s6 + $0x3e8] sm:$0xff]
  %v2321 = vld [vmem:[%s6 + $0x3f0] sm:$0xff]
  %v2322 = vld [vmem:[%s6 + $0x3f8] sm:$0xff]
  %v2323 = vld [vmem:[%s6 + $0x400] sm:$0xff]
  %v2324 = vld [vmem:[%s6 + $0x408] sm:$0xff]
  %v2325 = vld [vmem:[%s6 + $0x410] sm:$0xff]
  %v2326 = vld [vmem:[%s6 + $0x418] sm:$0xff]
  %v2327 = vld [vmem:[%s6 + $0x420] sm:$0xff]
  %v2328 = vld [vmem:[%s6 + $0x428] sm:$0xff]
  %v2329 = vld [vmem:[%s6 + $0x430] sm:$0xff]
  %v2330 = vld [vmem:[%s6 + $0x438] sm:$0xff]
  %v2331 = vld [vmem:[%s6 + $0x440] sm:$0xff]
  %v2332 = vld [vmem:[%s6 + $0x448] sm:$0xff]
  %v2333 = vld [vmem:[%s6 + $0x450] sm:$0xff]
  %v2334 = vld [vmem:[%s6 + $0x458] sm:$0xff]
  %v2335 = vld [vmem:[%s6 + $0x460] sm:$0xff]
  %v2336 = vld [vmem:[%s6 + $0x468] sm:$0xff]
  %v2337 = vld [vmem:[%s6 + $0x470] sm:$0xff]
  %v2338 = vld [vmem:[%s6 + $0x478] sm:$0xff]
  %v2339 = vld [vmem:[%s6 + $0x480] sm:$0xff]
  %v2340 = vld [vmem:[%s6 + $0x488] sm:$0xff]
  %v2341 = vld [vmem:[%s6 + $0x490] sm:$0xff]
  %v2342 = vld [vmem:[%s6 + $0x498] sm:$0xff]
  %v2343 = vld [vmem:[%s6 + $0x4a0] sm:$0xff]
  %v2344 = vld [vmem:[%s6 + $0x4a8] sm:$0xff]
  %v2345 = vld [vmem:[%s6 + $0x4b0] sm:$0xff]
  %v2346 = vld [vmem:[%s6 + $0x4b8] sm:$0xff]
  %v2347 = vld [vmem:[%s6 + $0x4c0] sm:$0xff]
  %v2348 = vld [vmem:[%s6 + $0x4c8] sm:$0xff]
  %v2349 = vld [vmem:[%s6 + $0x4d0] sm:$0xff]
  %v2350 = vld [vmem:[%s6 + $0x4d8] sm:$0xff]
  %v2351 = vld [vmem:[%s6 + $0x4e0] sm:$0xff]
  %v2352 = vld [vmem:[%s6 + $0x4e8] sm:$0xff]
  %v2353 = vld [vmem:[%s6 + $0x4f0] sm:$0xff]
  %v2354 = vld [vmem:[%s6 + $0x4f8] sm:$0xff]
  %v2355 = vld [vmem:[%s6 + $0x500] sm:$0xff]
  %v2356 = vld [vmem:[%s6 + $0x508] sm:$0xff]
  %v2357 = vld [vmem:[%s6 + $0x510] sm:$0xff]
  %v2358 = vld [vmem:[%s6 + $0x518] sm:$0xff]
  %v2359 = vld [vmem:[%s6 + $0x520] sm:$0xff]
  %v2360 = vld [vmem:[%s6 + $0x528] sm:$0xff]
  %v2361 = vld [vmem:[%s6 + $0x530] sm:$0xff]
  %v2362 = vld [vmem:[%s6 + $0x538] sm:$0xff]
  %v2363 = vld [vmem:[%s6 + $0x540] sm:$0xff]
  %v2364 = vld [vmem:[%s6 + $0x548] sm:$0xff]
  %v2365 = vld [vmem:[%s6 + $0x550] sm:$0xff]
  %v2366 = vld [vmem:[%s6 + $0x558] sm:$0xff]
  %v2367 = vld [vmem:[%s6 + $0x560] sm:$0xff]
  %v2368 = vld [vmem:[%s6 + $0x568] sm:$0xff]
  %v2369 = vld [vmem:[%s6 + $0x570] sm:$0xff]
  %v2370 = vld [vmem:[%s6 + $0x578] sm:$0xff]
  %2371 = vmatprep.subr.mxu0 %v2196
  %2372 = vmatpush1.msra.mxu0 %v2195
  %2373 = vmatprep.subr.mxu0 %v2207
  %2374 = vmatpush1.msra.mxu0 %v2206
  %2375 = vmatprep.subr.mxu0 %v2218
  %2376 = vmatpush1.msra.mxu0 %v2217
  %2377 = vmatprep.subr.mxu0 %v2229
  %2378 = vmatpush1.msra.mxu0 %v2228
  %2379 = vmatprep.subr.mxu0 %v2240
  %2380 = vmatpush1.msra.mxu0 %v2239
  %2381 = vmatprep.subr.mxu0 %v2251
  %2382 = vmatpush1.msra.mxu0 %v2250
  %2383 = vmatprep.subr.mxu0 %v2262
  %2384 = vmatpush1.msra.mxu0 %v2261
  %2385 = vmatprep.subr.mxu0 %v2273
  %2386 = vmatpush1.msra.mxu0 %v2272
  %2387 = vmatprep.subr.mxu0 %v2284
  %2388 = vmatpush1.msra.mxu0 %v2283
  %2389 = vmatprep.subr.mxu0 %v2295
  %2390 = vmatpush1.msra.mxu0 %v2294
  %2391 = vmatprep.subr.mxu0 %v2306
  %2392 = vmatpush1.msra.mxu0 %v2305
  %2393 = vmatprep.subr.mxu0 %v2317
  %2394 = vmatpush1.msra.mxu0 %v2316
  %2395 = vmatprep.subr.mxu0 %v2328
  %2396 = vmatpush1.msra.mxu0 %v2327
  %2397 = vmatprep.subr.mxu0 %v2339
  %2398 = vmatpush1.msra.mxu0 %v2338
  %2399 = vmatprep.subr.mxu0 %v2350
  %2400 = vmatpush1.msra.mxu0 %v2349
  %2401 = vmatprep.subr.mxu0 %v2361
  %2402 = vmatpush1.msra.mxu0 %v2360
  %2403 = vmatprep.subr.mxu0 0.0
  %2404 = vmatpush1.msra.mxu0 0.0
  %2405 = vmatprep.subr.mxu0 0.0
  %2406 = vmatpush1.msra.mxu0 0.0
  %2407 = vmatprep.subr.mxu0 0.0
  %2408 = vmatpush1.msra.mxu0 0.0
  %2409 = vmatprep.subr.mxu0 0.0
  %2410 = vmatpush1.msra.mxu0 0.0
  %2411 = vmatprep.subr.mxu0 0.0
  %2412 = vmatpush1.msra.mxu0 0.0
  %2413 = vmatprep.subr.mxu0 0.0
  %2414 = vmatpush1.msra.mxu0 0.0
  %2415 = vmatprep.subr.mxu0 0.0
  %2416 = vmatpush1.msra.mxu0 0.0
  %2417 = vmatprep.subr.mxu0 0.0
  %2418 = vmatpush1.msra.mxu0 0.0
  %2419 = vmatprep.subr.mxu0 0.0
  %2420 = vmatpush1.msra.mxu0 0.0
  %2421 = vmatprep.subr.mxu0 0.0
  %2422 = vmatpush1.msra.mxu0 0.0
  %2423 = vmatprep.subr.mxu0 0.0
  %2424 = vmatpush1.msra.mxu0 0.0
  %2425 = vmatprep.subr.mxu0 0.0
  %2426 = vmatpush1.msra.mxu0 0.0
  %2427 = vmatprep.subr.mxu0 0.0
  %2428 = vmatpush1.msra.mxu0 0.0
  %2429 = vmatprep.subr.mxu0 0.0
  %2430 = vmatpush1.msra.mxu0 0.0
  %2431 = vmatprep.subr.mxu0 0.0
  %2432 = vmatpush1.msra.mxu0 0.0
  %2433 = vmatprep.subr.mxu0 0.0
  %2434 = vmatpush1.msra.mxu0 0.0
  %2435 = vmatprep.mubr.f32.mxu0 0.0
  %2436 = vmatmul.mubr.f32.gmra.mrb[0].mxu0 %v2191
  %v2437 = vpop.f32.mrb[0].mxu0
  %v2438 = vadd.f32 0.0, %v2437
  %v2439 = vpop.f32.mrb[0].mxu0
  %v2440 = vadd.f32 0.0, %v2439
  %2441 = vmatprep.mubr.f32.mxu0 0.0
  %2442 = vmatmul.mubr.f32.gmra.mrb[0].mxu0 %v2192
  %v2443 = vpop.f32.mrb[0].mxu0
  %v2444 = vadd.f32 0.0, %v2443
  %v2445 = vpop.f32.mrb[0].mxu0
  %v2446 = vadd.f32 0.0, %v2445
  %2447 = vmatprep.mubr.f32.mxu0 0.0
  %2448 = vmatmul.mubr.f32.gmra.mrb[0].mxu0 %v2193
  %v2449 = vpop.f32.mrb[0].mxu0
  %v2450 = vadd.f32 0.0, %v2449
  %v2451 = vpop.f32.mrb[0].mxu0
  %v2452 = vadd.f32 0.0, %v2451
  %2453 = vmatprep.mubr.f32.mxu0 0.0
  %2454 = vmatmul.mubr.f32.gmra.mrb[0].mxu0 %v2194
  %v2455 = vpop.f32.mrb[0].mxu0
  %v2456 = vadd.f32 0.0, %v2455
  %v2457 = vpop.f32.mrb[0].mxu0
  %v2458 = vadd.f32 0.0, %v2457
  %2459 = vdwg.mxu0
  %2460 = vmatprep.subr.mxu0 %v2198
  %2461 = vmatpush1.msra.mxu0 %v2197
  %2462 = vmatprep.subr.mxu0 %v2209
  %2463 = vmatpush1.msra.mxu0 %v2208
  %2464 = vmatprep.subr.mxu0 %v2220
  %2465 = vmatpush1.msra.mxu0 %v2219
  %2466 = vmatprep.subr.mxu0 %v2231
  %2467 = vmatpush1.msra.mxu0 %v2230
  %2468 = vmatprep.subr.mxu0 %v2242
  %2469 = vmatpush1.msra.mxu0 %v2241
  %2470 = vmatprep.subr.mxu0 %v2253
  %2471 = vmatpush1.msra.mxu0 %v2252
  %2472 = vmatprep.subr.mxu0 %v2264
  %2473 = vmatpush1.msra.mxu0 %v2263
  %2474 = vmatprep.subr.mxu0 %v2275
  %2475 = vmatpush1.msra.mxu0 %v2274
  %2476 = vmatprep.subr.mxu0 %v2286
  %2477 = vmatpush1.msra.mxu0 %v2285
  %2478 = vmatprep.subr.mxu0 %v2297
  %2479 = vmatpush1.msra.mxu0 %v2296
  %2480 = vmatprep.subr.mxu0 %v2308
  %2481 = vmatpush1.msra.mxu0 %v2307
  %2482 = vmatprep.subr.mxu0 %v2319
  %2483 = vmatpush1.msra.mxu0 %v2318
  %2484 = vmatprep.subr.mxu0 %v2330
  %2485 = vmatpush1.msra.mxu0 %v2329
  %2486 = vmatprep.subr.mxu0 %v2341
  %2487 = vmatpush1.msra.mxu0 %v2340
  %2488 = vmatprep.subr.mxu0 %v2352
  %2489 = vmatpush1.msra.mxu0 %v2351
  %2490 = vmatprep.subr.mxu0 %v2363
  %2491 = vmatpush1.msra.mxu0 %v2362
  %2492 = vmatprep.subr.mxu0 0.0
  %2493 = vmatpush1.msra.mxu0 0.0
  %2494 = vmatprep.subr.mxu0 0.0
  %2495 = vmatpush1.msra.mxu0 0.0
  %2496 = vmatprep.subr.mxu0 0.0
  %2497 = vmatpush1.msra.mxu0 0.0
  %2498 = vmatprep.subr.mxu0 0.0
  %2499 = vmatpush1.msra.mxu0 0.0
  %2500 = vmatprep.subr.mxu0 0.0
  %2501 = vmatpush1.msra.mxu0 0.0
  %2502 = vmatprep.subr.mxu0 0.0
  %2503 = vmatpush1.msra.mxu0 0.0
  %2504 = vmatprep.subr.mxu0 0.0
  %2505 = vmatpush1.msra.mxu0 0.0
  %2506 = vmatprep.subr.mxu0 0.0
  %2507 = vmatpush1.msra.mxu0 0.0
  %2508 = vmatprep.subr.mxu0 0.0
  %2509 = vmatpush1.msra.mxu0 0.0
  %2510 = vmatprep.subr.mxu0 0.0
  %2511 = vmatpush1.msra.mxu0 0.0
  %2512 = vmatprep.subr.mxu0 0.0
  %2513 = vmatpush1.msra.mxu0 0.0
  %2514 = vmatprep.subr.mxu0 0.0
  %2515 = vmatpush1.msra.mxu0 0.0
  %2516 = vmatprep.subr.mxu0 0.0
  %2517 = vmatpush1.msra.mxu0 0.0
  %2518 = vmatprep.subr.mxu0 0.0
  %2519 = vmatpush1.msra.mxu0 0.0
  %2520 = vmatprep.subr.mxu0 0.0
  %2521 = vmatpush1.msra.mxu0 0.0
  %2522 = vmatprep.subr.mxu0 0.0
  %2523 = vmatpush1.msra.mxu0 0.0
  %2524 = vmatprep.mubr.f32.mxu0 0.0
  %2525 = vmatmul.mubr.f32.gmra.mrb[0].mxu0 %v2191
  %v2526 = vpop.f32.mrb[0].mxu0
  %v2527 = vadd.f32 0.0, %v2526
  %v2528 = vpop.f32.mrb[0].mxu0
  %v2529 = vadd.f32 0.0, %v2528
  %2530 = vmatprep.mubr.f32.mxu0 0.0
  %2531 = vmatmul.mubr.f32.gmra.mrb[0].mxu0 %v2192
  %v2532 = vpop.f32.mrb[0].mxu0
  %v2533 = vadd.f32 0.0, %v2532
  %v2534 = vpop.f32.mrb[0].mxu0
  %v2535 = vadd.f32 0.0, %v2534
  %2536 = vmatprep.mubr.f32.mxu0 0.0
  %2537 = vmatmul.mubr.f32.gmra.mrb[0].mxu0 %v2193
  %v2538 = vpop.f32.mrb[0].mxu0
  %v2539 = vadd.f32 0.0, %v2538
  %v2540 = vpop.f32.mrb[0].mxu0
  %v2541 = vadd.f32 0.0, %v2540
  %2542 = vmatprep.mubr.f32.mxu0 0.0
  %2543 = vmatmul.mubr.f32.gmra.mrb[0].mxu0 %v2194
  %v2544 = vpop.f32.mrb[0].mxu0
  %v2545 = vadd.f32 0.0, %v2544
  %v2546 = vpop.f32.mrb[0].mxu0
  %v2547 = vadd.f32 0.0, %v2546
  %2548 = vdwg.mxu0
  %2549 = vmatprep.subr.mxu0 %v2200
  %2550 = vmatpush1.msra.mxu0 %v2199
  %2551 = vmatprep.subr.mxu0 %v2211
  %2552 = vmatpush1.msra.mxu0 %v2210
  %2553 = vmatprep.subr.mxu0 %v2222
  %2554 = vmatpush1.msra.mxu0 %v2221
  %2555 = vmatprep.subr.mxu0 %v2233
  %2556 = vmatpush1.msra.mxu0 %v2232
  %2557 = vmatprep.subr.mxu0 %v2244
  %2558 = vmatpush1.msra.mxu0 %v2243
  %2559 = vmatprep.subr.mxu0 %v2255
  %2560 = vmatpush1.msra.mxu0 %v2254
  %2561 = vmatprep.subr.mxu0 %v2266
  %2562 = vmatpush1.msra.mxu0 %v2265
  %2563 = vmatprep.subr.mxu0 %v2277
  %2564 = vmatpush1.msra.mxu0 %v2276
  %2565 = vmatprep.subr.mxu0 %v2288
  %2566 = vmatpush1.msra.mxu0 %v2287
  %2567 = vmatprep.subr.mxu0 %v2299
  %2568 = vmatpush1.msra.mxu0 %v2298
  %2569 = vmatprep.subr.mxu0 %v2310
  %2570 = vmatpush1.msra.mxu0 %v2309
  %2571 = vmatprep.subr.mxu0 %v2321
  %2572 = vmatpush1.msra.mxu0 %v2320
  %2573 = vmatprep.subr.mxu0 %v2332
  %2574 = vmatpush1.msra.mxu0 %v2331
  %2575 = vmatprep.subr.mxu0 %v2343
  %2576 = vmatpush1.msra.mxu0 %v2342
  %2577 = vmatprep.subr.mxu0 %v2354
  %2578 = vmatpush1.msra.mxu0 %v2353
  %2579 = vmatprep.subr.mxu0 %v2365
  %2580 = vmatpush1.msra.mxu0 %v2364
  %2581 = vmatprep.subr.mxu0 0.0
  %2582 = vmatpush1.msra.mxu0 0.0
  %2583 = vmatprep.subr.mxu0 0.0
  %2584 = vmatpush1.msra.mxu0 0.0
  %2585 = vmatprep.subr.mxu0 0.0
  %2586 = vmatpush1.msra.mxu0 0.0
  %2587 = vmatprep.subr.mxu0 0.0
  %2588 = vmatpush1.msra.mxu0 0.0
  %2589 = vmatprep.subr.mxu0 0.0
  %2590 = vmatpush1.msra.mxu0 0.0
  %2591 = vmatprep.subr.mxu0 0.0
  %2592 = vmatpush1.msra.mxu0 0.0
  %2593 = vmatprep.subr.mxu0 0.0
  %2594 = vmatpush1.msra.mxu0 0.0
  %2595 = vmatprep.subr.mxu0 0.0
  %2596 = vmatpush1.msra.mxu0 0.0
  %2597 = vmatprep.subr.mxu0 0.0
  %2598 = vmatpush1.msra.mxu0 0.0
  %2599 = vmatprep.subr.mxu0 0.0
  %2600 = vmatpush1.msra.mxu0 0.0
  %2601 = vmatprep.subr.mxu0 0.0
  %2602 = vmatpush1.msra.mxu0 0.0
  %2603 = vmatprep.subr.mxu0 0.0
  %2604 = vmatpush1.msra.mxu0 0.0
  %2605 = vmatprep.subr.mxu0 0.0
  %2606 = vmatpush1.msra.mxu0 0.0
  %2607 = vmatprep.subr.mxu0 0.0
  %2608 = vmatpush1.msra.mxu0 0.0
  %2609 = vmatprep.subr.mxu0 0.0
  %2610 = vmatpush1.msra.mxu0 0.0
  %2611 = vmatprep.subr.mxu0 0.0
  %2612 = vmatpush1.msra.mxu0 0.0
  %2613 = vmatprep.mubr.f32.mxu0 0.0
  %2614 = vmatmul.mubr.f32.gmra.mrb[0].mxu0 %v2191
  %v2615 = vpop.f32.mrb[0].mxu0
  %v2616 = vadd.f32 0.0, %v2615
  %v2617 = vpop.f32.mrb[0].mxu0
  %v2618 = vadd.f32 0.0, %v2617
  %2619 = vmatprep.mubr.f32.mxu0 0.0
  %2620 = vmatmul.mubr.f32.gmra.mrb[0].mxu0 %v2192
  %v2621 = vpop.f32.mrb[0].mxu0
  %v2622 = vadd.f32 0.0, %v2621
  %v2623 = vpop.f32.mrb[0].mxu0
  %v2624 = vadd.f32 0.0, %v2623
  %2625 = vmatprep.mubr.f32.mxu0 0.0
  %2626 = vmatmul.mubr.f32.gmra.mrb[0].mxu0 %v2193
  %v2627 = vpop.f32.mrb[0].mxu0
  %v2628 = vadd.f32 0.0, %v2627
  %v2629 = vpop.f32.mrb[0].mxu0
  %v2630 = vadd.f32 0.0, %v2629
  %2631 = vmatprep.mubr.f32.mxu0 0.0
  %2632 = vmatmul.mubr.f32.gmra.mrb[0].mxu0 %v2194
  %v2633 = vpop.f32.mrb[0].mxu0
  %v2634 = vadd.f32 0.0, %v2633
  %v2635 = vpop.f32.mrb[0].mxu0
  %v2636 = vadd.f32 0.0, %v2635
  %2637 = vdwg.mxu0
  %2638 = vmatprep.subr.mxu0 %v2202
  %2639 = vmatpush1.msra.mxu0 %v2201
  %2640 = vmatprep.subr.mxu0 %v2213
  %2641 = vmatpush1.msra.mxu0 %v2212
  %2642 = vmatprep.subr.mxu0 %v2224
  %2643 = vmatpush1.msra.mxu0 %v2223
  %2644 = vmatprep.subr.mxu0 %v2235
  %2645 = vmatpush1.msra.mxu0 %v2234
  %2646 = vmatprep.subr.mxu0 %v2246
  %2647 = vmatpush1.msra.mxu0 %v2245
  %2648 = vmatprep.subr.mxu0 %v2257
  %2649 = vmatpush1.msra.mxu0 %v2256
  %2650 = vmatprep.subr.mxu0 %v2268
  %2651 = vmatpush1.msra.mxu0 %v2267
  %2652 = vmatprep.subr.mxu0 %v2279
  %2653 = vmatpush1.msra.mxu0 %v2278
  %2654 = vmatprep.subr.mxu0 %v2290
  %2655 = vmatpush1.msra.mxu0 %v2289
  %2656 = vmatprep.subr.mxu0 %v2301
  %2657 = vmatpush1.msra.mxu0 %v2300
  %2658 = vmatprep.subr.mxu0 %v2312
  %2659 = vmatpush1.msra.mxu0 %v2311
  %2660 = vmatprep.subr.mxu0 %v2323
  %2661 = vmatpush1.msra.mxu0 %v2322
  %2662 = vmatprep.subr.mxu0 %v2334
  %2663 = vmatpush1.msra.mxu0 %v2333
  %2664 = vmatprep.subr.mxu0 %v2345
  %2665 = vmatpush1.msra.mxu0 %v2344
  %2666 = vmatprep.subr.mxu0 %v2356
  %2667 = vmatpush1.msra.mxu0 %v2355
  %2668 = vmatprep.subr.mxu0 %v2367
  %2669 = vmatpush1.msra.mxu0 %v2366
  %2670 = vmatprep.subr.mxu0 0.0
  %2671 = vmatpush1.msra.mxu0 0.0
  %2672 = vmatprep.subr.mxu0 0.0
  %2673 = vmatpush1.msra.mxu0 0.0
  %2674 = vmatprep.subr.mxu0 0.0
  %2675 = vmatpush1.msra.mxu0 0.0
  %2676 = vmatprep.subr.mxu0 0.0
  %2677 = vmatpush1.msra.mxu0 0.0
  %2678 = vmatprep.subr.mxu0 0.0
  %2679 = vmatpush1.msra.mxu0 0.0
  %2680 = vmatprep.subr.mxu0 0.0
  %2681 = vmatpush1.msra.mxu0 0.0
  %2682 = vmatprep.subr.mxu0 0.0
  %2683 = vmatpush1.msra.mxu0 0.0
  %2684 = vmatprep.subr.mxu0 0.0
  %2685 = vmatpush1.msra.mxu0 0.0
  %2686 = vmatprep.subr.mxu0 0.0
  %2687 = vmatpush1.msra.mxu0 0.0
  %2688 = vmatprep.subr.mxu0 0.0
  %2689 = vmatpush1.msra.mxu0 0.0
  %2690 = vmatprep.subr.mxu0 0.0
  %2691 = vmatpush1.msra.mxu0 0.0
  %2692 = vmatprep.subr.mxu0 0.0
  %2693 = vmatpush1.msra.mxu0 0.0
  %2694 = vmatprep.subr.mxu0 0.0
  %2695 = vmatpush1.msra.mxu0 0.0
  %2696 = vmatprep.subr.mxu0 0.0
  %2697 = vmatpush1.msra.mxu0 0.0
  %2698 = vmatprep.subr.mxu0 0.0
  %2699 = vmatpush1.msra.mxu0 0.0
  %2700 = vmatprep.subr.mxu0 0.0
  %2701 = vmatpush1.msra.mxu0 0.0
  %2702 = vmatprep.mubr.f32.mxu0 0.0
  %2703 = vmatmul.mubr.f32.gmra.mrb[0].mxu0 %v2191
  %v2704 = vpop.f32.mrb[0].mxu0
  %v2705 = vadd.f32 0.0, %v2704
  %v2706 = vpop.f32.mrb[0].mxu0
  %v2707 = vadd.f32 0.0, %v2706
  %2708 = vmatprep.mubr.f32.mxu0 0.0
  %2709 = vmatmul.mubr.f32.gmra.mrb[0].mxu0 %v2192
  %v2710 = vpop.f32.mrb[0].mxu0
  %v2711 = vadd.f32 0.0, %v2710
  %v2712 = vpop.f32.mrb[0].mxu0
  %v2713 = vadd.f32 0.0, %v2712
  %2714 = vmatprep.mubr.f32.mxu0 0.0
  %2715 = vmatmul.mubr.f32.gmra.mrb[0].mxu0 %v2193
  %v2716 = vpop.f32.mrb[0].mxu0
  %v2717 = vadd.f32 0.0, %v2716
  %v2718 = vpop.f32.mrb[0].mxu0
  %v2719 = vadd.f32 0.0, %v2718
  %2720 = vmatprep.mubr.f32.mxu0 0.0
  %2721 = vmatmul.mubr.f32.gmra.mrb[0].mxu0 %v2194
  %v2722 = vpop.f32.mrb[0].mxu0
  %v2723 = vadd.f32 0.0, %v2722
  %v2724 = vpop.f32.mrb[0].mxu0
  %v2725 = vadd.f32 0.0, %v2724
  %2726 = vdwg.mxu0
  %2727 = vmatprep.subr.mxu0 %v2204
  %2728 = vmatpush1.msra.mxu0 %v2203
  %2729 = vmatprep.subr.mxu0 %v2215
  %2730 = vmatpush1.msra.mxu0 %v2214
  %2731 = vmatprep.subr.mxu0 %v2226
  %2732 = vmatpush1.msra.mxu0 %v2225
  %2733 = vmatprep.subr.mxu0 %v2237
  %2734 = vmatpush1.msra.mxu0 %v2236
  %2735 = vmatprep.subr.mxu0 %v2248
  %2736 = vmatpush1.msra.mxu0 %v2247
  %2737 = vmatprep.subr.mxu0 %v2259
  %2738 = vmatpush1.msra.mxu0 %v2258
  %2739 = vmatprep.subr.mxu0 %v2270
  %2740 = vmatpush1.msra.mxu0 %v2269
  %2741 = vmatprep.subr.mxu0 %v2281
  %2742 = vmatpush1.msra.mxu0 %v2280
  %2743 = vmatprep.subr.mxu0 %v2292
  %2744 = vmatpush1.msra.mxu0 %v2291
  %2745 = vmatprep.subr.mxu0 %v2303
  %2746 = vmatpush1.msra.mxu0 %v2302
  %2747 = vmatprep.subr.mxu0 %v2314
  %2748 = vmatpush1.msra.mxu0 %v2313
  %2749 = vmatprep.subr.mxu0 %v2325
  %2750 = vmatpush1.msra.mxu0 %v2324
  %2751 = vmatprep.subr.mxu0 %v2336
  %2752 = vmatpush1.msra.mxu0 %v2335
  %2753 = vmatprep.subr.mxu0 %v2347
  %2754 = vmatpush1.msra.mxu0 %v2346
  %2755 = vmatprep.subr.mxu0 %v2358
  %2756 = vmatpush1.msra.mxu0 %v2357
  %2757 = vmatprep.subr.mxu0 %v2369
  %2758 = vmatpush1.msra.mxu0 %v2368
  %2759 = vmatprep.subr.mxu0 0.0
  %2760 = vmatpush1.msra.mxu0 0.0
  %2761 = vmatprep.subr.mxu0 0.0
  %2762 = vmatpush1.msra.mxu0 0.0
  %2763 = vmatprep.subr.mxu0 0.0
  %2764 = vmatpush1.msra.mxu0 0.0
  %2765 = vmatprep.subr.mxu0 0.0
  %2766 = vmatpush1.msra.mxu0 0.0
  %2767 = vmatprep.subr.mxu0 0.0
  %2768 = vmatpush1.msra.mxu0 0.0
  %2769 = vmatprep.subr.mxu0 0.0
  %2770 = vmatpush1.msra.mxu0 0.0
  %2771 = vmatprep.subr.mxu0 0.0
  %2772 = vmatpush1.msra.mxu0 0.0
  %2773 = vmatprep.subr.mxu0 0.0
  %2774 = vmatpush1.msra.mxu0 0.0
  %2775 = vmatprep.subr.mxu0 0.0
  %2776 = vmatpush1.msra.mxu0 0.0
  %2777 = vmatprep.subr.mxu0 0.0
  %2778 = vmatpush1.msra.mxu0 0.0
  %2779 = vmatprep.subr.mxu0 0.0
  %2780 = vmatpush1.msra.mxu0 0.0
  %2781 = vmatprep.subr.mxu0 0.0
  %2782 = vmatpush1.msra.mxu0 0.0
  %2783 = vmatprep.subr.mxu0 0.0
  %2784 = vmatpush1.msra.mxu0 0.0
  %2785 = vmatprep.subr.mxu0 0.0
  %2786 = vmatpush1.msra.mxu0 0.0
  %2787 = vmatprep.subr.mxu0 0.0
  %2788 = vmatpush1.msra.mxu0 0.0
  %2789 = vmatprep.subr.mxu0 0.0
  %2790 = vmatpush1.msra.mxu0 0.0
  %2791 = vmatprep.mubr.f32.mxu0 0.0
  %2792 = vmatmul.mubr.f32.gmra.mrb[0].mxu0 %v2191
  %v2793 = vpop.f32.mrb[0].mxu0
  %v2794 = vadd.f32 0.0, %v2793
  %v2795 = vpop.f32.mrb[0].mxu0
  %v2796 = vadd.f32 0.0, %v2795
  %2797 = vmatprep.mubr.f32.mxu0 0.0
  %2798 = vmatmul.mubr.f32.gmra.mrb[0].mxu0 %v2192
  %v2799 = vpop.f32.mrb[0].mxu0
  %v2800 = vadd.f32 0.0, %v2799
  %v2801 = vpop.f32.mrb[0].mxu0
  %v2802 = vadd.f32 0.0, %v2801
  %2803 = vmatprep.mubr.f32.mxu0 0.0
  %2804 = vmatmul.mubr.f32.gmra.mrb[0].mxu0 %v2193
  %v2805 = vpop.f32.mrb[0].mxu0
  %v2806 = vadd.f32 0.0, %v2805
  %v2807 = vpop.f32.mrb[0].mxu0
  %v2808 = vadd.f32 0.0, %v2807
  %2809 = vmatprep.mubr.f32.mxu0 0.0
  %2810 = vmatmul.mubr.f32.gmra.mrb[0].mxu0 %v2194
  %v2811 = vpop.f32.mrb[0].mxu0
  %v2812 = vadd.f32 0.0, %v2811
  %v2813 = vpop.f32.mrb[0].mxu0
  %v2814 = vadd.f32 0.0, %v2813
  %2815 = vdwg.mxu0
  %2816 = vmatprep.subr.mxu0 0.0
  %2817 = vmatpush1.msra.mxu0 %v2205
  %2818 = vmatprep.subr.mxu0 0.0
  %2819 = vmatpush1.msra.mxu0 %v2216
  %2820 = vmatprep.subr.mxu0 0.0
  %2821 = vmatpush1.msra.mxu0 %v2227
  %2822 = vmatprep.subr.mxu0 0.0
  %2823 = vmatpush1.msra.mxu0 %v2238
  %2824 = vmatprep.subr.mxu0 0.0
  %2825 = vmatpush1.msra.mxu0 %v2249
  %2826 = vmatprep.subr.mxu0 0.0
  %2827 = vmatpush1.msra.mxu0 %v2260
  %2828 = vmatprep.subr.mxu0 0.0
  %2829 = vmatpush1.msra.mxu0 %v2271
  %2830 = vmatprep.subr.mxu0 0.0
  %2831 = vmatpush1.msra.mxu0 %v2282
  %2832 = vmatprep.subr.mxu0 0.0
  %2833 = vmatpush1.msra.mxu0 %v2293
  %2834 = vmatprep.subr.mxu0 0.0
  %2835 = vmatpush1.msra.mxu0 %v2304
  %2836 = vmatprep.subr.mxu0 0.0
  %2837 = vmatpush1.msra.mxu0 %v2315
  %2838 = vmatprep.subr.mxu0 0.0
  %2839 = vmatpush1.msra.mxu0 %v2326
  %2840 = vmatprep.subr.mxu0 0.0
  %2841 = vmatpush1.msra.mxu0 %v2337
  %2842 = vmatprep.subr.mxu0 0.0
  %2843 = vmatpush1.msra.mxu0 %v2348
  %2844 = vmatprep.subr.mxu0 0.0
  %2845 = vmatpush1.msra.mxu0 %v2359
  %2846 = vmatprep.subr.mxu0 0.0
  %2847 = vmatpush1.msra.mxu0 %v2370
  %2848 = vmatprep.subr.mxu0 0.0
  %2849 = vmatpush1.msra.mxu0 0.0
  %2850 = vmatprep.subr.mxu0 0.0
  %2851 = vmatpush1.msra.mxu0 0.0
  %2852 = vmatprep.subr.mxu0 0.0
  %2853 = vmatpush1.msra.mxu0 0.0
  %2854 = vmatprep.subr.mxu0 0.0
  %2855 = vmatpush1.msra.mxu0 0.0
  %2856 = vmatprep.subr.mxu0 0.0
  %2857 = vmatpush1.msra.mxu0 0.0
  %2858 = vmatprep.subr.mxu0 0.0
  %2859 = vmatpush1.msra.mxu0 0.0
  %2860 = vmatprep.subr.mxu0 0.0
  %2861 = vmatpush1.msra.mxu0 0.0
  %2862 = vmatprep.subr.mxu0 0.0
  %2863 = vmatpush1.msra.mxu0 0.0
  %2864 = vmatprep.subr.mxu0 0.0
  %2865 = vmatpush1.msra.mxu0 0.0
  %2866 = vmatprep.subr.mxu0 0.0
  %2867 = vmatpush1.msra.mxu0 0.0
  %2868 = vmatprep.subr.mxu0 0.0
  %2869 = vmatpush1.msra.mxu0 0.0
  %2870 = vmatprep.subr.mxu0 0.0
  %2871 = vmatpush1.msra.mxu0 0.0
  %2872 = vmatprep.subr.mxu0 0.0
  %2873 = vmatpush1.msra.mxu0 0.0
  %2874 = vmatprep.subr.mxu0 0.0
  %2875 = vmatpush1.msra.mxu0 0.0
  %2876 = vmatprep.subr.mxu0 0.0
  %2877 = vmatpush1.msra.mxu0 0.0
  %2878 = vmatprep.subr.mxu0 0.0
  %2879 = vmatpush1.msra.mxu0 0.0
  %2880 = vmatprep.mubr.f32.mxu0 0.0
  %2881 = vmatmul.mubr.f32.gmra.mrb[0].mxu0 %v2191
  %v2882 = vpop.f32.mrb[0].mxu0
  %v2883 = vadd.f32 0.0, %v2882
  %v2884 = vpop.f32.mrb[0].mxu0
  %2885 = vmatprep.mubr.f32.mxu0 0.0
  %2886 = vmatmul.mubr.f32.gmra.mrb[0].mxu0 %v2192
  %v2887 = vpop.f32.mrb[0].mxu0
  %v2888 = vadd.f32 0.0, %v2887
  %v2889 = vpop.f32.mrb[0].mxu0
  %2890 = vmatprep.mubr.f32.mxu0 0.0
  %2891 = vmatmul.mubr.f32.gmra.mrb[0].mxu0 %v2193
  %v2892 = vpop.f32.mrb[0].mxu0
  %v2893 = vadd.f32 0.0, %v2892
  %v2894 = vpop.f32.mrb[0].mxu0
  %2895 = vmatprep.mubr.f32.mxu0 0.0
  %2896 = vmatmul.mubr.f32.gmra.mrb[0].mxu0 %v2194
  %v2897 = vpop.f32.mrb[0].mxu0
  %v2898 = vadd.f32 0.0, %v2897
  %v2899 = vpop.f32.mrb[0].mxu0
  %2900 = vdwg.mxu0
  %2901 = vst [vmem:[#allocation2] sm:$0xff] %v2438
  %2902 = vst [vmem:[#allocation2 + $0x8] sm:$0xff] %v2440
  %2903 = vst [vmem:[#allocation2 + $0x10] sm:$0xff] %v2527
  %2904 = vst [vmem:[#allocation2 + $0x18] sm:$0xff] %v2529
  %2905 = vst [vmem:[#allocation2 + $0x20] sm:$0xff] %v2616
  %2906 = vst [vmem:[#allocation2 + $0x28] sm:$0xff] %v2618
  %2907 = vst [vmem:[#allocation2 + $0x30] sm:$0xff] %v2705
  %2908 = vst [vmem:[#allocation2 + $0x38] sm:$0xff] %v2707
  %2909 = vst [vmem:[#allocation2 + $0x40] sm:$0xff] %v2794
  %2910 = vst [vmem:[#allocation2 + $0x48] sm:$0xff] %v2796
  %2911 = vst [vmem:[#allocation2 + $0x50] sm:$0xff] %v2883
  %2912 = vst [vmem:[#allocation2 + $0x58] sm:$0xff] %v2444
  %2913 = vst [vmem:[#allocation2 + $0x60] sm:$0xff] %v2446
  %2914 = vst [vmem:[#allocation2 + $0x68] sm:$0xff] %v2533
  %2915 = vst [vmem:[#allocation2 + $0x70] sm:$0xff] %v2535
  %2916 = vst [vmem:[#allocation2 + $0x78] sm:$0xff] %v2622
  %2917 = vst [vmem:[#allocation2 + $0x80] sm:$0xff] %v2624
  %2918 = vst [vmem:[#allocation2 + $0x88] sm:$0xff] %v2711
  %2919 = vst [vmem:[#allocation2 + $0x90] sm:$0xff] %v2713
  %2920 = vst [vmem:[#allocation2 + $0x98] sm:$0xff] %v2800
  %2921 = vst [vmem:[#allocation2 + $0xa0] sm:$0xff] %v2802
  %2922 = vst [vmem:[#allocation2 + $0xa8] sm:$0xff] %v2888
  %2923 = vst [vmem:[#allocation2 + $0xb0] sm:$0xff] %v2450
  %2924 = vst [vmem:[#allocation2 + $0xb8] sm:$0xff] %v2452
  %2925 = vst [vmem:[#allocation2 + $0xc0] sm:$0xff] %v2539
  %2926 = vst [vmem:[#allocation2 + $0xc8] sm:$0xff] %v2541
  %2927 = vst [vmem:[#allocation2 + $0xd0] sm:$0xff] %v2628
  %2928 = vst [vmem:[#allocation2 + $0xd8] sm:$0xff] %v2630
  %2929 = vst [vmem:[#allocation2 + $0xe0] sm:$0xff] %v2717
  %2930 = vst [vmem:[#allocation2 + $0xe8] sm:$0xff] %v2719
  %2931 = vst [vmem:[#allocation2 + $0xf0] sm:$0xff] %v2806
  %2932 = vst [vmem:[#allocation2 + $0xf8] sm:$0xff] %v2808
  %2933 = vst [vmem:[#allocation2 + $0x100] sm:$0xff] %v2893
  %2934 = vst [vmem:[#allocation2 + $0x108] sm:$0xff] %v2456
  %2935 = vst [vmem:[#allocation2 + $0x110] sm:$0xff] %v2458
  %2936 = vst [vmem:[#allocation2 + $0x118] sm:$0xff] %v2545
  %2937 = vst [vmem:[#allocation2 + $0x120] sm:$0xff] %v2547
  %2938 = vst [vmem:[#allocation2 + $0x128] sm:$0xff] %v2634
  %2939 = vst [vmem:[#allocation2 + $0x130] sm:$0xff] %v2636
  %2940 = vst [vmem:[#allocation2 + $0x138] sm:$0xff] %v2723
  %2941 = vst [vmem:[#allocation2 + $0x140] sm:$0xff] %v2725
  %2942 = vst [vmem:[#allocation2 + $0x148] sm:$0xff] %v2812
  %2943 = vst [vmem:[#allocation2 + $0x150] sm:$0xff] %v2814
  %2944 = vst [vmem:[#allocation2 + $0x158] sm:$0xff] %v2898
  %v2945 = vld [vmem:[#allocation2] sm:$0xff]
  %v2946 = vld [vmem:[#allocation2 + $0x58] sm:$0xff]
  %v2947 = vld [vmem:[#allocation2 + $0xb0] sm:$0xff]
  %v2948 = vld [vmem:[#allocation2 + $0x108] sm:$0xff]
  %2949 = vst [vmem:[#allocation3] sm:$0xff] %v2945
  %2950 = vst [vmem:[#allocation3 + $0x8] sm:$0xff] %v2946
  %2951 = vst [vmem:[#allocation3 + $0x10] sm:$0xff] %v2947
  %2952 = vst [vmem:[#allocation3 + $0x18] sm:$0xff] %v2948
  %v2953 = vld [vmem:[#allocation2 + $0x8] sm:$0xff]
  %v2954 = vld [vmem:[#allocation2 + $0x60] sm:$0xff]
  %v2955 = vld [vmem:[#allocation2 + $0xb8] sm:$0xff]
  %v2956 = vld [vmem:[#allocation2 + $0x110] sm:$0xff]
  %2957 = vst [vmem:[#allocation3 + $0x20] sm:$0xff] %v2953
  %2958 = vst [vmem:[#allocation3 + $0x28] sm:$0xff] %v2954
  %2959 = vst [vmem:[#allocation3 + $0x30] sm:$0xff] %v2955
  %2960 = vst [vmem:[#allocation3 + $0x38] sm:$0xff] %v2956
  %v2961 = vld [vmem:[#allocation2 + $0x10] sm:$0xff]
  %v2962 = vld [vmem:[#allocation2 + $0x68] sm:$0xff]
  %v2963 = vld [vmem:[#allocation2 + $0xc0] sm:$0xff]
  %v2964 = vld [vmem:[#allocation2 + $0x118] sm:$0xff]
  %2965 = vst [vmem:[#allocation3 + $0x40] sm:$0xff] %v2961
  %2966 = vst [vmem:[#allocation3 + $0x48] sm:$0xff] %v2962
  %2967 = vst [vmem:[#allocation3 + $0x50] sm:$0xff] %v2963
  %2968 = vst [vmem:[#allocation3 + $0x58] sm:$0xff] %v2964
  %v2969 = vld [vmem:[#allocation2 + $0x18] sm:$0xff]
  %v2970 = vld [vmem:[#allocation2 + $0x70] sm:$0xff]
  %v2971 = vld [vmem:[#allocation2 + $0xc8] sm:$0xff]
  %v2972 = vld [vmem:[#allocation2 + $0x120] sm:$0xff]
  %2973 = vst [vmem:[#allocation3 + $0x60] sm:$0xff] %v2969
  %2974 = vst [vmem:[#allocation3 + $0x68] sm:$0xff] %v2970
  %2975 = vst [vmem:[#allocation3 + $0x70] sm:$0xff] %v2971
  %2976 = vst [vmem:[#allocation3 + $0x78] sm:$0xff] %v2972
  %v2977 = vld [vmem:[#allocation2 + $0x20] sm:$0xff]
  %v2978 = vld [vmem:[#allocation2 + $0x78] sm:$0xff]
  %v2979 = vld [vmem:[#allocation2 + $0xd0] sm:$0xff]
  %v2980 = vld [vmem:[#allocation2 + $0x128] sm:$0xff]
  %2981 = vst [vmem:[#allocation3 + $0x80] sm:$0xff] %v2977
  %2982 = vst [vmem:[#allocation3 + $0x88] sm:$0xff] %v2978
  %2983 = vst [vmem:[#allocation3 + $0x90] sm:$0xff] %v2979
  %2984 = vst [vmem:[#allocation3 + $0x98] sm:$0xff] %v2980
  %v2985 = vld [vmem:[#allocation2 + $0x28] sm:$0xff]
  %v2986 = vld [vmem:[#allocation2 + $0x80] sm:$0xff]
  %v2987 = vld [vmem:[#allocation2 + $0xd8] sm:$0xff]
  %v2988 = vld [vmem:[#allocation2 + $0x130] sm:$0xff]
  %2989 = vst [vmem:[#allocation3 + $0xa0] sm:$0xff] %v2985
  %2990 = vst [vmem:[#allocation3 + $0xa8] sm:$0xff] %v2986
  %2991 = vst [vmem:[#allocation3 + $0xb0] sm:$0xff] %v2987
  %2992 = vst [vmem:[#allocation3 + $0xb8] sm:$0xff] %v2988
  %v2993 = vld [vmem:[#allocation2 + $0x30] sm:$0xff]
  %v2994 = vld [vmem:[#allocation2 + $0x88] sm:$0xff]
  %v2995 = vld [vmem:[#allocation2 + $0xe0] sm:$0xff]
  %v2996 = vld [vmem:[#allocation2 + $0x138] sm:$0xff]
  %2997 = vst [vmem:[#allocation3 + $0xc0] sm:$0xff] %v2993
  %2998 = vst [vmem:[#allocation3 + $0xc8] sm:$0xff] %v2994
  %2999 = vst [vmem:[#allocation3 + $0xd0] sm:$0xff] %v2995
  %3000 = vst [vmem:[#allocation3 + $0xd8] sm:$0xff] %v2996
  %v3001 = vld [vmem:[#allocation2 + $0x38] sm:$0xff]
  %v3002 = vld [vmem:[#allocation2 + $0x90] sm:$0xff]
  %v3003 = vld [vmem:[#allocation2 + $0xe8] sm:$0xff]
  %v3004 = vld [vmem:[#allocation2 + $0x140] sm:$0xff]
  %3005 = vst [vmem:[#allocation3 + $0xe0] sm:$0xff] %v3001
  %3006 = vst [vmem:[#allocation3 + $0xe8] sm:$0xff] %v3002
  %3007 = vst [vmem:[#allocation3 + $0xf0] sm:$0xff] %v3003
  %3008 = vst [vmem:[#allocation3 + $0xf8] sm:$0xff] %v3004
  %v3009 = vld [vmem:[#allocation2 + $0x40] sm:$0xff]
  %v3010 = vld [vmem:[#allocation2 + $0x98] sm:$0xff]
  %v3011 = vld [vmem:[#allocation2 + $0xf0] sm:$0xff]
  %v3012 = vld [vmem:[#allocation2 + $0x148] sm:$0xff]
  %3013 = vst [vmem:[#allocation3 + $0x100] sm:$0xff] %v3009
  %3014 = vst [vmem:[#allocation3 + $0x108] sm:$0xff] %v3010
  %3015 = vst [vmem:[#allocation3 + $0x110] sm:$0xff] %v3011
  %3016 = vst [vmem:[#allocation3 + $0x118] sm:$0xff] %v3012
  %v3017 = vld [vmem:[#allocation2 + $0x48] sm:$0xff]
  %v3018 = vld [vmem:[#allocation2 + $0xa0] sm:$0xff]
  %v3019 = vld [vmem:[#allocation2 + $0xf8] sm:$0xff]
  %v3020 = vld [vmem:[#allocation2 + $0x150] sm:$0xff]
  %3021 = vst [vmem:[#allocation3 + $0x120] sm:$0xff] %v3017
  %3022 = vst [vmem:[#allocation3 + $0x128] sm:$0xff] %v3018
  %3023 = vst [vmem:[#allocation3 + $0x130] sm:$0xff] %v3019
  %3024 = vst [vmem:[#allocation3 + $0x138] sm:$0xff] %v3020
  %v3025 = vld [vmem:[#allocation2 + $0x50] sm:$0xff]
  %v3026 = vld [vmem:[#allocation2 + $0xa8] sm:$0xff]
  %v3027 = vld [vmem:[#allocation2 + $0x100] sm:$0xff]
  %v3028 = vld [vmem:[#allocation2 + $0x158] sm:$0xff]
  %3029 = vst [vmem:[#allocation3 + $0x140] sm:$0xff] %v3025
  %3030 = vst [vmem:[#allocation3 + $0x148] sm:$0xff] %v3026
  %3031 = vst [vmem:[#allocation3 + $0x150] sm:$0xff] %v3027
  %3032 = vst [vmem:[#allocation3 + $0x158] sm:$0xff] %v3028
  %v3033 = vld [vmem:[%s0] sm:$0xff]
  %v3034 = vld [vmem:[%s0 + $0x8] sm:$0xff]
  %v3035 = vld [vmem:[%s0 + $0x10] sm:$0xff]
  %v3036 = vld [vmem:[%s0 + $0x18] sm:$0xff]
  %v3037 = vld [vmem:[%s0 + $0x20] sm:$0xff]
  %v3038 = vld [vmem:[%s0 + $0x28] sm:$0xff]
  %v3039 = vld [vmem:[%s0 + $0x30] sm:$0xff]
  %v3040 = vld [vmem:[%s0 + $0x38] sm:$0xff]
  %v3041 = vld [vmem:[%s0 + $0x40] sm:$0xff]
  %v3042 = vld [vmem:[%s0 + $0x48] sm:$0xff]
  %v3043 = vld [vmem:[%s0 + $0x50] sm:$0xff]
  %v3044 = vld [vmem:[%s0 + $0x58] sm:$0xff]
  %v3045 = vld [vmem:[#allocation3] sm:$0xff]
  %v3046 = vld [vmem:[#allocation3 + $0x8] sm:$0xff]
  %v3047 = vld [vmem:[#allocation3 + $0x10] sm:$0xff]
  %v3048 = vld [vmem:[#allocation3 + $0x18] sm:$0xff]
  %v3049 = vld [vmem:[#allocation3 + $0x20] sm:$0xff]
  %v3050 = vld [vmem:[#allocation3 + $0x28] sm:$0xff]
  %v3051 = vld [vmem:[#allocation3 + $0x30] sm:$0xff]
  %v3052 = vld [vmem:[#allocation3 + $0x38] sm:$0xff]
  %v3053 = vld [vmem:[#allocation3 + $0x40] sm:$0xff]
  %v3054 = vld [vmem:[#allocation3 + $0x48] sm:$0xff]
  %v3055 = vld [vmem:[#allocation3 + $0x50] sm:$0xff]
  %v3056 = vld [vmem:[#allocation3 + $0x58] sm:$0xff]
  %v3057 = vld [vmem:[#allocation3 + $0x60] sm:$0xff]
  %v3058 = vld [vmem:[#allocation3 + $0x68] sm:$0xff]
  %v3059 = vld [vmem:[#allocation3 + $0x70] sm:$0xff]
  %v3060 = vld [vmem:[#allocation3 + $0x78] sm:$0xff]
  %v3061 = vld [vmem:[#allocation3 + $0x80] sm:$0xff]
  %v3062 = vld [vmem:[#allocation3 + $0x88] sm:$0xff]
  %v3063 = vld [vmem:[#allocation3 + $0x90] sm:$0xff]
  %v3064 = vld [vmem:[#allocation3 + $0x98] sm:$0xff]
  %v3065 = vld [vmem:[#allocation3 + $0xa0] sm:$0xff]
  %v3066 = vld [vmem:[#allocation3 + $0xa8] sm:$0xff]
  %v3067 = vld [vmem:[#allocation3 + $0xb0] sm:$0xff]
  %v3068 = vld [vmem:[#allocation3 + $0xb8] sm:$0xff]
  %v3069 = vld [vmem:[#allocation3 + $0xc0] sm:$0xff]
  %v3070 = vld [vmem:[#allocation3 + $0xc8] sm:$0xff]
  %v3071 = vld [vmem:[#allocation3 + $0xd0] sm:$0xff]
  %v3072 = vld [vmem:[#allocation3 + $0xd8] sm:$0xff]
  %v3073 = vld [vmem:[#allocation3 + $0xe0] sm:$0xff]
  %v3074 = vld [vmem:[#allocation3 + $0xe8] sm:$0xff]
  %v3075 = vld [vmem:[#allocation3 + $0xf0] sm:$0xff]
  %v3076 = vld [vmem:[#allocation3 + $0xf8] sm:$0xff]
  %v3077 = vld [vmem:[#allocation3 + $0x100] sm:$0xff]
  %v3078 = vld [vmem:[#allocation3 + $0x108] sm:$0xff]
  %v3079 = vld [vmem:[#allocation3 + $0x110] sm:$0xff]
  %v3080 = vld [vmem:[#allocation3 + $0x118] sm:$0xff]
  %v3081 = vld [vmem:[#allocation3 + $0x120] sm:$0xff]
  %v3082 = vld [vmem:[#allocation3 + $0x128] sm:$0xff]
  %v3083 = vld [vmem:[#allocation3 + $0x130] sm:$0xff]
  %v3084 = vld [vmem:[#allocation3 + $0x138] sm:$0xff]
  %v3085 = vld [vmem:[#allocation3 + $0x140] sm:$0xff]
  %v3086 = vld [vmem:[#allocation3 + $0x148] sm:$0xff]
  %v3087 = vld [vmem:[#allocation3 + $0x150] sm:$0xff]
  %v3088 = vld [vmem:[#allocation3 + $0x158] sm:$0xff]
  %v3089 = vld [vmem:[#allocation3 + $0x160] sm:$0xff]
  %v3090 = vld [vmem:[#allocation3 + $0x168] sm:$0xff]
  %v3091 = vld [vmem:[#allocation3 + $0x170] sm:$0xff]
  %v3092 = vld [vmem:[#allocation3 + $0x178] sm:$0xff]
  %v3093 = vld [vmem:[%s7] sm:$0x1]
  %v3095 = vlaneseq
  %v3096 = vshrl.u32 %v3095, 7
  %v3097 = vsub.s32 0, %v3096
  %v3098 = vrot.slane %v3093, %v3097
  %3100 = vmatprep.subr.mxu0 0.0
  %3101 = vmatpush1.msra.mxu0 %v3045
  %3102 = vmatprep.subr.mxu0 0.0
  %3103 = vmatpush1.msra.mxu0 %v3046
  %3104 = vmatprep.subr.mxu0 0.0
  %3105 = vmatpush1.msra.mxu0 %v3047
  %3106 = vmatprep.subr.mxu0 0.0
  %3107 = vmatpush1.msra.mxu0 %v3048
  %3108 = vmatprep.subr.mxu0 0.0
  %3109 = vmatpush1.msra.mxu0 %v3049
  %3110 = vmatprep.subr.mxu0 0.0
  %3111 = vmatpush1.msra.mxu0 %v3050
  %3112 = vmatprep.subr.mxu0 0.0
  %3113 = vmatpush1.msra.mxu0 %v3051
  %3114 = vmatprep.subr.mxu0 0.0
  %3115 = vmatpush1.msra.mxu0 %v3052
  %3116 = vmatprep.subr.mxu0 0.0
  %3117 = vmatpush1.msra.mxu0 %v3053
  %3118 = vmatprep.subr.mxu0 0.0
  %3119 = vmatpush1.msra.mxu0 %v3054
  %3120 = vmatprep.subr.mxu0 0.0
  %3121 = vmatpush1.msra.mxu0 %v3055
  %3122 = vmatprep.subr.mxu0 0.0
  %3123 = vmatpush1.msra.mxu0 %v3056
  %3124 = vmatprep.subr.mxu0 0.0
  %3125 = vmatpush1.msra.mxu0 %v3057
  %3126 = vmatprep.subr.mxu0 0.0
  %3127 = vmatpush1.msra.mxu0 %v3058
  %3128 = vmatprep.subr.mxu0 0.0
  %3129 = vmatpush1.msra.mxu0 %v3059
  %3130 = vmatprep.subr.mxu0 0.0
  %3131 = vmatpush1.msra.mxu0 %v3060
  %3132 = vmatprep.subr.mxu0 0.0
  %3133 = vmatpush1.msra.mxu0 %v3061
  %3134 = vmatprep.subr.mxu0 0.0
  %3135 = vmatpush1.msra.mxu0 %v3062
  %3136 = vmatprep.subr.mxu0 0.0
  %3137 = vmatpush1.msra.mxu0 %v3063
  %3138 = vmatprep.subr.mxu0 0.0
  %3139 = vmatpush1.msra.mxu0 %v3064
  %3140 = vmatprep.subr.mxu0 0.0
  %3141 = vmatpush1.msra.mxu0 %v3065
  %3142 = vmatprep.subr.mxu0 0.0
  %3143 = vmatpush1.msra.mxu0 %v3066
  %3144 = vmatprep.subr.mxu0 0.0
  %3145 = vmatpush1.msra.mxu0 %v3067
  %3146 = vmatprep.subr.mxu0 0.0
  %3147 = vmatpush1.msra.mxu0 %v3068
  %3148 = vmatprep.subr.mxu0 0.0
  %3149 = vmatpush1.msra.mxu0 %v3069
  %3150 = vmatprep.subr.mxu0 0.0
  %3151 = vmatpush1.msra.mxu0 %v3070
  %3152 = vmatprep.subr.mxu0 0.0
  %3153 = vmatpush1.msra.mxu0 %v3071
  %3154 = vmatprep.subr.mxu0 0.0
  %3155 = vmatpush1.msra.mxu0 %v3072
  %3156 = vmatprep.subr.mxu0 0.0
  %3157 = vmatpush1.msra.mxu0 %v3073
  %3158 = vmatprep.subr.mxu0 0.0
  %3159 = vmatpush1.msra.mxu0 %v3074
  %3160 = vmatprep.subr.mxu0 0.0
  %3161 = vmatpush1.msra.mxu0 %v3075
  %3162 = vmatprep.subr.mxu0 0.0
  %3163 = vmatpush1.msra.mxu0 %v3076
  %3164 = vmatprep.mubr.f32.mxu0 %v3034
  %3165 = vmatmul.mubr.f32.gmra.mrb[0].mxu0 %v3033
  %v3166 = vpop.f32.mrb[0].mxu0
  %v3167 = vadd.f32 %v3098, %v3166
  %v3168 = vpop.f32.mrb[0].mxu0
  %3169 = vmatprep.mubr.f32.mxu0 %v3037
  %3170 = vmatmul.mubr.f32.gmra.mrb[0].mxu0 %v3036
  %v3171 = vpop.f32.mrb[0].mxu0
  %v3172 = vadd.f32 %v3098, %v3171
  %v3173 = vpop.f32.mrb[0].mxu0
  %3174 = vmatprep.mubr.f32.mxu0 %v3040
  %3175 = vmatmul.mubr.f32.gmra.mrb[0].mxu0 %v3039
  %v3176 = vpop.f32.mrb[0].mxu0
  %v3177 = vadd.f32 %v3098, %v3176
  %v3178 = vpop.f32.mrb[0].mxu0
  %3179 = vmatprep.mubr.f32.mxu0 %v3043
  %3180 = vmatmul.mubr.f32.gmra.mrb[0].mxu0 %v3042
  %v3181 = vpop.f32.mrb[0].mxu0
  %v3182 = vadd.f32 %v3098, %v3181
  %v3183 = vpop.f32.mrb[0].mxu0
  %3184 = vdwg.mxu0
  %3185 = vmatprep.subr.mxu0 0.0
  %3186 = vmatpush1.msra.mxu0 %v3077
  %3187 = vmatprep.subr.mxu0 0.0
  %3188 = vmatpush1.msra.mxu0 %v3078
  %3189 = vmatprep.subr.mxu0 0.0
  %3190 = vmatpush1.msra.mxu0 %v3079
  %3191 = vmatprep.subr.mxu0 0.0
  %3192 = vmatpush1.msra.mxu0 %v3080
  %3193 = vmatprep.subr.mxu0 0.0
  %3194 = vmatpush1.msra.mxu0 %v3081
  %3195 = vmatprep.subr.mxu0 0.0
  %3196 = vmatpush1.msra.mxu0 %v3082
  %3197 = vmatprep.subr.mxu0 0.0
  %3198 = vmatpush1.msra.mxu0 %v3083
  %3199 = vmatprep.subr.mxu0 0.0
  %3200 = vmatpush1.msra.mxu0 %v3084
  %3201 = vmatprep.subr.mxu0 0.0
  %3202 = vmatpush1.msra.mxu0 %v3085
  %3203 = vmatprep.subr.mxu0 0.0
  %3204 = vmatpush1.msra.mxu0 %v3086
  %3205 = vmatprep.subr.mxu0 0.0
  %3206 = vmatpush1.msra.mxu0 %v3087
  %3207 = vmatprep.subr.mxu0 0.0
  %3208 = vmatpush1.msra.mxu0 %v3088
  %3209 = vmatprep.subr.mxu0 0.0
  %3210 = vmatpush1.msra.mxu0 %v3089
  %3211 = vmatprep.subr.mxu0 0.0
  %3212 = vmatpush1.msra.mxu0 %v3090
  %3213 = vmatprep.subr.mxu0 0.0
  %3214 = vmatpush1.msra.mxu0 %v3091
  %3215 = vmatprep.subr.mxu0 0.0
  %3216 = vmatpush1.msra.mxu0 %v3092
  %3217 = vmatprep.subr.mxu0 0.0
  %3218 = vmatpush1.msra.mxu0 0.0
  %3219 = vmatprep.subr.mxu0 0.0
  %3220 = vmatpush1.msra.mxu0 0.0
  %3221 = vmatprep.subr.mxu0 0.0
  %3222 = vmatpush1.msra.mxu0 0.0
  %3223 = vmatprep.subr.mxu0 0.0
  %3224 = vmatpush1.msra.mxu0 0.0
  %3225 = vmatprep.subr.mxu0 0.0
  %3226 = vmatpush1.msra.mxu0 0.0
  %3227 = vmatprep.subr.mxu0 0.0
  %3228 = vmatpush1.msra.mxu0 0.0
  %3229 = vmatprep.subr.mxu0 0.0
  %3230 = vmatpush1.msra.mxu0 0.0
  %3231 = vmatprep.subr.mxu0 0.0
  %3232 = vmatpush1.msra.mxu0 0.0
  %3233 = vmatprep.subr.mxu0 0.0
  %3234 = vmatpush1.msra.mxu0 0.0
  %3235 = vmatprep.subr.mxu0 0.0
  %3236 = vmatpush1.msra.mxu0 0.0
  %3237 = vmatprep.subr.mxu0 0.0
  %3238 = vmatpush1.msra.mxu0 0.0
  %3239 = vmatprep.subr.mxu0 0.0
  %3240 = vmatpush1.msra.mxu0 0.0
  %3241 = vmatprep.subr.mxu0 0.0
  %3242 = vmatpush1.msra.mxu0 0.0
  %3243 = vmatprep.subr.mxu0 0.0
  %3244 = vmatpush1.msra.mxu0 0.0
  %3245 = vmatprep.subr.mxu0 0.0
  %3246 = vmatpush1.msra.mxu0 0.0
  %3247 = vmatprep.subr.mxu0 0.0
  %3248 = vmatpush1.msra.mxu0 0.0
  %3249 = vmatprep.mubr.f32.mxu0 0.0
  %3250 = vmatmul.mubr.f32.gmra.mrb[0].mxu0 %v3035
  %v3251 = vpop.f32.mrb[0].mxu0
  %v3252 = vadd.f32 %v3167, %v3251
  %v3253 = vpop.f32.mrb[0].mxu0
  %3254 = vmatprep.mubr.f32.mxu0 0.0
  %3255 = vmatmul.mubr.f32.gmra.mrb[0].mxu0 %v3038
  %v3256 = vpop.f32.mrb[0].mxu0
  %v3257 = vadd.f32 %v3172, %v3256
  %v3258 = vpop.f32.mrb[0].mxu0
  %3259 = vmatprep.mubr.f32.mxu0 0.0
  %3260 = vmatmul.mubr.f32.gmra.mrb[0].mxu0 %v3041
  %v3261 = vpop.f32.mrb[0].mxu0
  %v3262 = vadd.f32 %v3177, %v3261
  %v3263 = vpop.f32.mrb[0].mxu0
  %3264 = vmatprep.mubr.f32.mxu0 0.0
  %3265 = vmatmul.mubr.f32.gmra.mrb[0].mxu0 %v3044
  %v3266 = vpop.f32.mrb[0].mxu0
  %v3267 = vadd.f32 %v3182, %v3266
  %v3268 = vpop.f32.mrb[0].mxu0
  %3269 = vdwg.mxu0
  %3270 = vst [vmem:[%s8] sm:$0xff] %v3252
  %3271 = vst [vmem:[%s8 + $0x8] sm:$0xff] %v3257
  %3272 = vst [vmem:[%s8 + $0x10] sm:$0xff] %v3262
  %3273 = vst [vmem:[%s8 + $0x18] sm:$0xff] %v3267
  // Predicated region
  $region34: #{relational_gcn_forward.1} parent=0 // pred_check
    _
  $region35: #{relational_gcn_forward.1} parent=0 // pred_check_branch
    %3275 = sbr.rel (0) target = $region37
  $region36: #{relational_gcn_forward.1} parent=0 // pred_region
    _
  $region37: #{relational_gcn_forward.1} parent=0 // pred_fallthru
    _
  // Predicated region
  $region38: #{relational_gcn_forward.1} parent=0 // pred_check
    _
  $region39: #{relational_gcn_forward.1} parent=0 // pred_check_branch
    %3277 = sbr.rel (0) target = $region41
  $region40: #{relational_gcn_forward.1} parent=0 // pred_region
    _
  $region41: #{relational_gcn_forward.1} parent=0 // pred_fallthru
    _

</llo_original>
